<compile_context>
chip_gen: v7x
topology: tpu7x:2x2x1
jax: 0.10.0
libtpu: 0.0.40
codegen_flags: <defaults>
</compile_context>

<pallas_src>
import functools

import jax
import jax.numpy as jnp
from jax.experimental import pallas as pl
from jax.experimental.pallas import tpu as pltpu


def _sdm_kernel(adjT_ref, w1T_ref, b1_ref, w2T_ref, b2_ref, gumT_ref, outT_ref,
                *, k, inv_t):
    # Adjacency tile arrives bf16 (exact for 0/1 entries); upcast once.
    adjT = adjT_ref[...].astype(jnp.float32)                  # (in_dim, T)

    # fc11 / fc12 in feature-major form: h = relu(W1^T adj^T + b1), z = relu(W2^T h + b2)
    h = jnp.dot(w1T_ref[...], adjT, preferred_element_type=jnp.float32)
    h = jnp.maximum(h + b1_ref[...], 0.0)                     # (lat_dim, T)
    z = jnp.dot(w2T_ref[...], h, preferred_element_type=jnp.float32)
    z = jnp.maximum(z + b2_ref[...], 0.0)                     # (out_dim, T)

    # Top_M: iterated gumbel-softmax over the feature axis (axis 0 here; one
    # independent softmax per lane/row).  Carried in the exp-domain:
    #   keys += log(mask)/t ; softmax(keys)  ==  u *= mask^(1/t) ; u/sum(u)
    # because softmax is invariant to per-row positive rescaling.
    keys0 = (jnp.log(z + 1e-30) + gumT_ref[...]) * inv_t      # pre-scaled by 1/t
    m0 = jnp.max(keys0, axis=0, keepdims=True)
    u = jnp.exp(keys0 - m0)                                   # per-row max == 1
    khot = jnp.zeros_like(z)
    for i in range(k):                                        # static unroll, k small
        denom = jnp.sum(u, axis=0, keepdims=True)
        # approx=True rejected: perturbs onehot near 1.0 across the 1e-20 clamp cliff.
        onehot = u * pl.reciprocal(denom, approx=False)
        khot = khot + onehot
        if i + 1 < k:
            khot_mask = jnp.maximum(1.0 - onehot, 1e-20)
            if inv_t == 0.5:                                  # t = 2 (module default)
                u = onehot * jnp.sqrt(khot_mask)
            else:                                             # generic t fallback
                u = onehot * jnp.exp(jnp.log(khot_mask) * inv_t)
    outT_ref[...] = khot.astype(outT_ref.dtype)


@functools.partial(jax.jit, static_argnames=("num_node", "t", "tile_rows", "adj_bf16"))
def sdm_forward(adj, w1, b1, w2, b2, gumbel_t, *, num_node, t=2.0,
                tile_rows=512, adj_bf16=True):
    """SDM forward for a stack of graph rows.

    adj:      (rows, input_dim)   rows = (#graphs * num_node), row-stacked.
    gumbel_t: (output_dim, rows)  pre-sampled Gumbel(0, 1) noise, feature-major.
    Returns (rows, output_dim) float32, equal to Top_M(fc12(fc11(adj))).
    """
    assert tile_rows % 128 == 0, "tile_rows must be lane-aligned (multiple of 128)"
    rows, in_dim = adj.shape
    lat_dim = w1.shape[1]
    out_dim = w2.shape[1]
    assert gumbel_t.shape == (out_dim, rows)

    # Keep >= 2 grid steps when rows allow (v7x: only a multi-step "parallel"
    # axis feeds both TensorCores); shrink the tile rather than run grid=(1,).
    tr = tile_rows
    while tr > 128 and (tr // 2) % 128 == 0 and pl.cdiv(rows, tr) < 2:
        tr //= 2

    # Pad the row count up to a multiple of the tile; padded lanes compute
    # harmless finite values and are sliced off at the end.
    rows_p = pl.cdiv(rows, tr) * tr
    pad = rows_p - rows

    # Feature-major (transposed) operands: rows -> lanes (lane-dense slabs).
    # Pad + transpose live inside this jit so XLA fuses them into one relayout.
    adj_dt = jnp.bfloat16 if adj_bf16 else jnp.float32  # bf16 exact for 0/1 adjacency
    adjT = jnp.pad(adj.astype(adj_dt), ((0, pad), (0, 0))).T          # (in_dim, rows_p)
    gumT = jnp.pad(gumbel_t.astype(jnp.float32), ((0, 0), (0, pad)))  # (out_dim, rows_p)
    w1T = w1.astype(jnp.float32).T                                    # (lat_dim, in_dim)
    w2T = w2.astype(jnp.float32).T                                    # (out_dim, lat_dim)
    b1c = b1.astype(jnp.float32).reshape(lat_dim, 1)
    b2c = b2.astype(jnp.float32).reshape(out_dim, 1)

    grid = (rows_p // tr,)
    kernel = functools.partial(_sdm_kernel, k=int(num_node), inv_t=1.0 / float(t))

    outT = pl.pallas_call(
        kernel,
        out_shape=jax.ShapeDtypeStruct((out_dim, rows_p), jnp.float32),
        grid_spec=pltpu.PrefetchScalarGridSpec(
            num_scalar_prefetch=0,
            grid=grid,
            in_specs=[
                pl.BlockSpec((in_dim, tr),       lambda j: (0, j)),   # adj^T tile (bf16)
                pl.BlockSpec((lat_dim, in_dim),  lambda j: (0, 0)),   # W1^T (resident)
                pl.BlockSpec((lat_dim, 1),       lambda j: (0, 0)),   # b1   (resident)
                pl.BlockSpec((out_dim, lat_dim), lambda j: (0, 0)),   # W2^T (resident)
                pl.BlockSpec((out_dim, 1),       lambda j: (0, 0)),   # b2   (resident)
                pl.BlockSpec((out_dim, tr),      lambda j: (0, j)),   # gumbel^T tile
            ],
            out_specs=pl.BlockSpec((out_dim, tr), lambda j: (0, j)),
        ),
        compiler_params=pltpu.CompilerParams(
            dimension_semantics=("parallel",),
        ),
    )(adjT, w1T, b1c, w2T, b2c, gumT)

    return outT.T[:rows]


if __name__ == "__main__":
    # Shapes consistent with the module: 16-node graph adjacency, batched.
    num_node = 16
    input_dim = 16      # adjacency columns
    latent_dim1 = 32
    output_dim = 16     # Top_M softmax axis
    batch_graphs = 64   # many graphs per pallas_call (row-stacked)
    rows = batch_graphs * num_node          # 1024 -> grid=(2,) at tile_rows=512

    key = jax.random.PRNGKey(0)
    k_adj, k_w1, k_b1, k_w2, k_b2, k_g = jax.random.split(key, 6)

    # Deterministic synthetic parameters / inputs (no checkpoint loading).
    adj = (jax.random.uniform(k_adj, (rows, input_dim)) > 0.5).astype(jnp.float32)
    w1 = jax.random.normal(k_w1, (input_dim, latent_dim1), jnp.float32) * 0.1
    b1 = jax.random.normal(k_b1, (latent_dim1,), jnp.float32) * 0.1
    w2 = jax.random.normal(k_w2, (latent_dim1, output_dim), jnp.float32) * 0.1
    b2 = jax.random.normal(k_b2, (output_dim,), jnp.float32) * 0.1

    # Gumbel(0,1) noise: torch samples it inside forward; here it is a
    # deterministic JAX-side input, sampled directly feature-major so the
    # kernel input needs no transpose (i.i.d., so statistically identical).
    gumbel_t = jax.random.gumbel(k_g, (output_dim, rows), jnp.float32)

    out = sdm_forward(adj, w1, b1, w2, b2, gumbel_t, num_node=num_node, t=2.0)
    out = jax.block_until_ready(out)

    # Pure-JAX f32 reference (module semantics, log-domain top-k).
    gumbel = gumbel_t.T
    h_ref = jnp.maximum(adj @ w1 + b1[None, :], 0.0)
    z_ref = jnp.maximum(h_ref @ w2 + b2[None, :], 0.0)
    keys = jnp.log(z_ref + 1e-30) + gumbel
    onehot = jnp.zeros_like(z_ref)
    khot = jnp.zeros_like(z_ref)
    for _ in range(num_node):
        keys = keys + jnp.log(jnp.maximum(1.0 - onehot, 1e-20))
        onehot = jax.nn.softmax(keys / 2.0, axis=-1)
        khot = khot + onehot

    assert jnp.allclose(out, khot, atol=2e-3, rtol=2e-3), "mismatch vs JAX reference"
    print("KERNEL_OK")
</pallas_src>

<mosaic_0001>
module attributes {stable_mosaic.version = 11 : i64} {
  func.func @_sdm_kernel(%arg0: i32, %arg1: memref<16x512xbf16, #tpu.memory_space<vmem>>, %arg2: memref<32x16xf32, #tpu.memory_space<vmem>>, %arg3: memref<32x1xf32, #tpu.memory_space<vmem>>, %arg4: memref<16x32xf32, #tpu.memory_space<vmem>>, %arg5: memref<16x1xf32, #tpu.memory_space<vmem>>, %arg6: memref<16x512xf32, #tpu.memory_space<vmem>>, %arg7: memref<16x512xf32, #tpu.memory_space<vmem>>) attributes {dimension_semantics = [#tpu.dimension_semantics<parallel>], iteration_bounds = array<i64: 2>, scalar_prefetch = 0 : i64, scratch_operands = 0 : i64, tpu.core_type = #tpu.core_type<tc>, window_params = [{transform_indices = @transform_0, window_bounds = array<i64: 16, 512>}, {pipeline_mode = #tpu.pipeline_mode<synchronous>, transform_indices = @transform_1, window_bounds = array<i64: 32, 16>}, {pipeline_mode = #tpu.pipeline_mode<synchronous>, transform_indices = @transform_2, window_bounds = array<i64: 32, 1>}, {pipeline_mode = #tpu.pipeline_mode<synchronous>, transform_indices = @transform_3, window_bounds = array<i64: 16, 32>}, {pipeline_mode = #tpu.pipeline_mode<synchronous>, transform_indices = @transform_4, window_bounds = array<i64: 16, 1>}, {transform_indices = @transform_5, window_bounds = array<i64: 16, 512>}, {transform_indices = @transform_6, window_bounds = array<i64: 16, 512>}]} {
    %c0 = arith.constant 0 : index
    %c0_0 = arith.constant 0 : index
    %0 = vector.load %arg1[%c0, %c0_0] : memref<16x512xbf16, #tpu.memory_space<vmem>>, vector<16x512xbf16>
    %1 = arith.extf %0 : vector<16x512xbf16> to vector<16x512xf32>
    %c0_1 = arith.constant 0 : index
    %c0_2 = arith.constant 0 : index
    %2 = vector.load %arg2[%c0_1, %c0_2] : memref<32x16xf32, #tpu.memory_space<vmem>>, vector<32x16xf32>
    %cst = arith.constant dense<0.000000e+00> : vector<32x512xf32>
    %3 = tpu.matmul %2, %1, %cst {dimension_numbers = #tpu.dot_dimension_numbers<[1], [0], [0], [1], [0, 0, 1, 1], [], []>} : vector<32x16xf32>, vector<16x512xf32>, vector<32x512xf32> -> vector<32x512xf32>
    %c0_3 = arith.constant 0 : index
    %c0_4 = arith.constant 0 : index
    %4 = vector.load %arg3[%c0_3, %c0_4] : memref<32x1xf32, #tpu.memory_space<vmem>>, vector<32x1xf32>
    %5 = vector.broadcast %4 : vector<32x1xf32> to vector<32x512xf32>
    %6 = arith.addf %3, %5 : vector<32x512xf32>
    %cst_5 = arith.constant 0.000000e+00 : f32
    %7 = vector.broadcast %cst_5 : f32 to vector<32x512xf32>
    %8 = arith.maximumf %6, %7 : vector<32x512xf32>
    %c0_6 = arith.constant 0 : index
    %c0_7 = arith.constant 0 : index
    %9 = vector.load %arg4[%c0_6, %c0_7] : memref<16x32xf32, #tpu.memory_space<vmem>>, vector<16x32xf32>
    %cst_8 = arith.constant dense<0.000000e+00> : vector<16x512xf32>
    %10 = tpu.matmul %9, %8, %cst_8 {dimension_numbers = #tpu.dot_dimension_numbers<[1], [0], [0], [1], [0, 0, 1, 1], [], []>} : vector<16x32xf32>, vector<32x512xf32>, vector<16x512xf32> -> vector<16x512xf32>
    %c0_9 = arith.constant 0 : index
    %c0_10 = arith.constant 0 : index
    %11 = vector.load %arg5[%c0_9, %c0_10] : memref<16x1xf32, #tpu.memory_space<vmem>>, vector<16x1xf32>
    %12 = vector.broadcast %11 : vector<16x1xf32> to vector<16x512xf32>
    %13 = arith.addf %10, %12 : vector<16x512xf32>
    %cst_11 = arith.constant 0.000000e+00 : f32
    %14 = vector.broadcast %cst_11 : f32 to vector<16x512xf32>
    %15 = arith.maximumf %13, %14 : vector<16x512xf32>
    %cst_12 = arith.constant 1.000000e-30 : f32
    %16 = vector.broadcast %cst_12 : f32 to vector<16x512xf32>
    %17 = arith.addf %15, %16 : vector<16x512xf32>
    %18 = math.log %17 : vector<16x512xf32>
    %c0_13 = arith.constant 0 : index
    %c0_14 = arith.constant 0 : index
    %19 = vector.load %arg6[%c0_13, %c0_14] : memref<16x512xf32, #tpu.memory_space<vmem>>, vector<16x512xf32>
    %20 = arith.addf %18, %19 : vector<16x512xf32>
    %cst_15 = arith.constant 5.000000e-01 : f32
    %21 = vector.broadcast %cst_15 : f32 to vector<16x512xf32>
    %22 = arith.mulf %20, %21 : vector<16x512xf32>
    %cst_16 = arith.constant dense<0xFF800000> : vector<512xf32>
    %23 = vector.multi_reduction <maximumf>, %22, %cst_16 [0] : vector<16x512xf32> to vector<512xf32>
    %24 = vector.shape_cast %23 : vector<512xf32> to vector<1x512xf32>
    %25 = vector.broadcast %24 : vector<1x512xf32> to vector<16x512xf32>
    %26 = arith.subf %22, %25 : vector<16x512xf32>
    %27 = math.exp %26 : vector<16x512xf32>
    %cst_17 = arith.constant 0.000000e+00 : f32
    %28 = vector.broadcast %cst_17 : f32 to vector<16x512xf32>
    %cst_18 = arith.constant dense<0.000000e+00> : vector<512xf32>
    %29 = vector.multi_reduction <add>, %27, %cst_18 [0] : vector<16x512xf32> to vector<512xf32>
    %30 = vector.shape_cast %29 : vector<512xf32> to vector<1x512xf32>
    %31 = tpu.reciprocal %30 : vector<1x512xf32> -> vector<1x512xf32>
    %32 = vector.broadcast %31 : vector<1x512xf32> to vector<16x512xf32>
    %33 = arith.mulf %27, %32 : vector<16x512xf32>
    %34 = arith.addf %28, %33 : vector<16x512xf32>
    %cst_19 = arith.constant 1.000000e+00 : f32
    %35 = vector.broadcast %cst_19 : f32 to vector<16x512xf32>
    %36 = arith.subf %35, %33 : vector<16x512xf32>
    %cst_20 = arith.constant 9.99999968E-21 : f32
    %37 = vector.broadcast %cst_20 : f32 to vector<16x512xf32>
    %38 = arith.maximumf %36, %37 : vector<16x512xf32>
    %39 = math.sqrt %38 : vector<16x512xf32>
    %40 = arith.mulf %33, %39 : vector<16x512xf32>
    %cst_21 = arith.constant dense<0.000000e+00> : vector<512xf32>
    %41 = vector.multi_reduction <add>, %40, %cst_21 [0] : vector<16x512xf32> to vector<512xf32>
    %42 = vector.shape_cast %41 : vector<512xf32> to vector<1x512xf32>
    %43 = tpu.reciprocal %42 : vector<1x512xf32> -> vector<1x512xf32>
    %44 = vector.broadcast %43 : vector<1x512xf32> to vector<16x512xf32>
    %45 = arith.mulf %40, %44 : vector<16x512xf32>
    %46 = arith.addf %34, %45 : vector<16x512xf32>
    %cst_22 = arith.constant 1.000000e+00 : f32
    %47 = vector.broadcast %cst_22 : f32 to vector<16x512xf32>
    %48 = arith.subf %47, %45 : vector<16x512xf32>
    %cst_23 = arith.constant 9.99999968E-21 : f32
    %49 = vector.broadcast %cst_23 : f32 to vector<16x512xf32>
    %50 = arith.maximumf %48, %49 : vector<16x512xf32>
    %51 = math.sqrt %50 : vector<16x512xf32>
    %52 = arith.mulf %45, %51 : vector<16x512xf32>
    %cst_24 = arith.constant dense<0.000000e+00> : vector<512xf32>
    %53 = vector.multi_reduction <add>, %52, %cst_24 [0] : vector<16x512xf32> to vector<512xf32>
    %54 = vector.shape_cast %53 : vector<512xf32> to vector<1x512xf32>
    %55 = tpu.reciprocal %54 : vector<1x512xf32> -> vector<1x512xf32>
    %56 = vector.broadcast %55 : vector<1x512xf32> to vector<16x512xf32>
    %57 = arith.mulf %52, %56 : vector<16x512xf32>
    %58 = arith.addf %46, %57 : vector<16x512xf32>
    %cst_25 = arith.constant 1.000000e+00 : f32
    %59 = vector.broadcast %cst_25 : f32 to vector<16x512xf32>
    %60 = arith.subf %59, %57 : vector<16x512xf32>
    %cst_26 = arith.constant 9.99999968E-21 : f32
    %61 = vector.broadcast %cst_26 : f32 to vector<16x512xf32>
    %62 = arith.maximumf %60, %61 : vector<16x512xf32>
    %63 = math.sqrt %62 : vector<16x512xf32>
    %64 = arith.mulf %57, %63 : vector<16x512xf32>
    %cst_27 = arith.constant dense<0.000000e+00> : vector<512xf32>
    %65 = vector.multi_reduction <add>, %64, %cst_27 [0] : vector<16x512xf32> to vector<512xf32>
    %66 = vector.shape_cast %65 : vector<512xf32> to vector<1x512xf32>
    %67 = tpu.reciprocal %66 : vector<1x512xf32> -> vector<1x512xf32>
    %68 = vector.broadcast %67 : vector<1x512xf32> to vector<16x512xf32>
    %69 = arith.mulf %64, %68 : vector<16x512xf32>
    %70 = arith.addf %58, %69 : vector<16x512xf32>
    %cst_28 = arith.constant 1.000000e+00 : f32
    %71 = vector.broadcast %cst_28 : f32 to vector<16x512xf32>
    %72 = arith.subf %71, %69 : vector<16x512xf32>
    %cst_29 = arith.constant 9.99999968E-21 : f32
    %73 = vector.broadcast %cst_29 : f32 to vector<16x512xf32>
    %74 = arith.maximumf %72, %73 : vector<16x512xf32>
    %75 = math.sqrt %74 : vector<16x512xf32>
    %76 = arith.mulf %69, %75 : vector<16x512xf32>
    %cst_30 = arith.constant dense<0.000000e+00> : vector<512xf32>
    %77 = vector.multi_reduction <add>, %76, %cst_30 [0] : vector<16x512xf32> to vector<512xf32>
    %78 = vector.shape_cast %77 : vector<512xf32> to vector<1x512xf32>
    %79 = tpu.reciprocal %78 : vector<1x512xf32> -> vector<1x512xf32>
    %80 = vector.broadcast %79 : vector<1x512xf32> to vector<16x512xf32>
    %81 = arith.mulf %76, %80 : vector<16x512xf32>
    %82 = arith.addf %70, %81 : vector<16x512xf32>
    %cst_31 = arith.constant 1.000000e+00 : f32
    %83 = vector.broadcast %cst_31 : f32 to vector<16x512xf32>
    %84 = arith.subf %83, %81 : vector<16x512xf32>
    %cst_32 = arith.constant 9.99999968E-21 : f32
    %85 = vector.broadcast %cst_32 : f32 to vector<16x512xf32>
    %86 = arith.maximumf %84, %85 : vector<16x512xf32>
    %87 = math.sqrt %86 : vector<16x512xf32>
    %88 = arith.mulf %81, %87 : vector<16x512xf32>
    %cst_33 = arith.constant dense<0.000000e+00> : vector<512xf32>
    %89 = vector.multi_reduction <add>, %88, %cst_33 [0] : vector<16x512xf32> to vector<512xf32>
    %90 = vector.shape_cast %89 : vector<512xf32> to vector<1x512xf32>
    %91 = tpu.reciprocal %90 : vector<1x512xf32> -> vector<1x512xf32>
    %92 = vector.broadcast %91 : vector<1x512xf32> to vector<16x512xf32>
    %93 = arith.mulf %88, %92 : vector<16x512xf32>
    %94 = arith.addf %82, %93 : vector<16x512xf32>
    %cst_34 = arith.constant 1.000000e+00 : f32
    %95 = vector.broadcast %cst_34 : f32 to vector<16x512xf32>
    %96 = arith.subf %95, %93 : vector<16x512xf32>
    %cst_35 = arith.constant 9.99999968E-21 : f32
    %97 = vector.broadcast %cst_35 : f32 to vector<16x512xf32>
    %98 = arith.maximumf %96, %97 : vector<16x512xf32>
    %99 = math.sqrt %98 : vector<16x512xf32>
    %100 = arith.mulf %93, %99 : vector<16x512xf32>
    %cst_36 = arith.constant dense<0.000000e+00> : vector<512xf32>
    %101 = vector.multi_reduction <add>, %100, %cst_36 [0] : vector<16x512xf32> to vector<512xf32>
    %102 = vector.shape_cast %101 : vector<512xf32> to vector<1x512xf32>
    %103 = tpu.reciprocal %102 : vector<1x512xf32> -> vector<1x512xf32>
    %104 = vector.broadcast %103 : vector<1x512xf32> to vector<16x512xf32>
    %105 = arith.mulf %100, %104 : vector<16x512xf32>
    %106 = arith.addf %94, %105 : vector<16x512xf32>
    %cst_37 = arith.constant 1.000000e+00 : f32
    %107 = vector.broadcast %cst_37 : f32 to vector<16x512xf32>
    %108 = arith.subf %107, %105 : vector<16x512xf32>
    %cst_38 = arith.constant 9.99999968E-21 : f32
    %109 = vector.broadcast %cst_38 : f32 to vector<16x512xf32>
    %110 = arith.maximumf %108, %109 : vector<16x512xf32>
    %111 = math.sqrt %110 : vector<16x512xf32>
    %112 = arith.mulf %105, %111 : vector<16x512xf32>
    %cst_39 = arith.constant dense<0.000000e+00> : vector<512xf32>
    %113 = vector.multi_reduction <add>, %112, %cst_39 [0] : vector<16x512xf32> to vector<512xf32>
    %114 = vector.shape_cast %113 : vector<512xf32> to vector<1x512xf32>
    %115 = tpu.reciprocal %114 : vector<1x512xf32> -> vector<1x512xf32>
    %116 = vector.broadcast %115 : vector<1x512xf32> to vector<16x512xf32>
    %117 = arith.mulf %112, %116 : vector<16x512xf32>
    %118 = arith.addf %106, %117 : vector<16x512xf32>
    %cst_40 = arith.constant 1.000000e+00 : f32
    %119 = vector.broadcast %cst_40 : f32 to vector<16x512xf32>
    %120 = arith.subf %119, %117 : vector<16x512xf32>
    %cst_41 = arith.constant 9.99999968E-21 : f32
    %121 = vector.broadcast %cst_41 : f32 to vector<16x512xf32>
    %122 = arith.maximumf %120, %121 : vector<16x512xf32>
    %123 = math.sqrt %122 : vector<16x512xf32>
    %124 = arith.mulf %117, %123 : vector<16x512xf32>
    %cst_42 = arith.constant dense<0.000000e+00> : vector<512xf32>
    %125 = vector.multi_reduction <add>, %124, %cst_42 [0] : vector<16x512xf32> to vector<512xf32>
    %126 = vector.shape_cast %125 : vector<512xf32> to vector<1x512xf32>
    %127 = tpu.reciprocal %126 : vector<1x512xf32> -> vector<1x512xf32>
    %128 = vector.broadcast %127 : vector<1x512xf32> to vector<16x512xf32>
    %129 = arith.mulf %124, %128 : vector<16x512xf32>
    %130 = arith.addf %118, %129 : vector<16x512xf32>
    %cst_43 = arith.constant 1.000000e+00 : f32
    %131 = vector.broadcast %cst_43 : f32 to vector<16x512xf32>
    %132 = arith.subf %131, %129 : vector<16x512xf32>
    %cst_44 = arith.constant 9.99999968E-21 : f32
    %133 = vector.broadcast %cst_44 : f32 to vector<16x512xf32>
    %134 = arith.maximumf %132, %133 : vector<16x512xf32>
    %135 = math.sqrt %134 : vector<16x512xf32>
    %136 = arith.mulf %129, %135 : vector<16x512xf32>
    %cst_45 = arith.constant dense<0.000000e+00> : vector<512xf32>
    %137 = vector.multi_reduction <add>, %136, %cst_45 [0] : vector<16x512xf32> to vector<512xf32>
    %138 = vector.shape_cast %137 : vector<512xf32> to vector<1x512xf32>
    %139 = tpu.reciprocal %138 : vector<1x512xf32> -> vector<1x512xf32>
    %140 = vector.broadcast %139 : vector<1x512xf32> to vector<16x512xf32>
    %141 = arith.mulf %136, %140 : vector<16x512xf32>
    %142 = arith.addf %130, %141 : vector<16x512xf32>
    %cst_46 = arith.constant 1.000000e+00 : f32
    %143 = vector.broadcast %cst_46 : f32 to vector<16x512xf32>
    %144 = arith.subf %143, %141 : vector<16x512xf32>
    %cst_47 = arith.constant 9.99999968E-21 : f32
    %145 = vector.broadcast %cst_47 : f32 to vector<16x512xf32>
    %146 = arith.maximumf %144, %145 : vector<16x512xf32>
    %147 = math.sqrt %146 : vector<16x512xf32>
    %148 = arith.mulf %141, %147 : vector<16x512xf32>
    %cst_48 = arith.constant dense<0.000000e+00> : vector<512xf32>
    %149 = vector.multi_reduction <add>, %148, %cst_48 [0] : vector<16x512xf32> to vector<512xf32>
    %150 = vector.shape_cast %149 : vector<512xf32> to vector<1x512xf32>
    %151 = tpu.reciprocal %150 : vector<1x512xf32> -> vector<1x512xf32>
    %152 = vector.broadcast %151 : vector<1x512xf32> to vector<16x512xf32>
    %153 = arith.mulf %148, %152 : vector<16x512xf32>
    %154 = arith.addf %142, %153 : vector<16x512xf32>
    %cst_49 = arith.constant 1.000000e+00 : f32
    %155 = vector.broadcast %cst_49 : f32 to vector<16x512xf32>
    %156 = arith.subf %155, %153 : vector<16x512xf32>
    %cst_50 = arith.constant 9.99999968E-21 : f32
    %157 = vector.broadcast %cst_50 : f32 to vector<16x512xf32>
    %158 = arith.maximumf %156, %157 : vector<16x512xf32>
    %159 = math.sqrt %158 : vector<16x512xf32>
    %160 = arith.mulf %153, %159 : vector<16x512xf32>
    %cst_51 = arith.constant dense<0.000000e+00> : vector<512xf32>
    %161 = vector.multi_reduction <add>, %160, %cst_51 [0] : vector<16x512xf32> to vector<512xf32>
    %162 = vector.shape_cast %161 : vector<512xf32> to vector<1x512xf32>
    %163 = tpu.reciprocal %162 : vector<1x512xf32> -> vector<1x512xf32>
    %164 = vector.broadcast %163 : vector<1x512xf32> to vector<16x512xf32>
    %165 = arith.mulf %160, %164 : vector<16x512xf32>
    %166 = arith.addf %154, %165 : vector<16x512xf32>
    %cst_52 = arith.constant 1.000000e+00 : f32
    %167 = vector.broadcast %cst_52 : f32 to vector<16x512xf32>
    %168 = arith.subf %167, %165 : vector<16x512xf32>
    %cst_53 = arith.constant 9.99999968E-21 : f32
    %169 = vector.broadcast %cst_53 : f32 to vector<16x512xf32>
    %170 = arith.maximumf %168, %169 : vector<16x512xf32>
    %171 = math.sqrt %170 : vector<16x512xf32>
    %172 = arith.mulf %165, %171 : vector<16x512xf32>
    %cst_54 = arith.constant dense<0.000000e+00> : vector<512xf32>
    %173 = vector.multi_reduction <add>, %172, %cst_54 [0] : vector<16x512xf32> to vector<512xf32>
    %174 = vector.shape_cast %173 : vector<512xf32> to vector<1x512xf32>
    %175 = tpu.reciprocal %174 : vector<1x512xf32> -> vector<1x512xf32>
    %176 = vector.broadcast %175 : vector<1x512xf32> to vector<16x512xf32>
    %177 = arith.mulf %172, %176 : vector<16x512xf32>
    %178 = arith.addf %166, %177 : vector<16x512xf32>
    %cst_55 = arith.constant 1.000000e+00 : f32
    %179 = vector.broadcast %cst_55 : f32 to vector<16x512xf32>
    %180 = arith.subf %179, %177 : vector<16x512xf32>
    %cst_56 = arith.constant 9.99999968E-21 : f32
    %181 = vector.broadcast %cst_56 : f32 to vector<16x512xf32>
    %182 = arith.maximumf %180, %181 : vector<16x512xf32>
    %183 = math.sqrt %182 : vector<16x512xf32>
    %184 = arith.mulf %177, %183 : vector<16x512xf32>
    %cst_57 = arith.constant dense<0.000000e+00> : vector<512xf32>
    %185 = vector.multi_reduction <add>, %184, %cst_57 [0] : vector<16x512xf32> to vector<512xf32>
    %186 = vector.shape_cast %185 : vector<512xf32> to vector<1x512xf32>
    %187 = tpu.reciprocal %186 : vector<1x512xf32> -> vector<1x512xf32>
    %188 = vector.broadcast %187 : vector<1x512xf32> to vector<16x512xf32>
    %189 = arith.mulf %184, %188 : vector<16x512xf32>
    %190 = arith.addf %178, %189 : vector<16x512xf32>
    %cst_58 = arith.constant 1.000000e+00 : f32
    %191 = vector.broadcast %cst_58 : f32 to vector<16x512xf32>
    %192 = arith.subf %191, %189 : vector<16x512xf32>
    %cst_59 = arith.constant 9.99999968E-21 : f32
    %193 = vector.broadcast %cst_59 : f32 to vector<16x512xf32>
    %194 = arith.maximumf %192, %193 : vector<16x512xf32>
    %195 = math.sqrt %194 : vector<16x512xf32>
    %196 = arith.mulf %189, %195 : vector<16x512xf32>
    %cst_60 = arith.constant dense<0.000000e+00> : vector<512xf32>
    %197 = vector.multi_reduction <add>, %196, %cst_60 [0] : vector<16x512xf32> to vector<512xf32>
    %198 = vector.shape_cast %197 : vector<512xf32> to vector<1x512xf32>
    %199 = tpu.reciprocal %198 : vector<1x512xf32> -> vector<1x512xf32>
    %200 = vector.broadcast %199 : vector<1x512xf32> to vector<16x512xf32>
    %201 = arith.mulf %196, %200 : vector<16x512xf32>
    %202 = arith.addf %190, %201 : vector<16x512xf32>
    %cst_61 = arith.constant 1.000000e+00 : f32
    %203 = vector.broadcast %cst_61 : f32 to vector<16x512xf32>
    %204 = arith.subf %203, %201 : vector<16x512xf32>
    %cst_62 = arith.constant 9.99999968E-21 : f32
    %205 = vector.broadcast %cst_62 : f32 to vector<16x512xf32>
    %206 = arith.maximumf %204, %205 : vector<16x512xf32>
    %207 = math.sqrt %206 : vector<16x512xf32>
    %208 = arith.mulf %201, %207 : vector<16x512xf32>
    %cst_63 = arith.constant dense<0.000000e+00> : vector<512xf32>
    %209 = vector.multi_reduction <add>, %208, %cst_63 [0] : vector<16x512xf32> to vector<512xf32>
    %210 = vector.shape_cast %209 : vector<512xf32> to vector<1x512xf32>
    %211 = tpu.reciprocal %210 : vector<1x512xf32> -> vector<1x512xf32>
    %212 = vector.broadcast %211 : vector<1x512xf32> to vector<16x512xf32>
    %213 = arith.mulf %208, %212 : vector<16x512xf32>
    %214 = arith.addf %202, %213 : vector<16x512xf32>
    %c0_64 = arith.constant 0 : index
    %c0_65 = arith.constant 0 : index
    %215 = vector.load %arg7[%c0_64, %c0_65] : memref<16x512xf32, #tpu.memory_space<vmem>>, vector<16x512xf32>
    tpu.vector_store %arg7[%c0_64, %c0_65], %214 {strides = array<i32>} : memref<16x512xf32, #tpu.memory_space<vmem>>, vector<16x512xf32>,
    return
  }
  func.func @transform_0(%arg0: i32) -> (i32, i32) {
    %c0_i32 = arith.constant 0 : i32
    %c0_i32_0 = arith.constant 0 : i32
    return %c0_i32, %arg0 : i32, i32
  }
  func.func @transform_1(%arg0: i32) -> (i32, i32) {
    %c0_i32 = arith.constant 0 : i32
    %c0_i32_0 = arith.constant 0 : i32
    %c0_i32_1 = arith.constant 0 : i32
    return %c0_i32, %c0_i32_0 : i32, i32
  }
  func.func @transform_2(%arg0: i32) -> (i32, i32) {
    %c0_i32 = arith.constant 0 : i32
    %c0_i32_0 = arith.constant 0 : i32
    %c0_i32_1 = arith.constant 0 : i32
    return %c0_i32, %c0_i32_0 : i32, i32
  }
  func.func @transform_3(%arg0: i32) -> (i32, i32) {
    %c0_i32 = arith.constant 0 : i32
    %c0_i32_0 = arith.constant 0 : i32
    %c0_i32_1 = arith.constant 0 : i32
    return %c0_i32, %c0_i32_0 : i32, i32
  }
  func.func @transform_4(%arg0: i32) -> (i32, i32) {
    %c0_i32 = arith.constant 0 : i32
    %c0_i32_0 = arith.constant 0 : i32
    %c0_i32_1 = arith.constant 0 : i32
    return %c0_i32, %c0_i32_0 : i32, i32
  }
  func.func @transform_5(%arg0: i32) -> (i32, i32) {
    %c0_i32 = arith.constant 0 : i32
    %c0_i32_0 = arith.constant 0 : i32
    return %c0_i32, %arg0 : i32, i32
  }
  func.func @transform_6(%arg0: i32) -> (i32, i32) {
    %c0_i32 = arith.constant 0 : i32
    %c0_i32_0 = arith.constant 0 : i32
    return %c0_i32, %arg0 : i32, i32
  }
}

</mosaic_0001>

<llo_original>
// kernel: sdm_forward.1
$region0: #{sdm_forward.1}
  #allocation0 [shape = 'u32[]', space=smem, size = 0x4, offset = 0x4, fixed_abs, tag = 'smem constant byte address 0x4 - core index']
  #allocation1 [shape = 'u32[144,128]{1,0:T(1,128)}', space=vmem, size = 0x12000, scoped, tag = 'internal scratch']
  %s0 = inlined_call_operand.vmem [shape: bf16[16,1024], index: 0, kind: input, shape index: {}]
  %s1 = inlined_call_operand.vmem [shape: f32[32,16], index: 1, kind: input, shape index: {}]
  %s2 = inlined_call_operand.vmem [shape: f32[32,1], index: 2, kind: input, shape index: {}]
  %s3 = inlined_call_operand.vmem [shape: f32[16,32], index: 3, kind: input, shape index: {}]
  %s4 = inlined_call_operand.vmem [shape: f32[16,1], index: 4, kind: input, shape index: {}]
  %s5 = inlined_call_operand.vmem [shape: f32[16,1024], index: 5, kind: input, shape index: {}]
  %s6 = inlined_call_operand.hbm [shape: f32[16,1024], index: 6, kind: output, shape index: {}]
  %s7 = sld [smem:[#allocation0]]
  $region103: #{sdm_forward.1} parent=0
    _
  %s9 = ssub.s32 1, %s7
  %s10 = scalar_select 0, %s9, %s7
  $region1: #{sdm_forward.1} parent=0
    #allocation2 [shape = 'u8[32768]{0}', space=vmem, size = 0x8000, scoped, tag = 'input window, operand 0']
    #allocation3 [shape = 'u8[65536]{0}', space=vmem, size = 0x10000, scoped, tag = 'input window, operand 5']
    #allocation4 [shape = 'u8[65536]{0}', space=vmem, size = 0x10000, scoped, tag = 'output window, operand 0']
    #allocation5 [shape = 's32[2]{0}', space=sflag, size = 0x8, scoped, tag = 'scoped memory for sdm_forward.1']
    %11 = vsyncpa [#allocation5], 0
    %s12 = scalar_lea.sflag [#allocation5], 1
    %13 = vsyncpa %s12, 0
    loop: start=0, step=1, limit=4
    $region2: #{sdm_forward.1} parent=1 // loop_pre_header
      _
    $region3: #{sdm_forward.1} parent=1 // loop_header
      %s15 = sphi 0, %s19
      %p16 = scmp.ge.s32.totalorder %s15, 4
      %s25 = sphi 0, %s27
      %s28 = sphi 0, %s25
      %s29 = sphi 0, %s28
      %s45 = sphi 0, %s29
      %s49 = sphi 0, %s49
      %s51 = sphi 0, %s49
      %s52 = sphi 0, %s51
      %s66 = sphi 0, %s52
      %s70 = sphi 0, %s70
      %s72 = sphi 0, %s70
      %s73 = sphi 0, %s72
      %s87 = sphi 0, %s73
      %s91 = sphi 0, %s91
      %s93 = sphi 0, %s91
      %s94 = sphi 0, %s93
      %s108 = sphi 0, %s94
      %s112 = sphi 0, %s112
      %s114 = sphi 0, %s112
      %s115 = sphi 0, %s114
      %s129 = sphi 0, %s115
      %s135 = sphi 0, %s137
      %s138 = sphi 0, %s135
      %s139 = sphi 0, %s138
      %s155 = sphi 0, %s139
      %s161 = sphi 0, %s163
      %s164 = sphi 0, %s161
      %s165 = sphi 0, %s164
      %s181 = sphi 0, %s165
    $region4: #{sdm_forward.1} parent=1 // loop_header_branch
      %18 = sbr.rel (%p16) target = $region8
    $region5: #{sdm_forward.1} parent=1 // loop_body
      %s20 = ssub.s32 %s15, 1
      %s21 = ssub.s32 %s15, 2
      %s22 = sadd.s32 %s15, 1
      %s23 = ssub.s32 %s15, %s22
      %p24 = scmp.eq.s32.totalorder %s23, 0
      %s26 = sadd.s32 %s25, 1
      %s27 = scalar_select %p24, %s25, %s26
      %p30 = pneg %p24
      %p31 = scmp.eq.s32.totalorder %s15, 1
      %p32 = por %p30, %p31
      %p33 = scmp.ne.s32.totalorder %s25, %s28
      %p34 = scmp.eq.s32.totalorder %s15, 0
      %p35 = por %p33, %p34
      %p36 = scmp.ne.s32.totalorder %s25, %s28
      %p37 = scmp.eq.s32.totalorder %s20, 1
      %p38 = por %p36, %p37
      %p39 = scmp.ne.s32.totalorder %s28, %s29
      %p40 = scmp.eq.s32.totalorder %s20, 0
      %p41 = por %p39, %p40
      %p42 = scmp.ne.s32.totalorder %s28, %s29
      %p43 = scmp.eq.s32.totalorder %s21, 1
      %p44 = por %p42, %p43
      %p46 = scmp.ne.s32.totalorder %s29, %s45
      %p47 = scmp.eq.s32.totalorder %s21, 0
      %p48 = por %p46, %p47
      %s50 = sadd.s32 %s49, 1
      %p53 = scmp.eq.s32.totalorder %s15, 1
      %p54 = scmp.ne.s32.totalorder %s49, %s51
      %p55 = scmp.eq.s32.totalorder %s15, 0
      %p56 = por %p54, %p55
      %p57 = scmp.ne.s32.totalorder %s49, %s51
      %p58 = scmp.eq.s32.totalorder %s20, 1
      %p59 = por %p57, %p58
      %p60 = scmp.ne.s32.totalorder %s51, %s52
      %p61 = scmp.eq.s32.totalorder %s20, 0
      %p62 = por %p60, %p61
      %p63 = scmp.ne.s32.totalorder %s51, %s52
      %p64 = scmp.eq.s32.totalorder %s21, 1
      %p65 = por %p63, %p64
      %p67 = scmp.ne.s32.totalorder %s52, %s66
      %p68 = scmp.eq.s32.totalorder %s21, 0
      %p69 = por %p67, %p68
      %s71 = sadd.s32 %s70, 1
      %p74 = scmp.eq.s32.totalorder %s15, 1
      %p75 = scmp.ne.s32.totalorder %s70, %s72
      %p76 = scmp.eq.s32.totalorder %s15, 0
      %p77 = por %p75, %p76
      %p78 = scmp.ne.s32.totalorder %s70, %s72
      %p79 = scmp.eq.s32.totalorder %s20, 1
      %p80 = por %p78, %p79
      %p81 = scmp.ne.s32.totalorder %s72, %s73
      %p82 = scmp.eq.s32.totalorder %s20, 0
      %p83 = por %p81, %p82
      %p84 = scmp.ne.s32.totalorder %s72, %s73
      %p85 = scmp.eq.s32.totalorder %s21, 1
      %p86 = por %p84, %p85
      %p88 = scmp.ne.s32.totalorder %s73, %s87
      %p89 = scmp.eq.s32.totalorder %s21, 0
      %p90 = por %p88, %p89
      %s92 = sadd.s32 %s91, 1
      %p95 = scmp.eq.s32.totalorder %s15, 1
      %p96 = scmp.ne.s32.totalorder %s91, %s93
      %p97 = scmp.eq.s32.totalorder %s15, 0
      %p98 = por %p96, %p97
      %p99 = scmp.ne.s32.totalorder %s91, %s93
      %p100 = scmp.eq.s32.totalorder %s20, 1
      %p101 = por %p99, %p100
      %p102 = scmp.ne.s32.totalorder %s93, %s94
      %p103 = scmp.eq.s32.totalorder %s20, 0
      %p104 = por %p102, %p103
      %p105 = scmp.ne.s32.totalorder %s93, %s94
      %p106 = scmp.eq.s32.totalorder %s21, 1
      %p107 = por %p105, %p106
      %p109 = scmp.ne.s32.totalorder %s94, %s108
      %p110 = scmp.eq.s32.totalorder %s21, 0
      %p111 = por %p109, %p110
      %s113 = sadd.s32 %s112, 1
      %p116 = scmp.eq.s32.totalorder %s15, 1
      %p117 = scmp.ne.s32.totalorder %s112, %s114
      %p118 = scmp.eq.s32.totalorder %s15, 0
      %p119 = por %p117, %p118
      %p120 = scmp.ne.s32.totalorder %s112, %s114
      %p121 = scmp.eq.s32.totalorder %s20, 1
      %p122 = por %p120, %p121
      %p123 = scmp.ne.s32.totalorder %s114, %s115
      %p124 = scmp.eq.s32.totalorder %s20, 0
      %p125 = por %p123, %p124
      %p126 = scmp.ne.s32.totalorder %s114, %s115
      %p127 = scmp.eq.s32.totalorder %s21, 1
      %p128 = por %p126, %p127
      %p130 = scmp.ne.s32.totalorder %s115, %s129
      %p131 = scmp.eq.s32.totalorder %s21, 0
      %p132 = por %p130, %p131
      %s133 = ssub.s32 %s15, %s22
      %p134 = scmp.eq.s32.totalorder %s133, 0
      %s136 = sadd.s32 %s135, 1
      %s137 = scalar_select %p134, %s135, %s136
      %p140 = pneg %p134
      %p141 = scmp.eq.s32.totalorder %s15, 1
      %p142 = por %p140, %p141
      %p143 = scmp.ne.s32.totalorder %s135, %s138
      %p144 = scmp.eq.s32.totalorder %s15, 0
      %p145 = por %p143, %p144
      %p146 = scmp.ne.s32.totalorder %s135, %s138
      %p147 = scmp.eq.s32.totalorder %s20, 1
      %p148 = por %p146, %p147
      %p149 = scmp.ne.s32.totalorder %s138, %s139
      %p150 = scmp.eq.s32.totalorder %s20, 0
      %p151 = por %p149, %p150
      %p152 = scmp.ne.s32.totalorder %s138, %s139
      %p153 = scmp.eq.s32.totalorder %s21, 1
      %p154 = por %p152, %p153
      %p156 = scmp.ne.s32.totalorder %s139, %s155
      %p157 = scmp.eq.s32.totalorder %s21, 0
      %p158 = por %p156, %p157
      %s159 = ssub.s32 %s15, %s22
      %p160 = scmp.eq.s32.totalorder %s159, 0
      %s162 = sadd.s32 %s161, 1
      %s163 = scalar_select %p160, %s161, %s162
      %p166 = pneg %p160
      %p167 = scmp.eq.s32.totalorder %s15, 1
      %p168 = por %p166, %p167
      %p169 = scmp.ne.s32.totalorder %s161, %s164
      %p170 = scmp.eq.s32.totalorder %s15, 0
      %p171 = por %p169, %p170
      %p172 = scmp.ne.s32.totalorder %s161, %s164
      %p173 = scmp.eq.s32.totalorder %s20, 1
      %p174 = por %p172, %p173
      %p175 = scmp.ne.s32.totalorder %s164, %s165
      %p176 = scmp.eq.s32.totalorder %s20, 0
      %p177 = por %p175, %p176
      %p178 = scmp.ne.s32.totalorder %s164, %s165
      %p179 = scmp.eq.s32.totalorder %s21, 1
      %p180 = por %p178, %p179
      %p182 = scmp.ne.s32.totalorder %s165, %s181
      %p183 = scmp.eq.s32.totalorder %s21, 0
      %p184 = por %p182, %p183
      %p185 = scmp.le.s32.totalorder 1, %s15
      %p186 = scmp.lt.s32.totalorder %s15, 3
      %p187 = pnand %p185, %p186
      %p188 = pneg %p187
      // Predicated region
      $region9: #{sdm_forward.1} parent=5 // pred_check
        _
      $region10: #{sdm_forward.1} parent=5 // pred_check_branch
        %190 = sbr.rel (%p187) target = $region12
      $region11: #{sdm_forward.1} parent=5 // pred_region
        %s191 = ssub.s32 %s15, 1
        // Predicated region
        $region13: #{sdm_forward.1} parent=11 // pred_check
          %p192 = pneg %p62
        $region14: #{sdm_forward.1} parent=11 // pred_check_branch
          %194 = sbr.rel (%p192) target = $region16
        $region15: #{sdm_forward.1} parent=11 // pred_region
          _
        $region16: #{sdm_forward.1} parent=11 // pred_fallthru
          _
        // Predicated region
        $region17: #{sdm_forward.1} parent=11 // pred_check
          %p195 = pneg %p83
        $region18: #{sdm_forward.1} parent=11 // pred_check_branch
          %197 = sbr.rel (%p195) target = $region20
        $region19: #{sdm_forward.1} parent=11 // pred_region
          _
        $region20: #{sdm_forward.1} parent=11 // pred_fallthru
          _
        // Predicated region
        $region21: #{sdm_forward.1} parent=11 // pred_check
          %p198 = pneg %p104
        $region22: #{sdm_forward.1} parent=11 // pred_check_branch
          %200 = sbr.rel (%p198) target = $region24
        $region23: #{sdm_forward.1} parent=11 // pred_region
          _
        $region24: #{sdm_forward.1} parent=11 // pred_fallthru
          _
        // Predicated region
        $region25: #{sdm_forward.1} parent=11 // pred_check
          %p201 = pneg %p125
        $region26: #{sdm_forward.1} parent=11 // pred_check_branch
          %203 = sbr.rel (%p201) target = $region28
        $region27: #{sdm_forward.1} parent=11 // pred_region
          _
        $region28: #{sdm_forward.1} parent=11 // pred_fallthru
          _
      $region12: #{sdm_forward.1} parent=5 // pred_fallthru
        _
      %p204 = scmp.lt.s32.totalorder %s15, 2
      // Predicated region
      $region29: #{sdm_forward.1} parent=5 // pred_check
        %p205 = pneg %p204
      $region30: #{sdm_forward.1} parent=5 // pred_check_branch
        %207 = sbr.rel (%p205) target = $region32
      $region31: #{sdm_forward.1} parent=5 // pred_region
        // Predicated region
        $region33: #{sdm_forward.1} parent=31 // pred_check
          %p208 = pneg %p35
        $region34: #{sdm_forward.1} parent=31 // pred_check_branch
          %210 = sbr.rel (%p208) target = $region36
        $region35: #{sdm_forward.1} parent=31 // pred_region
          %s211 = sand.u32 %s25, 1
          %s212 = sand.u32 %s25, 1
          %s213 = smul.addr %s212, 32
          %s214 = scalar_lea.vmem [#allocation2], %s213
          %s215 = smul.u32 4, %s15
          %s216 = smul.addr %s215, 4
          %s217 = scalar_lea.vmem %s0, %s216
          // Predicated region
          $region37: #{sdm_forward.1} parent=35 // pred_check
            _
          $region38: #{sdm_forward.1} parent=35 // pred_check_branch
            %219 = sbr.rel (0) target = $region40
          $region39: #{sdm_forward.1} parent=35 // pred_region
            // Predicated region
            $region41: #{sdm_forward.1} parent=39 // pred_check
              _
            $region42: #{sdm_forward.1} parent=39 // pred_check_branch
              %221 = sbr.rel (0) target = $region44
            $region43: #{sdm_forward.1} parent=39 // pred_region
              loop: start=0, step=1, limit=1
              $region45: #{sdm_forward.1} parent=43 // loop_pre_header
                _
              $region46: #{sdm_forward.1} parent=43 // loop_header
                %s223 = sphi 0, %s227
                %p224 = scmp.ge.s32.totalorder %s223, 1
                %s228 = sphi %s217, %s217
                %s229 = sphi %s214, %s214
              $region47: #{sdm_forward.1} parent=43 // loop_header_branch
                %226 = sbr.rel (%p224) target = $region51
              $region48: #{sdm_forward.1} parent=43 // loop_body
                %v230 = vld [vmem:[%s228] sm:$0xff]
                %231 = vst [vmem:[%s229] sm:$0xff] %v230
                %v232 = vld [vmem:[%s228 + $0x8] sm:$0xff]
                %233 = vst [vmem:[%s229 + $0x8] sm:$0xff] %v232
                %v234 = vld [vmem:[%s228 + $0x20] sm:$0xff]
                %235 = vst [vmem:[%s229 + $0x10] sm:$0xff] %v234
                %v236 = vld [vmem:[%s228 + $0x28] sm:$0xff]
                %237 = vst [vmem:[%s229 + $0x18] sm:$0xff] %v236
              $region49: #{sdm_forward.1} parent=43 // loop_footer
                %s227 = sadd.s32 1, %s223
              $region50: #{sdm_forward.1} parent=43 // loop_footer_branch
                %222 = sbr.rel target = $region46
              $region51: #{sdm_forward.1} parent=43 // loop_exit
                _
            $region44: #{sdm_forward.1} parent=39 // pred_fallthru
              _
            // Predicated region
            $region52: #{sdm_forward.1} parent=39 // pred_check
              _
            $region53: #{sdm_forward.1} parent=39 // pred_check_branch
              %239 = sbr.rel target = $region55
            $region54: #{sdm_forward.1} parent=39 // pred_region
              _
            $region55: #{sdm_forward.1} parent=39 // pred_fallthru
              _
          $region40: #{sdm_forward.1} parent=35 // pred_fallthru
            _
          %240 = vnop
        $region36: #{sdm_forward.1} parent=31 // pred_fallthru
          _
        // Predicated region
        $region56: #{sdm_forward.1} parent=31 // pred_check
          %p241 = pneg %p145
        $region57: #{sdm_forward.1} parent=31 // pred_check_branch
          %243 = sbr.rel (%p241) target = $region59
        $region58: #{sdm_forward.1} parent=31 // pred_region
          %s244 = sand.u32 %s135, 1
          %s245 = sand.u32 %s135, 1
          %s246 = smul.addr %s245, 64
          %s247 = scalar_lea.vmem [#allocation3], %s246
          %s248 = smul.u32 4, %s15
          %s249 = smul.addr %s248, 8
          %s250 = scalar_lea.vmem %s5, %s249
          // Predicated region
          $region60: #{sdm_forward.1} parent=58 // pred_check
            _
          $region61: #{sdm_forward.1} parent=58 // pred_check_branch
            %252 = sbr.rel (0) target = $region63
          $region62: #{sdm_forward.1} parent=58 // pred_region
            // Predicated region
            $region64: #{sdm_forward.1} parent=62 // pred_check
              _
            $region65: #{sdm_forward.1} parent=62 // pred_check_branch
              %254 = sbr.rel (0) target = $region67
            $region66: #{sdm_forward.1} parent=62 // pred_region
              loop: start=0, step=1, limit=1
              $region68: #{sdm_forward.1} parent=66 // loop_pre_header
                _
              $region69: #{sdm_forward.1} parent=66 // loop_header
                %s256 = sphi 0, %s260
                %p257 = scmp.ge.s32.totalorder %s256, 1
                %s261 = sphi %s250, %s250
                %s262 = sphi %s247, %s247
              $region70: #{sdm_forward.1} parent=66 // loop_header_branch
                %259 = sbr.rel (%p257) target = $region74
              $region71: #{sdm_forward.1} parent=66 // loop_body
                %v263 = vld [vmem:[%s261] sm:$0xff]
                %264 = vst [vmem:[%s262] sm:$0xff] %v263
                %v265 = vld [vmem:[%s261 + $0x8] sm:$0xff]
                %266 = vst [vmem:[%s262 + $0x8] sm:$0xff] %v265
                %v267 = vld [vmem:[%s261 + $0x10] sm:$0xff]
                %268 = vst [vmem:[%s262 + $0x10] sm:$0xff] %v267
                %v269 = vld [vmem:[%s261 + $0x18] sm:$0xff]
                %270 = vst [vmem:[%s262 + $0x18] sm:$0xff] %v269
                %v271 = vld [vmem:[%s261 + $0x40] sm:$0xff]
                %272 = vst [vmem:[%s262 + $0x20] sm:$0xff] %v271
                %v273 = vld [vmem:[%s261 + $0x48] sm:$0xff]
                %274 = vst [vmem:[%s262 + $0x28] sm:$0xff] %v273
                %v275 = vld [vmem:[%s261 + $0x50] sm:$0xff]
                %276 = vst [vmem:[%s262 + $0x30] sm:$0xff] %v275
                %v277 = vld [vmem:[%s261 + $0x58] sm:$0xff]
                %278 = vst [vmem:[%s262 + $0x38] sm:$0xff] %v277
              $region72: #{sdm_forward.1} parent=66 // loop_footer
                %s260 = sadd.s32 1, %s256
              $region73: #{sdm_forward.1} parent=66 // loop_footer_branch
                %255 = sbr.rel target = $region69
              $region74: #{sdm_forward.1} parent=66 // loop_exit
                _
            $region67: #{sdm_forward.1} parent=62 // pred_fallthru
              _
            // Predicated region
            $region75: #{sdm_forward.1} parent=62 // pred_check
              _
            $region76: #{sdm_forward.1} parent=62 // pred_check_branch
              %280 = sbr.rel target = $region78
            $region77: #{sdm_forward.1} parent=62 // pred_region
              _
            $region78: #{sdm_forward.1} parent=62 // pred_fallthru
              _
          $region63: #{sdm_forward.1} parent=58 // pred_fallthru
            _
          %281 = vnop
        $region59: #{sdm_forward.1} parent=31 // pred_fallthru
          _
      $region32: #{sdm_forward.1} parent=5 // pred_fallthru
        _
      %p282 = scmp.le.s32.totalorder 1, %s15
      %p283 = scmp.lt.s32.totalorder %s15, 3
      %p284 = pnand %p282, %p283
      %p285 = pneg %p284
      // Predicated region
      $region79: #{sdm_forward.1} parent=5 // pred_check
        _
      $region80: #{sdm_forward.1} parent=5 // pred_check_branch
        %287 = sbr.rel (%p284) target = $region82
      $region81: #{sdm_forward.1} parent=5 // pred_region
        %s288 = ssub.s32 %s15, 1
        %s289 = sand.u32 %s28, 1
        %s290 = sand.u32 %s28, 1
        %s291 = smul.addr %s290, 32
        %s292 = scalar_lea.vmem [#allocation2], %s291
        // Predicated region
        $region83: #{sdm_forward.1} parent=81 // pred_check
          %p293 = pneg %p41
        $region84: #{sdm_forward.1} parent=81 // pred_check_branch
          %295 = sbr.rel (%p293) target = $region86
        $region85: #{sdm_forward.1} parent=81 // pred_region
          _
        $region86: #{sdm_forward.1} parent=81 // pred_fallthru
          _
        %s296 = sand.u32 %s138, 1
        %s297 = sand.u32 %s138, 1
        %s298 = smul.addr %s297, 64
        %s299 = scalar_lea.vmem [#allocation3], %s298
        // Predicated region
        $region87: #{sdm_forward.1} parent=81 // pred_check
          %p300 = pneg %p151
        $region88: #{sdm_forward.1} parent=81 // pred_check_branch
          %302 = sbr.rel (%p300) target = $region90
        $region89: #{sdm_forward.1} parent=81 // pred_region
          _
        $region90: #{sdm_forward.1} parent=81 // pred_fallthru
          _
        %s303 = sand.u32 %s28, 1
        %s304 = sand.u32 %s28, 1
        %s305 = smul.addr %s304, 32
        %s306 = scalar_lea.vmem [#allocation2], %s305
        %p307 = pneg %p41
        %p308 = pneg %p38
        %p309 = pneg %p62
        %p310 = pneg %p59
        %p311 = pneg %p83
        %p312 = pneg %p80
        %p313 = pneg %p104
        %p314 = pneg %p101
        %p315 = pneg %p125
        %p316 = pneg %p122
        %s317 = sand.u32 %s138, 1
        %s318 = sand.u32 %s138, 1
        %s319 = smul.addr %s318, 64
        %s320 = scalar_lea.vmem [#allocation3], %s319
        %p321 = pneg %p151
        %p322 = pneg %p148
        %p323 = pneg %p177
        %p324 = pneg %p174
        %s325 = sand.u32 %s164, 1
        %s326 = scalar_lea.sflag [#allocation5], %s325
        %s327 = sand.u32 %s164, 1
        %s328 = smul.addr %s327, 64
        %s329 = scalar_lea.vmem [#allocation4], %s328
        %s330 = smul.u32 4, %s20
        %s331 = smul.u32 4, %s20
        %s332 = smul.u32 4, %s20
        %v333 = vld [vmem:[%s292] sm:$0xff]
        %v334 = vld [vmem:[%s292 + $0x8] sm:$0xff]
        %v335 = vld [vmem:[%s292 + $0x10] sm:$0xff]
        %v336 = vld [vmem:[%s292 + $0x18] sm:$0xff]
        %v337 = vunpack.c.l.bf16 %v333
        %v338 = vunpack.c.h.bf16 %v333
        %v339 = vunpack.c.l.bf16 %v334
        %v340 = vunpack.c.h.bf16 %v334
        %v341 = vunpack.c.l.bf16 %v335
        %v342 = vunpack.c.h.bf16 %v335
        %v343 = vunpack.c.l.bf16 %v336
        %v344 = vunpack.c.h.bf16 %v336
        %v345 = vld [vmem:[%s1] sm:$0xff]
        %v346 = vld [vmem:[%s1 + $0x8] sm:$0xff]
        %v347 = vld [vmem:[%s1 + $0x10] sm:$0xff]
        %v348 = vld [vmem:[%s1 + $0x18] sm:$0xff]
        %v349 = vld [vmem:[%s2] sm:$0xff]
        %v350 = vld [vmem:[%s2 + $0x8] sm:$0xff]
        %v351 = vld [vmem:[%s2 + $0x10] sm:$0xff]
        %v352 = vld [vmem:[%s2 + $0x18] sm:$0xff]
        %354 = vset.pattern.permute.xlu0 0
        %355 = vperm.xlu0 %354, %v349
        %v356 = vpop.permute.xlu0 %355
        %359 = vset.pattern.permute.xlu0 0
        %360 = vperm.xlu0 %359, %v350
        %v361 = vpop.permute.xlu0 %360
        %364 = vset.pattern.permute.xlu0 0
        %365 = vperm.xlu0 %364, %v351
        %v366 = vpop.permute.xlu0 %365
        %369 = vset.pattern.permute.xlu0 0
        %370 = vperm.xlu0 %369, %v352
        %v371 = vpop.permute.xlu0 %370
        %vm373 = vcmask 130048
        %v375 = vsel %vm373, %v345, 0
        %v378 = vsel %vm373, %v346, 0
        %v381 = vsel %vm373, %v347, 0
        %v384 = vsel %vm373, %v348, 0
        %386 = vmatprep.subr.mxu0 %v338
        %387 = vmatpush1.msra.mxu0 %v337
        %388 = vmatprep.subr.mxu0 %v342
        %389 = vmatpush1.msra.mxu0 %v341
        %390 = vmatprep.subr.mxu0 0.0
        %391 = vmatpush1.msra.mxu0 0.0
        %392 = vmatprep.subr.mxu0 0.0
        %393 = vmatpush1.msra.mxu0 0.0
        %394 = vmatprep.subr.mxu0 0.0
        %395 = vmatpush1.msra.mxu0 0.0
        %396 = vmatprep.subr.mxu0 0.0
        %397 = vmatpush1.msra.mxu0 0.0
        %398 = vmatprep.subr.mxu0 0.0
        %399 = vmatpush1.msra.mxu0 0.0
        %400 = vmatprep.subr.mxu0 0.0
        %401 = vmatpush1.msra.mxu0 0.0
        %402 = vmatprep.subr.mxu0 0.0
        %403 = vmatpush1.msra.mxu0 0.0
        %404 = vmatprep.subr.mxu0 0.0
        %405 = vmatpush1.msra.mxu0 0.0
        %406 = vmatprep.subr.mxu0 0.0
        %407 = vmatpush1.msra.mxu0 0.0
        %408 = vmatprep.subr.mxu0 0.0
        %409 = vmatpush1.msra.mxu0 0.0
        %410 = vmatprep.subr.mxu0 0.0
        %411 = vmatpush1.msra.mxu0 0.0
        %412 = vmatprep.subr.mxu0 0.0
        %413 = vmatpush1.msra.mxu0 0.0
        %414 = vmatprep.subr.mxu0 0.0
        %415 = vmatpush1.msra.mxu0 0.0
        %416 = vmatprep.subr.mxu0 0.0
        %417 = vmatpush1.msra.mxu0 0.0
        %418 = vmatprep.subr.mxu0 0.0
        %419 = vmatpush1.msra.mxu0 0.0
        %420 = vmatprep.subr.mxu0 0.0
        %421 = vmatpush1.msra.mxu0 0.0
        %422 = vmatprep.subr.mxu0 0.0
        %423 = vmatpush1.msra.mxu0 0.0
        %424 = vmatprep.subr.mxu0 0.0
        %425 = vmatpush1.msra.mxu0 0.0
        %426 = vmatprep.subr.mxu0 0.0
        %427 = vmatpush1.msra.mxu0 0.0
        %428 = vmatprep.subr.mxu0 0.0
        %429 = vmatpush1.msra.mxu0 0.0
        %430 = vmatprep.subr.mxu0 0.0
        %431 = vmatpush1.msra.mxu0 0.0
        %432 = vmatprep.subr.mxu0 0.0
        %433 = vmatpush1.msra.mxu0 0.0
        %434 = vmatprep.subr.mxu0 0.0
        %435 = vmatpush1.msra.mxu0 0.0
        %436 = vmatprep.subr.mxu0 0.0
        %437 = vmatpush1.msra.mxu0 0.0
        %438 = vmatprep.subr.mxu0 0.0
        %439 = vmatpush1.msra.mxu0 0.0
        %440 = vmatprep.subr.mxu0 0.0
        %441 = vmatpush1.msra.mxu0 0.0
        %442 = vmatprep.subr.mxu0 0.0
        %443 = vmatpush1.msra.mxu0 0.0
        %444 = vmatprep.subr.mxu0 0.0
        %445 = vmatpush1.msra.mxu0 0.0
        %446 = vmatprep.subr.mxu0 0.0
        %447 = vmatpush1.msra.mxu0 0.0
        %448 = vmatprep.subr.mxu0 0.0
        %449 = vmatpush1.msra.mxu0 0.0
        %450 = vmatprep.mubr.f32.mxu0 0.0
        %451 = vmatmul.mubr.f32.gmra.mrb[0].mxu0 %v375
        %v452 = vpop.f32.mrb[0].mxu0
        %v453 = vadd.f32 %v356, %v452
        %v454 = vpop.f32.mrb[0].mxu0
        %v455 = vadd.f32 %v356, %v454
        %456 = vmatprep.mubr.f32.mxu0 0.0
        %457 = vmatmul.mubr.f32.gmra.mrb[0].mxu0 %v378
        %v458 = vpop.f32.mrb[0].mxu0
        %v459 = vadd.f32 %v361, %v458
        %v460 = vpop.f32.mrb[0].mxu0
        %v461 = vadd.f32 %v361, %v460
        %462 = vmatprep.mubr.f32.mxu0 0.0
        %463 = vmatmul.mubr.f32.gmra.mrb[0].mxu0 %v381
        %v464 = vpop.f32.mrb[0].mxu0
        %v465 = vadd.f32 %v366, %v464
        %v466 = vpop.f32.mrb[0].mxu0
        %v467 = vadd.f32 %v366, %v466
        %468 = vmatprep.mubr.f32.mxu0 0.0
        %469 = vmatmul.mubr.f32.gmra.mrb[0].mxu0 %v384
        %v470 = vpop.f32.mrb[0].mxu0
        %v471 = vadd.f32 %v371, %v470
        %v472 = vpop.f32.mrb[0].mxu0
        %v473 = vadd.f32 %v371, %v472
        %474 = vdwg.mxu0
        %475 = vmatprep.subr.mxu0 %v340
        %476 = vmatpush1.msra.mxu0 %v339
        %477 = vmatprep.subr.mxu0 %v344
        %478 = vmatpush1.msra.mxu0 %v343
        %479 = vmatprep.subr.mxu0 0.0
        %480 = vmatpush1.msra.mxu0 0.0
        %481 = vmatprep.subr.mxu0 0.0
        %482 = vmatpush1.msra.mxu0 0.0
        %483 = vmatprep.subr.mxu0 0.0
        %484 = vmatpush1.msra.mxu0 0.0
        %485 = vmatprep.subr.mxu0 0.0
        %486 = vmatpush1.msra.mxu0 0.0
        %487 = vmatprep.subr.mxu0 0.0
        %488 = vmatpush1.msra.mxu0 0.0
        %489 = vmatprep.subr.mxu0 0.0
        %490 = vmatpush1.msra.mxu0 0.0
        %491 = vmatprep.subr.mxu0 0.0
        %492 = vmatpush1.msra.mxu0 0.0
        %493 = vmatprep.subr.mxu0 0.0
        %494 = vmatpush1.msra.mxu0 0.0
        %495 = vmatprep.subr.mxu0 0.0
        %496 = vmatpush1.msra.mxu0 0.0
        %497 = vmatprep.subr.mxu0 0.0
        %498 = vmatpush1.msra.mxu0 0.0
        %499 = vmatprep.subr.mxu0 0.0
        %500 = vmatpush1.msra.mxu0 0.0
        %501 = vmatprep.subr.mxu0 0.0
        %502 = vmatpush1.msra.mxu0 0.0
        %503 = vmatprep.subr.mxu0 0.0
        %504 = vmatpush1.msra.mxu0 0.0
        %505 = vmatprep.subr.mxu0 0.0
        %506 = vmatpush1.msra.mxu0 0.0
        %507 = vmatprep.subr.mxu0 0.0
        %508 = vmatpush1.msra.mxu0 0.0
        %509 = vmatprep.subr.mxu0 0.0
        %510 = vmatpush1.msra.mxu0 0.0
        %511 = vmatprep.subr.mxu0 0.0
        %512 = vmatpush1.msra.mxu0 0.0
        %513 = vmatprep.subr.mxu0 0.0
        %514 = vmatpush1.msra.mxu0 0.0
        %515 = vmatprep.subr.mxu0 0.0
        %516 = vmatpush1.msra.mxu0 0.0
        %517 = vmatprep.subr.mxu0 0.0
        %518 = vmatpush1.msra.mxu0 0.0
        %519 = vmatprep.subr.mxu0 0.0
        %520 = vmatpush1.msra.mxu0 0.0
        %521 = vmatprep.subr.mxu0 0.0
        %522 = vmatpush1.msra.mxu0 0.0
        %523 = vmatprep.subr.mxu0 0.0
        %524 = vmatpush1.msra.mxu0 0.0
        %525 = vmatprep.subr.mxu0 0.0
        %526 = vmatpush1.msra.mxu0 0.0
        %527 = vmatprep.subr.mxu0 0.0
        %528 = vmatpush1.msra.mxu0 0.0
        %529 = vmatprep.subr.mxu0 0.0
        %530 = vmatpush1.msra.mxu0 0.0
        %531 = vmatprep.subr.mxu0 0.0
        %532 = vmatpush1.msra.mxu0 0.0
        %533 = vmatprep.subr.mxu0 0.0
        %534 = vmatpush1.msra.mxu0 0.0
        %535 = vmatprep.subr.mxu0 0.0
        %536 = vmatpush1.msra.mxu0 0.0
        %537 = vmatprep.subr.mxu0 0.0
        %538 = vmatpush1.msra.mxu0 0.0
        %539 = vmatprep.mubr.f32.mxu0 0.0
        %540 = vmatmul.mubr.f32.gmra.mrb[0].mxu0 %v375
        %v541 = vpop.f32.mrb[0].mxu0
        %v542 = vadd.f32 %v356, %v541
        %v543 = vpop.f32.mrb[0].mxu0
        %v544 = vadd.f32 %v356, %v543
        %545 = vmatprep.mubr.f32.mxu0 0.0
        %546 = vmatmul.mubr.f32.gmra.mrb[0].mxu0 %v378
        %v547 = vpop.f32.mrb[0].mxu0
        %v548 = vadd.f32 %v361, %v547
        %v549 = vpop.f32.mrb[0].mxu0
        %v550 = vadd.f32 %v361, %v549
        %551 = vmatprep.mubr.f32.mxu0 0.0
        %552 = vmatmul.mubr.f32.gmra.mrb[0].mxu0 %v381
        %v553 = vpop.f32.mrb[0].mxu0
        %v554 = vadd.f32 %v366, %v553
        %v555 = vpop.f32.mrb[0].mxu0
        %v556 = vadd.f32 %v366, %v555
        %557 = vmatprep.mubr.f32.mxu0 0.0
        %558 = vmatmul.mubr.f32.gmra.mrb[0].mxu0 %v384
        %v559 = vpop.f32.mrb[0].mxu0
        %v560 = vadd.f32 %v371, %v559
        %v561 = vpop.f32.mrb[0].mxu0
        %v562 = vadd.f32 %v371, %v561
        %563 = vdwg.mxu0
        %v564 = vmax.f32 %v453, 0.0
        %v565 = vmax.f32 %v455, 0.0
        %v566 = vmax.f32 %v542, 0.0
        %v567 = vmax.f32 %v544, 0.0
        %v568 = vmax.f32 %v459, 0.0
        %v569 = vmax.f32 %v461, 0.0
        %v570 = vmax.f32 %v548, 0.0
        %v571 = vmax.f32 %v550, 0.0
        %v572 = vmax.f32 %v465, 0.0
        %v573 = vmax.f32 %v467, 0.0
        %v574 = vmax.f32 %v554, 0.0
        %v575 = vmax.f32 %v556, 0.0
        %v576 = vmax.f32 %v471, 0.0
        %v577 = vmax.f32 %v473, 0.0
        %v578 = vmax.f32 %v560, 0.0
        %v579 = vmax.f32 %v562, 0.0
        %v580 = vld [vmem:[%s3] sm:$0xff]
        %v581 = vld [vmem:[%s3 + $0x8] sm:$0xff]
        %v582 = vld [vmem:[%s4] sm:$0xff]
        %v583 = vld [vmem:[%s4 + $0x8] sm:$0xff]
        %585 = vset.pattern.permute.xlu0 0
        %586 = vperm.xlu0 %585, %v582
        %v587 = vpop.permute.xlu0 %586
        %590 = vset.pattern.permute.xlu0 0
        %591 = vperm.xlu0 %590, %v583
        %v592 = vpop.permute.xlu0 %591
        %vm594 = vcmask 261120
        %v596 = vsel %vm594, %v580, 0
        %v599 = vsel %vm594, %v581, 0
        %601 = vmatprep.subr.mxu0 %v565
        %602 = vmatpush1.msra.mxu0 %v564
        %603 = vmatprep.subr.mxu0 %v569
        %604 = vmatpush1.msra.mxu0 %v568
        %605 = vmatprep.subr.mxu0 %v573
        %606 = vmatpush1.msra.mxu0 %v572
        %607 = vmatprep.subr.mxu0 %v577
        %608 = vmatpush1.msra.mxu0 %v576
        %609 = vmatprep.subr.mxu0 0.0
        %610 = vmatpush1.msra.mxu0 0.0
        %611 = vmatprep.subr.mxu0 0.0
        %612 = vmatpush1.msra.mxu0 0.0
        %613 = vmatprep.subr.mxu0 0.0
        %614 = vmatpush1.msra.mxu0 0.0
        %615 = vmatprep.subr.mxu0 0.0
        %616 = vmatpush1.msra.mxu0 0.0
        %617 = vmatprep.subr.mxu0 0.0
        %618 = vmatpush1.msra.mxu0 0.0
        %619 = vmatprep.subr.mxu0 0.0
        %620 = vmatpush1.msra.mxu0 0.0
        %621 = vmatprep.subr.mxu0 0.0
        %622 = vmatpush1.msra.mxu0 0.0
        %623 = vmatprep.subr.mxu0 0.0
        %624 = vmatpush1.msra.mxu0 0.0
        %625 = vmatprep.subr.mxu0 0.0
        %626 = vmatpush1.msra.mxu0 0.0
        %627 = vmatprep.subr.mxu0 0.0
        %628 = vmatpush1.msra.mxu0 0.0
        %629 = vmatprep.subr.mxu0 0.0
        %630 = vmatpush1.msra.mxu0 0.0
        %631 = vmatprep.subr.mxu0 0.0
        %632 = vmatpush1.msra.mxu0 0.0
        %633 = vmatprep.subr.mxu0 0.0
        %634 = vmatpush1.msra.mxu0 0.0
        %635 = vmatprep.subr.mxu0 0.0
        %636 = vmatpush1.msra.mxu0 0.0
        %637 = vmatprep.subr.mxu0 0.0
        %638 = vmatpush1.msra.mxu0 0.0
        %639 = vmatprep.subr.mxu0 0.0
        %640 = vmatpush1.msra.mxu0 0.0
        %641 = vmatprep.subr.mxu0 0.0
        %642 = vmatpush1.msra.mxu0 0.0
        %643 = vmatprep.subr.mxu0 0.0
        %644 = vmatpush1.msra.mxu0 0.0
        %645 = vmatprep.subr.mxu0 0.0
        %646 = vmatpush1.msra.mxu0 0.0
        %647 = vmatprep.subr.mxu0 0.0
        %648 = vmatpush1.msra.mxu0 0.0
        %649 = vmatprep.subr.mxu0 0.0
        %650 = vmatpush1.msra.mxu0 0.0
        %651 = vmatprep.subr.mxu0 0.0
        %652 = vmatpush1.msra.mxu0 0.0
        %653 = vmatprep.subr.mxu0 0.0
        %654 = vmatpush1.msra.mxu0 0.0
        %655 = vmatprep.subr.mxu0 0.0
        %656 = vmatpush1.msra.mxu0 0.0
        %657 = vmatprep.subr.mxu0 0.0
        %658 = vmatpush1.msra.mxu0 0.0
        %659 = vmatprep.subr.mxu0 0.0
        %660 = vmatpush1.msra.mxu0 0.0
        %661 = vmatprep.subr.mxu0 0.0
        %662 = vmatpush1.msra.mxu0 0.0
        %663 = vmatprep.subr.mxu0 0.0
        %664 = vmatpush1.msra.mxu0 0.0
        %665 = vmatprep.mubr.f32.mxu0 0.0
        %666 = vmatmul.mubr.f32.gmra.mrb[0].mxu0 %v596
        %v667 = vpop.f32.mrb[0].mxu0
        %v668 = vadd.f32 %v587, %v667
        %v669 = vpop.f32.mrb[0].mxu0
        %v670 = vadd.f32 %v587, %v669
        %671 = vmatprep.mubr.f32.mxu0 0.0
        %672 = vmatmul.mubr.f32.gmra.mrb[0].mxu0 %v599
        %v673 = vpop.f32.mrb[0].mxu0
        %v674 = vadd.f32 %v592, %v673
        %v675 = vpop.f32.mrb[0].mxu0
        %v676 = vadd.f32 %v592, %v675
        %677 = vdwg.mxu0
        %678 = vmatprep.subr.mxu0 %v567
        %679 = vmatpush1.msra.mxu0 %v566
        %680 = vmatprep.subr.mxu0 %v571
        %681 = vmatpush1.msra.mxu0 %v570
        %682 = vmatprep.subr.mxu0 %v575
        %683 = vmatpush1.msra.mxu0 %v574
        %684 = vmatprep.subr.mxu0 %v579
        %685 = vmatpush1.msra.mxu0 %v578
        %686 = vmatprep.subr.mxu0 0.0
        %687 = vmatpush1.msra.mxu0 0.0
        %688 = vmatprep.subr.mxu0 0.0
        %689 = vmatpush1.msra.mxu0 0.0
        %690 = vmatprep.subr.mxu0 0.0
        %691 = vmatpush1.msra.mxu0 0.0
        %692 = vmatprep.subr.mxu0 0.0
        %693 = vmatpush1.msra.mxu0 0.0
        %694 = vmatprep.subr.mxu0 0.0
        %695 = vmatpush1.msra.mxu0 0.0
        %696 = vmatprep.subr.mxu0 0.0
        %697 = vmatpush1.msra.mxu0 0.0
        %698 = vmatprep.subr.mxu0 0.0
        %699 = vmatpush1.msra.mxu0 0.0
        %700 = vmatprep.subr.mxu0 0.0
        %701 = vmatpush1.msra.mxu0 0.0
        %702 = vmatprep.subr.mxu0 0.0
        %703 = vmatpush1.msra.mxu0 0.0
        %704 = vmatprep.subr.mxu0 0.0
        %705 = vmatpush1.msra.mxu0 0.0
        %706 = vmatprep.subr.mxu0 0.0
        %707 = vmatpush1.msra.mxu0 0.0
        %708 = vmatprep.subr.mxu0 0.0
        %709 = vmatpush1.msra.mxu0 0.0
        %710 = vmatprep.subr.mxu0 0.0
        %711 = vmatpush1.msra.mxu0 0.0
        %712 = vmatprep.subr.mxu0 0.0
        %713 = vmatpush1.msra.mxu0 0.0
        %714 = vmatprep.subr.mxu0 0.0
        %715 = vmatpush1.msra.mxu0 0.0
        %716 = vmatprep.subr.mxu0 0.0
        %717 = vmatpush1.msra.mxu0 0.0
        %718 = vmatprep.subr.mxu0 0.0
        %719 = vmatpush1.msra.mxu0 0.0
        %720 = vmatprep.subr.mxu0 0.0
        %721 = vmatpush1.msra.mxu0 0.0
        %722 = vmatprep.subr.mxu0 0.0
        %723 = vmatpush1.msra.mxu0 0.0
        %724 = vmatprep.subr.mxu0 0.0
        %725 = vmatpush1.msra.mxu0 0.0
        %726 = vmatprep.subr.mxu0 0.0
        %727 = vmatpush1.msra.mxu0 0.0
        %728 = vmatprep.subr.mxu0 0.0
        %729 = vmatpush1.msra.mxu0 0.0
        %730 = vmatprep.subr.mxu0 0.0
        %731 = vmatpush1.msra.mxu0 0.0
        %732 = vmatprep.subr.mxu0 0.0
        %733 = vmatpush1.msra.mxu0 0.0
        %734 = vmatprep.subr.mxu0 0.0
        %735 = vmatpush1.msra.mxu0 0.0
        %736 = vmatprep.subr.mxu0 0.0
        %737 = vmatpush1.msra.mxu0 0.0
        %738 = vmatprep.subr.mxu0 0.0
        %739 = vmatpush1.msra.mxu0 0.0
        %740 = vmatprep.subr.mxu0 0.0
        %741 = vmatpush1.msra.mxu0 0.0
        %742 = vmatprep.mubr.f32.mxu0 0.0
        %743 = vmatmul.mubr.f32.gmra.mrb[0].mxu0 %v596
        %v744 = vpop.f32.mrb[0].mxu0
        %v745 = vadd.f32 %v587, %v744
        %v746 = vpop.f32.mrb[0].mxu0
        %v747 = vadd.f32 %v587, %v746
        %748 = vmatprep.mubr.f32.mxu0 0.0
        %749 = vmatmul.mubr.f32.gmra.mrb[0].mxu0 %v599
        %v750 = vpop.f32.mrb[0].mxu0
        %v751 = vadd.f32 %v592, %v750
        %v752 = vpop.f32.mrb[0].mxu0
        %v753 = vadd.f32 %v592, %v752
        %754 = vdwg.mxu0
        %v755 = vmax.f32 %v668, 0.0
        %v756 = vmax.f32 %v670, 0.0
        %v757 = vmax.f32 %v745, 0.0
        %v758 = vmax.f32 %v747, 0.0
        %v759 = vmax.f32 %v674, 0.0
        %v760 = vmax.f32 %v676, 0.0
        %v761 = vmax.f32 %v751, 0.0
        %v762 = vmax.f32 %v753, 0.0
        %v763 = vadd.f32 %v755, 1e-30
        %v764 = vadd.f32 %v756, 1e-30
        %v765 = vadd.f32 %v757, 1e-30
        %v766 = vadd.f32 %v758, 1e-30
        %v767 = vadd.f32 %v759, 1e-30
        %v768 = vadd.f32 %v760, 1e-30
        %v769 = vadd.f32 %v761, 1e-30
        %v770 = vadd.f32 %v762, 1e-30
        %v771 = vlog2.pop %v763
        %v772 = vmul.f32 %v771, 0.6931472
        %v773 = vlog2.pop %v764
        %v774 = vmul.f32 %v773, 0.6931472
        %v775 = vlog2.pop %v765
        %v776 = vmul.f32 %v775, 0.6931472
        %v777 = vlog2.pop %v766
        %v778 = vmul.f32 %v777, 0.6931472
        %v779 = vlog2.pop %v767
        %v780 = vmul.f32 %v779, 0.6931472
        %v781 = vlog2.pop %v768
        %v782 = vmul.f32 %v781, 0.6931472
        %v783 = vlog2.pop %v769
        %v784 = vmul.f32 %v783, 0.6931472
        %v785 = vlog2.pop %v770
        %v786 = vmul.f32 %v785, 0.6931472
        %v787 = vld [vmem:[%s299] sm:$0xff]
        %v788 = vld [vmem:[%s299 + $0x8] sm:$0xff]
        %v789 = vld [vmem:[%s299 + $0x10] sm:$0xff]
        %v790 = vld [vmem:[%s299 + $0x18] sm:$0xff]
        %v791 = vld [vmem:[%s299 + $0x20] sm:$0xff]
        %v792 = vld [vmem:[%s299 + $0x28] sm:$0xff]
        %v793 = vld [vmem:[%s299 + $0x30] sm:$0xff]
        %v794 = vld [vmem:[%s299 + $0x38] sm:$0xff]
        %v795 = vadd.f32 %v772, %v787
        %v796 = vadd.f32 %v774, %v788
        %v797 = vadd.f32 %v776, %v789
        %v798 = vadd.f32 %v778, %v790
        %v799 = vadd.f32 %v780, %v791
        %v800 = vadd.f32 %v782, %v792
        %v801 = vadd.f32 %v784, %v793
        %v802 = vadd.f32 %v786, %v794
        %v803 = vmul.f32 %v795, 0.5
        %v804 = vmul.f32 %v796, 0.5
        %v805 = vmul.f32 %v797, 0.5
        %v806 = vmul.f32 %v798, 0.5
        %v807 = vmul.f32 %v799, 0.5
        %v808 = vmul.f32 %v800, 0.5
        %v809 = vmul.f32 %v801, 0.5
        %v810 = vmul.f32 %v802, 0.5
        %v811 = vmax.f32 %v803, %v807
        %v812 = vrot.slane %v811, 4
        %v813 = vmax.f32 %v811, %v812
        %v814 = vrot.slane %v813, 2
        %v815 = vmax.f32 %v813, %v814
        %v816 = vrot.slane %v815, 1
        %v817 = vmax.f32 %v815, %v816
        %v818 = vmax.f32 %v804, %v808
        %v819 = vrot.slane %v818, 4
        %v820 = vmax.f32 %v818, %v819
        %v821 = vrot.slane %v820, 2
        %v822 = vmax.f32 %v820, %v821
        %v823 = vrot.slane %v822, 1
        %v824 = vmax.f32 %v822, %v823
        %v825 = vmax.f32 %v805, %v809
        %v826 = vrot.slane %v825, 4
        %v827 = vmax.f32 %v825, %v826
        %v828 = vrot.slane %v827, 2
        %v829 = vmax.f32 %v827, %v828
        %v830 = vrot.slane %v829, 1
        %v831 = vmax.f32 %v829, %v830
        %v832 = vmax.f32 %v806, %v810
        %v833 = vrot.slane %v832, 4
        %v834 = vmax.f32 %v832, %v833
        %v835 = vrot.slane %v834, 2
        %v836 = vmax.f32 %v834, %v835
        %v837 = vrot.slane %v836, 1
        %v838 = vmax.f32 %v836, %v837
        %v839 = vsub.f32 %v803, %v817
        %v840 = vsub.f32 %v804, %v824
        %v841 = vsub.f32 %v805, %v831
        %v842 = vsub.f32 %v806, %v838
        %v843 = vsub.f32 %v807, %v817
        %v844 = vsub.f32 %v808, %v824
        %v845 = vsub.f32 %v809, %v831
        %v846 = vsub.f32 %v810, %v838
        %v847 = vmul.f32 %v839, 1.442695
        %v848 = vpow.pop %v847
        %v849 = vmul.f32 %v840, 1.442695
        %v850 = vpow.pop %v849
        %v851 = vmul.f32 %v841, 1.442695
        %v852 = vpow.pop %v851
        %v853 = vmul.f32 %v842, 1.442695
        %v854 = vpow.pop %v853
        %v855 = vmul.f32 %v843, 1.442695
        %v856 = vpow.pop %v855
        %v857 = vmul.f32 %v844, 1.442695
        %v858 = vpow.pop %v857
        %v859 = vmul.f32 %v845, 1.442695
        %v860 = vpow.pop %v859
        %v861 = vmul.f32 %v846, 1.442695
        %v862 = vpow.pop %v861
        %v863 = vadd.f32 %v848, %v856
        %v864 = vrot.slane %v863, 4
        %v865 = vadd.f32 %v863, %v864
        %v866 = vrot.slane %v865, 2
        %v867 = vadd.f32 %v865, %v866
        %v868 = vrot.slane %v867, 1
        %v869 = vadd.f32 %v867, %v868
        %v870 = vadd.f32 %v850, %v858
        %v871 = vrot.slane %v870, 4
        %v872 = vadd.f32 %v870, %v871
        %v873 = vrot.slane %v872, 2
        %v874 = vadd.f32 %v872, %v873
        %v875 = vrot.slane %v874, 1
        %v876 = vadd.f32 %v874, %v875
        %v877 = vadd.f32 %v852, %v860
        %v878 = vrot.slane %v877, 4
        %v879 = vadd.f32 %v877, %v878
        %v880 = vrot.slane %v879, 2
        %v881 = vadd.f32 %v879, %v880
        %v882 = vrot.slane %v881, 1
        %v883 = vadd.f32 %v881, %v882
        %v884 = vadd.f32 %v854, %v862
        %v885 = vrot.slane %v884, 4
        %v886 = vadd.f32 %v884, %v885
        %v887 = vrot.slane %v886, 2
        %v888 = vadd.f32 %v886, %v887
        %v889 = vrot.slane %v888, 1
        %v890 = vadd.f32 %v888, %v889
        %v891 = vrcp.pop %v869
        %v892 = vrcp.pop %v876
        %v893 = vrcp.pop %v883
        %v894 = vrcp.pop %v890
        %v895 = vmul.f32 %v848, %v891
        %v896 = vmul.f32 %v850, %v892
        %v897 = vmul.f32 %v852, %v893
        %v898 = vmul.f32 %v854, %v894
        %v899 = vmul.f32 %v856, %v891
        %v900 = vmul.f32 %v858, %v892
        %v901 = vmul.f32 %v860, %v893
        %v902 = vmul.f32 %v862, %v894
        %v903 = vadd.f32 %v895, 0.0
        %v904 = vadd.f32 %v896, 0.0
        %v905 = vadd.f32 %v897, 0.0
        %v906 = vadd.f32 %v898, 0.0
        %v907 = vadd.f32 %v899, 0.0
        %v908 = vadd.f32 %v900, 0.0
        %v909 = vadd.f32 %v901, 0.0
        %v910 = vadd.f32 %v902, 0.0
        %v911 = vsub.f32 1.0, %v895
        %v912 = vsub.f32 1.0, %v896
        %v913 = vsub.f32 1.0, %v897
        %v914 = vsub.f32 1.0, %v898
        %v915 = vsub.f32 1.0, %v899
        %v916 = vsub.f32 1.0, %v900
        %v917 = vsub.f32 1.0, %v901
        %v918 = vsub.f32 1.0, %v902
        %v919 = vmax.f32 %v911, 1e-20
        %v920 = vmax.f32 %v912, 1e-20
        %v921 = vmax.f32 %v913, 1e-20
        %v922 = vmax.f32 %v914, 1e-20
        %v923 = vmax.f32 %v915, 1e-20
        %v924 = vmax.f32 %v916, 1e-20
        %v925 = vmax.f32 %v917, 1e-20
        %v926 = vmax.f32 %v918, 1e-20
        %v927 = vrsqrt.pop %v919
        %v928 = vmul.f32 %v919, %v927
        %vm929 = vcmp.eq.f32.partialorder %v919, inf
        %v930 = vsel %vm929, %v919, %v928
        %vm931 = vcmp.eq.f32.partialorder %v919, 0.0
        %v932 = vand.u32 %v919, 2147483648
        %v933 = vsel %vm931, %v932, %v930
        %v934 = vrsqrt.pop %v920
        %v935 = vmul.f32 %v920, %v934
        %vm936 = vcmp.eq.f32.partialorder %v920, inf
        %v937 = vsel %vm936, %v920, %v935
        %vm938 = vcmp.eq.f32.partialorder %v920, 0.0
        %v939 = vand.u32 %v920, 2147483648
        %v940 = vsel %vm938, %v939, %v937
        %v941 = vrsqrt.pop %v921
        %v942 = vmul.f32 %v921, %v941
        %vm943 = vcmp.eq.f32.partialorder %v921, inf
        %v944 = vsel %vm943, %v921, %v942
        %vm945 = vcmp.eq.f32.partialorder %v921, 0.0
        %v946 = vand.u32 %v921, 2147483648
        %v947 = vsel %vm945, %v946, %v944
        %v948 = vrsqrt.pop %v922
        %v949 = vmul.f32 %v922, %v948
        %vm950 = vcmp.eq.f32.partialorder %v922, inf
        %v951 = vsel %vm950, %v922, %v949
        %vm952 = vcmp.eq.f32.partialorder %v922, 0.0
        %v953 = vand.u32 %v922, 2147483648
        %v954 = vsel %vm952, %v953, %v951
        %v955 = vrsqrt.pop %v923
        %v956 = vmul.f32 %v923, %v955
        %vm957 = vcmp.eq.f32.partialorder %v923, inf
        %v958 = vsel %vm957, %v923, %v956
        %vm959 = vcmp.eq.f32.partialorder %v923, 0.0
        %v960 = vand.u32 %v923, 2147483648
        %v961 = vsel %vm959, %v960, %v958
        %v962 = vrsqrt.pop %v924
        %v963 = vmul.f32 %v924, %v962
        %vm964 = vcmp.eq.f32.partialorder %v924, inf
        %v965 = vsel %vm964, %v924, %v963
        %vm966 = vcmp.eq.f32.partialorder %v924, 0.0
        %v967 = vand.u32 %v924, 2147483648
        %v968 = vsel %vm966, %v967, %v965
        %v969 = vrsqrt.pop %v925
        %v970 = vmul.f32 %v925, %v969
        %vm971 = vcmp.eq.f32.partialorder %v925, inf
        %v972 = vsel %vm971, %v925, %v970
        %vm973 = vcmp.eq.f32.partialorder %v925, 0.0
        %v974 = vand.u32 %v925, 2147483648
        %v975 = vsel %vm973, %v974, %v972
        %v976 = vrsqrt.pop %v926
        %v977 = vmul.f32 %v926, %v976
        %vm978 = vcmp.eq.f32.partialorder %v926, inf
        %v979 = vsel %vm978, %v926, %v977
        %vm980 = vcmp.eq.f32.partialorder %v926, 0.0
        %v981 = vand.u32 %v926, 2147483648
        %v982 = vsel %vm980, %v981, %v979
        %v983 = vmul.f32 %v895, %v933
        %v984 = vmul.f32 %v896, %v940
        %v985 = vmul.f32 %v897, %v947
        %v986 = vmul.f32 %v898, %v954
        %v987 = vmul.f32 %v899, %v961
        %v988 = vmul.f32 %v900, %v968
        %v989 = vmul.f32 %v901, %v975
        %v990 = vmul.f32 %v902, %v982
        %v991 = vadd.f32 %v983, %v987
        %v992 = vrot.slane %v991, 4
        %v993 = vadd.f32 %v991, %v992
        %v994 = vrot.slane %v993, 2
        %v995 = vadd.f32 %v993, %v994
        %v996 = vrot.slane %v995, 1
        %v997 = vadd.f32 %v995, %v996
        %v998 = vadd.f32 %v984, %v988
        %v999 = vrot.slane %v998, 4
        %v1000 = vadd.f32 %v998, %v999
        %v1001 = vrot.slane %v1000, 2
        %v1002 = vadd.f32 %v1000, %v1001
        %v1003 = vrot.slane %v1002, 1
        %v1004 = vadd.f32 %v1002, %v1003
        %v1005 = vadd.f32 %v985, %v989
        %v1006 = vrot.slane %v1005, 4
        %v1007 = vadd.f32 %v1005, %v1006
        %v1008 = vrot.slane %v1007, 2
        %v1009 = vadd.f32 %v1007, %v1008
        %v1010 = vrot.slane %v1009, 1
        %v1011 = vadd.f32 %v1009, %v1010
        %v1012 = vadd.f32 %v986, %v990
        %v1013 = vrot.slane %v1012, 4
        %v1014 = vadd.f32 %v1012, %v1013
        %v1015 = vrot.slane %v1014, 2
        %v1016 = vadd.f32 %v1014, %v1015
        %v1017 = vrot.slane %v1016, 1
        %v1018 = vadd.f32 %v1016, %v1017
        %v1019 = vrcp.pop %v997
        %v1020 = vrcp.pop %v1004
        %v1021 = vrcp.pop %v1011
        %v1022 = vrcp.pop %v1018
        %v1023 = vmul.f32 %v983, %v1019
        %v1024 = vmul.f32 %v984, %v1020
        %v1025 = vmul.f32 %v985, %v1021
        %v1026 = vmul.f32 %v986, %v1022
        %v1027 = vmul.f32 %v987, %v1019
        %v1028 = vmul.f32 %v988, %v1020
        %v1029 = vmul.f32 %v989, %v1021
        %v1030 = vmul.f32 %v990, %v1022
        %v1031 = vadd.f32 %v903, %v1023
        %v1032 = vadd.f32 %v904, %v1024
        %v1033 = vadd.f32 %v905, %v1025
        %v1034 = vadd.f32 %v906, %v1026
        %v1035 = vadd.f32 %v907, %v1027
        %v1036 = vadd.f32 %v908, %v1028
        %v1037 = vadd.f32 %v909, %v1029
        %v1038 = vadd.f32 %v910, %v1030
        %v1039 = vsub.f32 1.0, %v1023
        %v1040 = vsub.f32 1.0, %v1024
        %v1041 = vsub.f32 1.0, %v1025
        %v1042 = vsub.f32 1.0, %v1026
        %v1043 = vsub.f32 1.0, %v1027
        %v1044 = vsub.f32 1.0, %v1028
        %v1045 = vsub.f32 1.0, %v1029
        %v1046 = vsub.f32 1.0, %v1030
        %v1047 = vmax.f32 %v1039, 1e-20
        %v1048 = vmax.f32 %v1040, 1e-20
        %v1049 = vmax.f32 %v1041, 1e-20
        %v1050 = vmax.f32 %v1042, 1e-20
        %v1051 = vmax.f32 %v1043, 1e-20
        %v1052 = vmax.f32 %v1044, 1e-20
        %v1053 = vmax.f32 %v1045, 1e-20
        %v1054 = vmax.f32 %v1046, 1e-20
        %v1055 = vrsqrt.pop %v1047
        %v1056 = vmul.f32 %v1047, %v1055
        %vm1057 = vcmp.eq.f32.partialorder %v1047, inf
        %v1058 = vsel %vm1057, %v1047, %v1056
        %vm1059 = vcmp.eq.f32.partialorder %v1047, 0.0
        %v1060 = vand.u32 %v1047, 2147483648
        %v1061 = vsel %vm1059, %v1060, %v1058
        %v1062 = vrsqrt.pop %v1048
        %v1063 = vmul.f32 %v1048, %v1062
        %vm1064 = vcmp.eq.f32.partialorder %v1048, inf
        %v1065 = vsel %vm1064, %v1048, %v1063
        %vm1066 = vcmp.eq.f32.partialorder %v1048, 0.0
        %v1067 = vand.u32 %v1048, 2147483648
        %v1068 = vsel %vm1066, %v1067, %v1065
        %v1069 = vrsqrt.pop %v1049
        %v1070 = vmul.f32 %v1049, %v1069
        %vm1071 = vcmp.eq.f32.partialorder %v1049, inf
        %v1072 = vsel %vm1071, %v1049, %v1070
        %vm1073 = vcmp.eq.f32.partialorder %v1049, 0.0
        %v1074 = vand.u32 %v1049, 2147483648
        %v1075 = vsel %vm1073, %v1074, %v1072
        %v1076 = vrsqrt.pop %v1050
        %v1077 = vmul.f32 %v1050, %v1076
        %vm1078 = vcmp.eq.f32.partialorder %v1050, inf
        %v1079 = vsel %vm1078, %v1050, %v1077
        %vm1080 = vcmp.eq.f32.partialorder %v1050, 0.0
        %v1081 = vand.u32 %v1050, 2147483648
        %v1082 = vsel %vm1080, %v1081, %v1079
        %v1083 = vrsqrt.pop %v1051
        %v1084 = vmul.f32 %v1051, %v1083
        %vm1085 = vcmp.eq.f32.partialorder %v1051, inf
        %v1086 = vsel %vm1085, %v1051, %v1084
        %vm1087 = vcmp.eq.f32.partialorder %v1051, 0.0
        %v1088 = vand.u32 %v1051, 2147483648
        %v1089 = vsel %vm1087, %v1088, %v1086
        %v1090 = vrsqrt.pop %v1052
        %v1091 = vmul.f32 %v1052, %v1090
        %vm1092 = vcmp.eq.f32.partialorder %v1052, inf
        %v1093 = vsel %vm1092, %v1052, %v1091
        %vm1094 = vcmp.eq.f32.partialorder %v1052, 0.0
        %v1095 = vand.u32 %v1052, 2147483648
        %v1096 = vsel %vm1094, %v1095, %v1093
        %v1097 = vrsqrt.pop %v1053
        %v1098 = vmul.f32 %v1053, %v1097
        %vm1099 = vcmp.eq.f32.partialorder %v1053, inf
        %v1100 = vsel %vm1099, %v1053, %v1098
        %vm1101 = vcmp.eq.f32.partialorder %v1053, 0.0
        %v1102 = vand.u32 %v1053, 2147483648
        %v1103 = vsel %vm1101, %v1102, %v1100
        %v1104 = vrsqrt.pop %v1054
        %v1105 = vmul.f32 %v1054, %v1104
        %vm1106 = vcmp.eq.f32.partialorder %v1054, inf
        %v1107 = vsel %vm1106, %v1054, %v1105
        %vm1108 = vcmp.eq.f32.partialorder %v1054, 0.0
        %v1109 = vand.u32 %v1054, 2147483648
        %v1110 = vsel %vm1108, %v1109, %v1107
        %v1111 = vmul.f32 %v1023, %v1061
        %v1112 = vmul.f32 %v1024, %v1068
        %v1113 = vmul.f32 %v1025, %v1075
        %v1114 = vmul.f32 %v1026, %v1082
        %v1115 = vmul.f32 %v1027, %v1089
        %v1116 = vmul.f32 %v1028, %v1096
        %v1117 = vmul.f32 %v1029, %v1103
        %v1118 = vmul.f32 %v1030, %v1110
        %v1119 = vadd.f32 %v1111, %v1115
        %v1120 = vrot.slane %v1119, 4
        %v1121 = vadd.f32 %v1119, %v1120
        %v1122 = vrot.slane %v1121, 2
        %v1123 = vadd.f32 %v1121, %v1122
        %v1124 = vrot.slane %v1123, 1
        %v1125 = vadd.f32 %v1123, %v1124
        %v1126 = vadd.f32 %v1112, %v1116
        %v1127 = vrot.slane %v1126, 4
        %v1128 = vadd.f32 %v1126, %v1127
        %v1129 = vrot.slane %v1128, 2
        %v1130 = vadd.f32 %v1128, %v1129
        %v1131 = vrot.slane %v1130, 1
        %v1132 = vadd.f32 %v1130, %v1131
        %v1133 = vadd.f32 %v1113, %v1117
        %v1134 = vrot.slane %v1133, 4
        %v1135 = vadd.f32 %v1133, %v1134
        %v1136 = vrot.slane %v1135, 2
        %v1137 = vadd.f32 %v1135, %v1136
        %v1138 = vrot.slane %v1137, 1
        %v1139 = vadd.f32 %v1137, %v1138
        %v1140 = vadd.f32 %v1114, %v1118
        %v1141 = vrot.slane %v1140, 4
        %v1142 = vadd.f32 %v1140, %v1141
        %v1143 = vrot.slane %v1142, 2
        %v1144 = vadd.f32 %v1142, %v1143
        %v1145 = vrot.slane %v1144, 1
        %v1146 = vadd.f32 %v1144, %v1145
        %v1147 = vrcp.pop %v1125
        %v1148 = vrcp.pop %v1132
        %v1149 = vrcp.pop %v1139
        %v1150 = vrcp.pop %v1146
        %v1151 = vmul.f32 %v1111, %v1147
        %v1152 = vmul.f32 %v1112, %v1148
        %v1153 = vmul.f32 %v1113, %v1149
        %v1154 = vmul.f32 %v1114, %v1150
        %v1155 = vmul.f32 %v1115, %v1147
        %v1156 = vmul.f32 %v1116, %v1148
        %v1157 = vmul.f32 %v1117, %v1149
        %v1158 = vmul.f32 %v1118, %v1150
        %v1159 = vadd.f32 %v1031, %v1151
        %v1160 = vadd.f32 %v1032, %v1152
        %v1161 = vadd.f32 %v1033, %v1153
        %v1162 = vadd.f32 %v1034, %v1154
        %v1163 = vadd.f32 %v1035, %v1155
        %v1164 = vadd.f32 %v1036, %v1156
        %v1165 = vadd.f32 %v1037, %v1157
        %v1166 = vadd.f32 %v1038, %v1158
        %v1167 = vsub.f32 1.0, %v1151
        %v1168 = vsub.f32 1.0, %v1152
        %v1169 = vsub.f32 1.0, %v1153
        %v1170 = vsub.f32 1.0, %v1154
        %v1171 = vsub.f32 1.0, %v1155
        %v1172 = vsub.f32 1.0, %v1156
        %v1173 = vsub.f32 1.0, %v1157
        %v1174 = vsub.f32 1.0, %v1158
        %v1175 = vmax.f32 %v1167, 1e-20
        %v1176 = vmax.f32 %v1168, 1e-20
        %v1177 = vmax.f32 %v1169, 1e-20
        %v1178 = vmax.f32 %v1170, 1e-20
        %v1179 = vmax.f32 %v1171, 1e-20
        %v1180 = vmax.f32 %v1172, 1e-20
        %v1181 = vmax.f32 %v1173, 1e-20
        %v1182 = vmax.f32 %v1174, 1e-20
        %v1183 = vrsqrt.pop %v1175
        %v1184 = vmul.f32 %v1175, %v1183
        %vm1185 = vcmp.eq.f32.partialorder %v1175, inf
        %v1186 = vsel %vm1185, %v1175, %v1184
        %vm1187 = vcmp.eq.f32.partialorder %v1175, 0.0
        %v1188 = vand.u32 %v1175, 2147483648
        %v1189 = vsel %vm1187, %v1188, %v1186
        %v1190 = vrsqrt.pop %v1176
        %v1191 = vmul.f32 %v1176, %v1190
        %vm1192 = vcmp.eq.f32.partialorder %v1176, inf
        %v1193 = vsel %vm1192, %v1176, %v1191
        %vm1194 = vcmp.eq.f32.partialorder %v1176, 0.0
        %v1195 = vand.u32 %v1176, 2147483648
        %v1196 = vsel %vm1194, %v1195, %v1193
        %v1197 = vrsqrt.pop %v1177
        %v1198 = vmul.f32 %v1177, %v1197
        %vm1199 = vcmp.eq.f32.partialorder %v1177, inf
        %v1200 = vsel %vm1199, %v1177, %v1198
        %vm1201 = vcmp.eq.f32.partialorder %v1177, 0.0
        %v1202 = vand.u32 %v1177, 2147483648
        %v1203 = vsel %vm1201, %v1202, %v1200
        %v1204 = vrsqrt.pop %v1178
        %v1205 = vmul.f32 %v1178, %v1204
        %vm1206 = vcmp.eq.f32.partialorder %v1178, inf
        %v1207 = vsel %vm1206, %v1178, %v1205
        %vm1208 = vcmp.eq.f32.partialorder %v1178, 0.0
        %v1209 = vand.u32 %v1178, 2147483648
        %v1210 = vsel %vm1208, %v1209, %v1207
        %v1211 = vrsqrt.pop %v1179
        %v1212 = vmul.f32 %v1179, %v1211
        %vm1213 = vcmp.eq.f32.partialorder %v1179, inf
        %v1214 = vsel %vm1213, %v1179, %v1212
        %vm1215 = vcmp.eq.f32.partialorder %v1179, 0.0
        %v1216 = vand.u32 %v1179, 2147483648
        %v1217 = vsel %vm1215, %v1216, %v1214
        %v1218 = vrsqrt.pop %v1180
        %v1219 = vmul.f32 %v1180, %v1218
        %vm1220 = vcmp.eq.f32.partialorder %v1180, inf
        %v1221 = vsel %vm1220, %v1180, %v1219
        %vm1222 = vcmp.eq.f32.partialorder %v1180, 0.0
        %v1223 = vand.u32 %v1180, 2147483648
        %v1224 = vsel %vm1222, %v1223, %v1221
        %v1225 = vrsqrt.pop %v1181
        %v1226 = vmul.f32 %v1181, %v1225
        %vm1227 = vcmp.eq.f32.partialorder %v1181, inf
        %v1228 = vsel %vm1227, %v1181, %v1226
        %vm1229 = vcmp.eq.f32.partialorder %v1181, 0.0
        %v1230 = vand.u32 %v1181, 2147483648
        %v1231 = vsel %vm1229, %v1230, %v1228
        %v1232 = vrsqrt.pop %v1182
        %v1233 = vmul.f32 %v1182, %v1232
        %vm1234 = vcmp.eq.f32.partialorder %v1182, inf
        %v1235 = vsel %vm1234, %v1182, %v1233
        %vm1236 = vcmp.eq.f32.partialorder %v1182, 0.0
        %v1237 = vand.u32 %v1182, 2147483648
        %v1238 = vsel %vm1236, %v1237, %v1235
        %v1239 = vmul.f32 %v1151, %v1189
        %v1240 = vmul.f32 %v1152, %v1196
        %v1241 = vmul.f32 %v1153, %v1203
        %v1242 = vmul.f32 %v1154, %v1210
        %v1243 = vmul.f32 %v1155, %v1217
        %v1244 = vmul.f32 %v1156, %v1224
        %v1245 = vmul.f32 %v1157, %v1231
        %v1246 = vmul.f32 %v1158, %v1238
        %v1247 = vadd.f32 %v1239, %v1243
        %v1248 = vrot.slane %v1247, 4
        %v1249 = vadd.f32 %v1247, %v1248
        %v1250 = vrot.slane %v1249, 2
        %v1251 = vadd.f32 %v1249, %v1250
        %v1252 = vrot.slane %v1251, 1
        %v1253 = vadd.f32 %v1251, %v1252
        %v1254 = vadd.f32 %v1240, %v1244
        %v1255 = vrot.slane %v1254, 4
        %v1256 = vadd.f32 %v1254, %v1255
        %v1257 = vrot.slane %v1256, 2
        %v1258 = vadd.f32 %v1256, %v1257
        %v1259 = vrot.slane %v1258, 1
        %v1260 = vadd.f32 %v1258, %v1259
        %v1261 = vadd.f32 %v1241, %v1245
        %v1262 = vrot.slane %v1261, 4
        %v1263 = vadd.f32 %v1261, %v1262
        %v1264 = vrot.slane %v1263, 2
        %v1265 = vadd.f32 %v1263, %v1264
        %v1266 = vrot.slane %v1265, 1
        %v1267 = vadd.f32 %v1265, %v1266
        %v1268 = vadd.f32 %v1242, %v1246
        %v1269 = vrot.slane %v1268, 4
        %v1270 = vadd.f32 %v1268, %v1269
        %v1271 = vrot.slane %v1270, 2
        %v1272 = vadd.f32 %v1270, %v1271
        %v1273 = vrot.slane %v1272, 1
        %v1274 = vadd.f32 %v1272, %v1273
        %v1275 = vrcp.pop %v1253
        %v1276 = vrcp.pop %v1260
        %v1277 = vrcp.pop %v1267
        %v1278 = vrcp.pop %v1274
        %v1279 = vmul.f32 %v1239, %v1275
        %v1280 = vmul.f32 %v1240, %v1276
        %v1281 = vmul.f32 %v1241, %v1277
        %v1282 = vmul.f32 %v1242, %v1278
        %v1283 = vmul.f32 %v1243, %v1275
        %v1284 = vmul.f32 %v1244, %v1276
        %v1285 = vmul.f32 %v1245, %v1277
        %v1286 = vmul.f32 %v1246, %v1278
        %v1287 = vadd.f32 %v1159, %v1279
        %v1288 = vadd.f32 %v1160, %v1280
        %v1289 = vadd.f32 %v1161, %v1281
        %v1290 = vadd.f32 %v1162, %v1282
        %v1291 = vadd.f32 %v1163, %v1283
        %v1292 = vadd.f32 %v1164, %v1284
        %v1293 = vadd.f32 %v1165, %v1285
        %v1294 = vadd.f32 %v1166, %v1286
        %v1295 = vsub.f32 1.0, %v1279
        %v1296 = vsub.f32 1.0, %v1280
        %v1297 = vsub.f32 1.0, %v1281
        %v1298 = vsub.f32 1.0, %v1282
        %v1299 = vsub.f32 1.0, %v1283
        %v1300 = vsub.f32 1.0, %v1284
        %v1301 = vsub.f32 1.0, %v1285
        %v1302 = vsub.f32 1.0, %v1286
        %v1303 = vmax.f32 %v1295, 1e-20
        %v1304 = vmax.f32 %v1296, 1e-20
        %v1305 = vmax.f32 %v1297, 1e-20
        %v1306 = vmax.f32 %v1298, 1e-20
        %v1307 = vmax.f32 %v1299, 1e-20
        %v1308 = vmax.f32 %v1300, 1e-20
        %v1309 = vmax.f32 %v1301, 1e-20
        %v1310 = vmax.f32 %v1302, 1e-20
        %v1311 = vrsqrt.pop %v1303
        %v1312 = vmul.f32 %v1303, %v1311
        %vm1313 = vcmp.eq.f32.partialorder %v1303, inf
        %v1314 = vsel %vm1313, %v1303, %v1312
        %vm1315 = vcmp.eq.f32.partialorder %v1303, 0.0
        %v1316 = vand.u32 %v1303, 2147483648
        %v1317 = vsel %vm1315, %v1316, %v1314
        %v1318 = vrsqrt.pop %v1304
        %v1319 = vmul.f32 %v1304, %v1318
        %vm1320 = vcmp.eq.f32.partialorder %v1304, inf
        %v1321 = vsel %vm1320, %v1304, %v1319
        %vm1322 = vcmp.eq.f32.partialorder %v1304, 0.0
        %v1323 = vand.u32 %v1304, 2147483648
        %v1324 = vsel %vm1322, %v1323, %v1321
        %v1325 = vrsqrt.pop %v1305
        %v1326 = vmul.f32 %v1305, %v1325
        %vm1327 = vcmp.eq.f32.partialorder %v1305, inf
        %v1328 = vsel %vm1327, %v1305, %v1326
        %vm1329 = vcmp.eq.f32.partialorder %v1305, 0.0
        %v1330 = vand.u32 %v1305, 2147483648
        %v1331 = vsel %vm1329, %v1330, %v1328
        %v1332 = vrsqrt.pop %v1306
        %v1333 = vmul.f32 %v1306, %v1332
        %vm1334 = vcmp.eq.f32.partialorder %v1306, inf
        %v1335 = vsel %vm1334, %v1306, %v1333
        %vm1336 = vcmp.eq.f32.partialorder %v1306, 0.0
        %v1337 = vand.u32 %v1306, 2147483648
        %v1338 = vsel %vm1336, %v1337, %v1335
        %v1339 = vrsqrt.pop %v1307
        %v1340 = vmul.f32 %v1307, %v1339
        %vm1341 = vcmp.eq.f32.partialorder %v1307, inf
        %v1342 = vsel %vm1341, %v1307, %v1340
        %vm1343 = vcmp.eq.f32.partialorder %v1307, 0.0
        %v1344 = vand.u32 %v1307, 2147483648
        %v1345 = vsel %vm1343, %v1344, %v1342
        %v1346 = vrsqrt.pop %v1308
        %v1347 = vmul.f32 %v1308, %v1346
        %vm1348 = vcmp.eq.f32.partialorder %v1308, inf
        %v1349 = vsel %vm1348, %v1308, %v1347
        %vm1350 = vcmp.eq.f32.partialorder %v1308, 0.0
        %v1351 = vand.u32 %v1308, 2147483648
        %v1352 = vsel %vm1350, %v1351, %v1349
        %v1353 = vrsqrt.pop %v1309
        %v1354 = vmul.f32 %v1309, %v1353
        %vm1355 = vcmp.eq.f32.partialorder %v1309, inf
        %v1356 = vsel %vm1355, %v1309, %v1354
        %vm1357 = vcmp.eq.f32.partialorder %v1309, 0.0
        %v1358 = vand.u32 %v1309, 2147483648
        %v1359 = vsel %vm1357, %v1358, %v1356
        %v1360 = vrsqrt.pop %v1310
        %v1361 = vmul.f32 %v1310, %v1360
        %vm1362 = vcmp.eq.f32.partialorder %v1310, inf
        %v1363 = vsel %vm1362, %v1310, %v1361
        %vm1364 = vcmp.eq.f32.partialorder %v1310, 0.0
        %v1365 = vand.u32 %v1310, 2147483648
        %v1366 = vsel %vm1364, %v1365, %v1363
        %v1367 = vmul.f32 %v1279, %v1317
        %v1368 = vmul.f32 %v1280, %v1324
        %v1369 = vmul.f32 %v1281, %v1331
        %v1370 = vmul.f32 %v1282, %v1338
        %v1371 = vmul.f32 %v1283, %v1345
        %v1372 = vmul.f32 %v1284, %v1352
        %v1373 = vmul.f32 %v1285, %v1359
        %v1374 = vmul.f32 %v1286, %v1366
        %v1375 = vadd.f32 %v1367, %v1371
        %v1376 = vrot.slane %v1375, 4
        %v1377 = vadd.f32 %v1375, %v1376
        %v1378 = vrot.slane %v1377, 2
        %v1379 = vadd.f32 %v1377, %v1378
        %v1380 = vrot.slane %v1379, 1
        %v1381 = vadd.f32 %v1379, %v1380
        %v1382 = vadd.f32 %v1368, %v1372
        %v1383 = vrot.slane %v1382, 4
        %v1384 = vadd.f32 %v1382, %v1383
        %v1385 = vrot.slane %v1384, 2
        %v1386 = vadd.f32 %v1384, %v1385
        %v1387 = vrot.slane %v1386, 1
        %v1388 = vadd.f32 %v1386, %v1387
        %v1389 = vadd.f32 %v1369, %v1373
        %v1390 = vrot.slane %v1389, 4
        %v1391 = vadd.f32 %v1389, %v1390
        %v1392 = vrot.slane %v1391, 2
        %v1393 = vadd.f32 %v1391, %v1392
        %v1394 = vrot.slane %v1393, 1
        %v1395 = vadd.f32 %v1393, %v1394
        %v1396 = vadd.f32 %v1370, %v1374
        %v1397 = vrot.slane %v1396, 4
        %v1398 = vadd.f32 %v1396, %v1397
        %v1399 = vrot.slane %v1398, 2
        %v1400 = vadd.f32 %v1398, %v1399
        %v1401 = vrot.slane %v1400, 1
        %v1402 = vadd.f32 %v1400, %v1401
        %v1403 = vrcp.pop %v1381
        %v1404 = vrcp.pop %v1388
        %v1405 = vrcp.pop %v1395
        %v1406 = vrcp.pop %v1402
        %v1407 = vmul.f32 %v1367, %v1403
        %v1408 = vmul.f32 %v1368, %v1404
        %v1409 = vmul.f32 %v1369, %v1405
        %v1410 = vmul.f32 %v1370, %v1406
        %v1411 = vmul.f32 %v1371, %v1403
        %v1412 = vmul.f32 %v1372, %v1404
        %v1413 = vmul.f32 %v1373, %v1405
        %v1414 = vmul.f32 %v1374, %v1406
        %v1415 = vadd.f32 %v1287, %v1407
        %v1416 = vadd.f32 %v1288, %v1408
        %v1417 = vadd.f32 %v1289, %v1409
        %v1418 = vadd.f32 %v1290, %v1410
        %v1419 = vadd.f32 %v1291, %v1411
        %v1420 = vadd.f32 %v1292, %v1412
        %v1421 = vadd.f32 %v1293, %v1413
        %v1422 = vadd.f32 %v1294, %v1414
        %v1423 = vsub.f32 1.0, %v1407
        %v1424 = vsub.f32 1.0, %v1408
        %v1425 = vsub.f32 1.0, %v1409
        %v1426 = vsub.f32 1.0, %v1410
        %v1427 = vsub.f32 1.0, %v1411
        %v1428 = vsub.f32 1.0, %v1412
        %v1429 = vsub.f32 1.0, %v1413
        %v1430 = vsub.f32 1.0, %v1414
        %v1431 = vmax.f32 %v1423, 1e-20
        %v1432 = vmax.f32 %v1424, 1e-20
        %v1433 = vmax.f32 %v1425, 1e-20
        %v1434 = vmax.f32 %v1426, 1e-20
        %v1435 = vmax.f32 %v1427, 1e-20
        %v1436 = vmax.f32 %v1428, 1e-20
        %v1437 = vmax.f32 %v1429, 1e-20
        %v1438 = vmax.f32 %v1430, 1e-20
        %v1439 = vrsqrt.pop %v1431
        %v1440 = vmul.f32 %v1431, %v1439
        %vm1441 = vcmp.eq.f32.partialorder %v1431, inf
        %v1442 = vsel %vm1441, %v1431, %v1440
        %vm1443 = vcmp.eq.f32.partialorder %v1431, 0.0
        %v1444 = vand.u32 %v1431, 2147483648
        %v1445 = vsel %vm1443, %v1444, %v1442
        %v1446 = vrsqrt.pop %v1432
        %v1447 = vmul.f32 %v1432, %v1446
        %vm1448 = vcmp.eq.f32.partialorder %v1432, inf
        %v1449 = vsel %vm1448, %v1432, %v1447
        %vm1450 = vcmp.eq.f32.partialorder %v1432, 0.0
        %v1451 = vand.u32 %v1432, 2147483648
        %v1452 = vsel %vm1450, %v1451, %v1449
        %v1453 = vrsqrt.pop %v1433
        %v1454 = vmul.f32 %v1433, %v1453
        %vm1455 = vcmp.eq.f32.partialorder %v1433, inf
        %v1456 = vsel %vm1455, %v1433, %v1454
        %vm1457 = vcmp.eq.f32.partialorder %v1433, 0.0
        %v1458 = vand.u32 %v1433, 2147483648
        %v1459 = vsel %vm1457, %v1458, %v1456
        %v1460 = vrsqrt.pop %v1434
        %v1461 = vmul.f32 %v1434, %v1460
        %vm1462 = vcmp.eq.f32.partialorder %v1434, inf
        %v1463 = vsel %vm1462, %v1434, %v1461
        %vm1464 = vcmp.eq.f32.partialorder %v1434, 0.0
        %v1465 = vand.u32 %v1434, 2147483648
        %v1466 = vsel %vm1464, %v1465, %v1463
        %v1467 = vrsqrt.pop %v1435
        %v1468 = vmul.f32 %v1435, %v1467
        %vm1469 = vcmp.eq.f32.partialorder %v1435, inf
        %v1470 = vsel %vm1469, %v1435, %v1468
        %vm1471 = vcmp.eq.f32.partialorder %v1435, 0.0
        %v1472 = vand.u32 %v1435, 2147483648
        %v1473 = vsel %vm1471, %v1472, %v1470
        %v1474 = vrsqrt.pop %v1436
        %v1475 = vmul.f32 %v1436, %v1474
        %vm1476 = vcmp.eq.f32.partialorder %v1436, inf
        %v1477 = vsel %vm1476, %v1436, %v1475
        %vm1478 = vcmp.eq.f32.partialorder %v1436, 0.0
        %v1479 = vand.u32 %v1436, 2147483648
        %v1480 = vsel %vm1478, %v1479, %v1477
        %v1481 = vrsqrt.pop %v1437
        %v1482 = vmul.f32 %v1437, %v1481
        %vm1483 = vcmp.eq.f32.partialorder %v1437, inf
        %v1484 = vsel %vm1483, %v1437, %v1482
        %vm1485 = vcmp.eq.f32.partialorder %v1437, 0.0
        %v1486 = vand.u32 %v1437, 2147483648
        %v1487 = vsel %vm1485, %v1486, %v1484
        %v1488 = vrsqrt.pop %v1438
        %v1489 = vmul.f32 %v1438, %v1488
        %vm1490 = vcmp.eq.f32.partialorder %v1438, inf
        %v1491 = vsel %vm1490, %v1438, %v1489
        %vm1492 = vcmp.eq.f32.partialorder %v1438, 0.0
        %v1493 = vand.u32 %v1438, 2147483648
        %v1494 = vsel %vm1492, %v1493, %v1491
        %v1495 = vmul.f32 %v1407, %v1445
        %v1496 = vmul.f32 %v1408, %v1452
        %v1497 = vmul.f32 %v1409, %v1459
        %v1498 = vmul.f32 %v1410, %v1466
        %v1499 = vmul.f32 %v1411, %v1473
        %v1500 = vmul.f32 %v1412, %v1480
        %v1501 = vmul.f32 %v1413, %v1487
        %v1502 = vmul.f32 %v1414, %v1494
        %v1503 = vadd.f32 %v1495, %v1499
        %v1504 = vrot.slane %v1503, 4
        %v1505 = vadd.f32 %v1503, %v1504
        %v1506 = vrot.slane %v1505, 2
        %v1507 = vadd.f32 %v1505, %v1506
        %v1508 = vrot.slane %v1507, 1
        %v1509 = vadd.f32 %v1507, %v1508
        %v1510 = vadd.f32 %v1496, %v1500
        %v1511 = vrot.slane %v1510, 4
        %v1512 = vadd.f32 %v1510, %v1511
        %v1513 = vrot.slane %v1512, 2
        %v1514 = vadd.f32 %v1512, %v1513
        %v1515 = vrot.slane %v1514, 1
        %v1516 = vadd.f32 %v1514, %v1515
        %v1517 = vadd.f32 %v1497, %v1501
        %v1518 = vrot.slane %v1517, 4
        %v1519 = vadd.f32 %v1517, %v1518
        %v1520 = vrot.slane %v1519, 2
        %v1521 = vadd.f32 %v1519, %v1520
        %v1522 = vrot.slane %v1521, 1
        %v1523 = vadd.f32 %v1521, %v1522
        %v1524 = vadd.f32 %v1498, %v1502
        %v1525 = vrot.slane %v1524, 4
        %v1526 = vadd.f32 %v1524, %v1525
        %v1527 = vrot.slane %v1526, 2
        %v1528 = vadd.f32 %v1526, %v1527
        %v1529 = vrot.slane %v1528, 1
        %v1530 = vadd.f32 %v1528, %v1529
        %v1531 = vrcp.pop %v1509
        %v1532 = vrcp.pop %v1516
        %v1533 = vrcp.pop %v1523
        %v1534 = vrcp.pop %v1530
        %v1535 = vmul.f32 %v1495, %v1531
        %v1536 = vmul.f32 %v1496, %v1532
        %v1537 = vmul.f32 %v1497, %v1533
        %v1538 = vmul.f32 %v1498, %v1534
        %v1539 = vmul.f32 %v1499, %v1531
        %v1540 = vmul.f32 %v1500, %v1532
        %v1541 = vmul.f32 %v1501, %v1533
        %v1542 = vmul.f32 %v1502, %v1534
        %v1543 = vadd.f32 %v1415, %v1535
        %v1544 = vadd.f32 %v1416, %v1536
        %v1545 = vadd.f32 %v1417, %v1537
        %v1546 = vadd.f32 %v1418, %v1538
        %v1547 = vadd.f32 %v1419, %v1539
        %v1548 = vadd.f32 %v1420, %v1540
        %v1549 = vadd.f32 %v1421, %v1541
        %v1550 = vadd.f32 %v1422, %v1542
        %v1551 = vsub.f32 1.0, %v1535
        %v1552 = vsub.f32 1.0, %v1536
        %v1553 = vsub.f32 1.0, %v1537
        %v1554 = vsub.f32 1.0, %v1538
        %v1555 = vsub.f32 1.0, %v1539
        %v1556 = vsub.f32 1.0, %v1540
        %v1557 = vsub.f32 1.0, %v1541
        %v1558 = vsub.f32 1.0, %v1542
        %v1559 = vmax.f32 %v1551, 1e-20
        %v1560 = vmax.f32 %v1552, 1e-20
        %v1561 = vmax.f32 %v1553, 1e-20
        %v1562 = vmax.f32 %v1554, 1e-20
        %v1563 = vmax.f32 %v1555, 1e-20
        %v1564 = vmax.f32 %v1556, 1e-20
        %v1565 = vmax.f32 %v1557, 1e-20
        %v1566 = vmax.f32 %v1558, 1e-20
        %v1567 = vrsqrt.pop %v1559
        %v1568 = vmul.f32 %v1559, %v1567
        %vm1569 = vcmp.eq.f32.partialorder %v1559, inf
        %v1570 = vsel %vm1569, %v1559, %v1568
        %vm1571 = vcmp.eq.f32.partialorder %v1559, 0.0
        %v1572 = vand.u32 %v1559, 2147483648
        %v1573 = vsel %vm1571, %v1572, %v1570
        %v1574 = vrsqrt.pop %v1560
        %v1575 = vmul.f32 %v1560, %v1574
        %vm1576 = vcmp.eq.f32.partialorder %v1560, inf
        %v1577 = vsel %vm1576, %v1560, %v1575
        %vm1578 = vcmp.eq.f32.partialorder %v1560, 0.0
        %v1579 = vand.u32 %v1560, 2147483648
        %v1580 = vsel %vm1578, %v1579, %v1577
        %v1581 = vrsqrt.pop %v1561
        %v1582 = vmul.f32 %v1561, %v1581
        %vm1583 = vcmp.eq.f32.partialorder %v1561, inf
        %v1584 = vsel %vm1583, %v1561, %v1582
        %vm1585 = vcmp.eq.f32.partialorder %v1561, 0.0
        %v1586 = vand.u32 %v1561, 2147483648
        %v1587 = vsel %vm1585, %v1586, %v1584
        %v1588 = vrsqrt.pop %v1562
        %v1589 = vmul.f32 %v1562, %v1588
        %vm1590 = vcmp.eq.f32.partialorder %v1562, inf
        %v1591 = vsel %vm1590, %v1562, %v1589
        %vm1592 = vcmp.eq.f32.partialorder %v1562, 0.0
        %v1593 = vand.u32 %v1562, 2147483648
        %v1594 = vsel %vm1592, %v1593, %v1591
        %v1595 = vrsqrt.pop %v1563
        %v1596 = vmul.f32 %v1563, %v1595
        %vm1597 = vcmp.eq.f32.partialorder %v1563, inf
        %v1598 = vsel %vm1597, %v1563, %v1596
        %vm1599 = vcmp.eq.f32.partialorder %v1563, 0.0
        %v1600 = vand.u32 %v1563, 2147483648
        %v1601 = vsel %vm1599, %v1600, %v1598
        %v1602 = vrsqrt.pop %v1564
        %v1603 = vmul.f32 %v1564, %v1602
        %vm1604 = vcmp.eq.f32.partialorder %v1564, inf
        %v1605 = vsel %vm1604, %v1564, %v1603
        %vm1606 = vcmp.eq.f32.partialorder %v1564, 0.0
        %v1607 = vand.u32 %v1564, 2147483648
        %v1608 = vsel %vm1606, %v1607, %v1605
        %v1609 = vrsqrt.pop %v1565
        %v1610 = vmul.f32 %v1565, %v1609
        %vm1611 = vcmp.eq.f32.partialorder %v1565, inf
        %v1612 = vsel %vm1611, %v1565, %v1610
        %vm1613 = vcmp.eq.f32.partialorder %v1565, 0.0
        %v1614 = vand.u32 %v1565, 2147483648
        %v1615 = vsel %vm1613, %v1614, %v1612
        %v1616 = vrsqrt.pop %v1566
        %v1617 = vmul.f32 %v1566, %v1616
        %vm1618 = vcmp.eq.f32.partialorder %v1566, inf
        %v1619 = vsel %vm1618, %v1566, %v1617
        %vm1620 = vcmp.eq.f32.partialorder %v1566, 0.0
        %v1621 = vand.u32 %v1566, 2147483648
        %v1622 = vsel %vm1620, %v1621, %v1619
        %v1623 = vmul.f32 %v1535, %v1573
        %v1624 = vmul.f32 %v1536, %v1580
        %v1625 = vmul.f32 %v1537, %v1587
        %v1626 = vmul.f32 %v1538, %v1594
        %v1627 = vmul.f32 %v1539, %v1601
        %v1628 = vmul.f32 %v1540, %v1608
        %v1629 = vmul.f32 %v1541, %v1615
        %v1630 = vmul.f32 %v1542, %v1622
        %v1631 = vadd.f32 %v1623, %v1627
        %v1632 = vrot.slane %v1631, 4
        %v1633 = vadd.f32 %v1631, %v1632
        %v1634 = vrot.slane %v1633, 2
        %v1635 = vadd.f32 %v1633, %v1634
        %v1636 = vrot.slane %v1635, 1
        %v1637 = vadd.f32 %v1635, %v1636
        %v1638 = vadd.f32 %v1624, %v1628
        %v1639 = vrot.slane %v1638, 4
        %v1640 = vadd.f32 %v1638, %v1639
        %v1641 = vrot.slane %v1640, 2
        %v1642 = vadd.f32 %v1640, %v1641
        %v1643 = vrot.slane %v1642, 1
        %v1644 = vadd.f32 %v1642, %v1643
        %v1645 = vadd.f32 %v1625, %v1629
        %v1646 = vrot.slane %v1645, 4
        %v1647 = vadd.f32 %v1645, %v1646
        %v1648 = vrot.slane %v1647, 2
        %v1649 = vadd.f32 %v1647, %v1648
        %v1650 = vrot.slane %v1649, 1
        %v1651 = vadd.f32 %v1649, %v1650
        %v1652 = vadd.f32 %v1626, %v1630
        %v1653 = vrot.slane %v1652, 4
        %v1654 = vadd.f32 %v1652, %v1653
        %v1655 = vrot.slane %v1654, 2
        %v1656 = vadd.f32 %v1654, %v1655
        %v1657 = vrot.slane %v1656, 1
        %v1658 = vadd.f32 %v1656, %v1657
        %v1659 = vrcp.pop %v1637
        %v1660 = vrcp.pop %v1644
        %v1661 = vrcp.pop %v1651
        %v1662 = vrcp.pop %v1658
        %v1663 = vmul.f32 %v1623, %v1659
        %v1664 = vmul.f32 %v1624, %v1660
        %v1665 = vmul.f32 %v1625, %v1661
        %v1666 = vmul.f32 %v1626, %v1662
        %v1667 = vmul.f32 %v1627, %v1659
        %v1668 = vmul.f32 %v1628, %v1660
        %v1669 = vmul.f32 %v1629, %v1661
        %v1670 = vmul.f32 %v1630, %v1662
        %v1671 = vadd.f32 %v1543, %v1663
        %v1672 = vadd.f32 %v1544, %v1664
        %v1673 = vadd.f32 %v1545, %v1665
        %v1674 = vadd.f32 %v1546, %v1666
        %v1675 = vadd.f32 %v1547, %v1667
        %v1676 = vadd.f32 %v1548, %v1668
        %v1677 = vadd.f32 %v1549, %v1669
        %v1678 = vadd.f32 %v1550, %v1670
        %v1679 = vsub.f32 1.0, %v1663
        %v1680 = vsub.f32 1.0, %v1664
        %v1681 = vsub.f32 1.0, %v1665
        %v1682 = vsub.f32 1.0, %v1666
        %v1683 = vsub.f32 1.0, %v1667
        %v1684 = vsub.f32 1.0, %v1668
        %v1685 = vsub.f32 1.0, %v1669
        %v1686 = vsub.f32 1.0, %v1670
        %v1687 = vmax.f32 %v1679, 1e-20
        %v1688 = vmax.f32 %v1680, 1e-20
        %v1689 = vmax.f32 %v1681, 1e-20
        %v1690 = vmax.f32 %v1682, 1e-20
        %v1691 = vmax.f32 %v1683, 1e-20
        %v1692 = vmax.f32 %v1684, 1e-20
        %v1693 = vmax.f32 %v1685, 1e-20
        %v1694 = vmax.f32 %v1686, 1e-20
        %v1695 = vrsqrt.pop %v1687
        %v1696 = vmul.f32 %v1687, %v1695
        %vm1697 = vcmp.eq.f32.partialorder %v1687, inf
        %v1698 = vsel %vm1697, %v1687, %v1696
        %vm1699 = vcmp.eq.f32.partialorder %v1687, 0.0
        %v1700 = vand.u32 %v1687, 2147483648
        %v1701 = vsel %vm1699, %v1700, %v1698
        %v1702 = vrsqrt.pop %v1688
        %v1703 = vmul.f32 %v1688, %v1702
        %vm1704 = vcmp.eq.f32.partialorder %v1688, inf
        %v1705 = vsel %vm1704, %v1688, %v1703
        %vm1706 = vcmp.eq.f32.partialorder %v1688, 0.0
        %v1707 = vand.u32 %v1688, 2147483648
        %v1708 = vsel %vm1706, %v1707, %v1705
        %v1709 = vrsqrt.pop %v1689
        %v1710 = vmul.f32 %v1689, %v1709
        %vm1711 = vcmp.eq.f32.partialorder %v1689, inf
        %v1712 = vsel %vm1711, %v1689, %v1710
        %vm1713 = vcmp.eq.f32.partialorder %v1689, 0.0
        %v1714 = vand.u32 %v1689, 2147483648
        %v1715 = vsel %vm1713, %v1714, %v1712
        %v1716 = vrsqrt.pop %v1690
        %v1717 = vmul.f32 %v1690, %v1716
        %vm1718 = vcmp.eq.f32.partialorder %v1690, inf
        %v1719 = vsel %vm1718, %v1690, %v1717
        %vm1720 = vcmp.eq.f32.partialorder %v1690, 0.0
        %v1721 = vand.u32 %v1690, 2147483648
        %v1722 = vsel %vm1720, %v1721, %v1719
        %v1723 = vrsqrt.pop %v1691
        %v1724 = vmul.f32 %v1691, %v1723
        %vm1725 = vcmp.eq.f32.partialorder %v1691, inf
        %v1726 = vsel %vm1725, %v1691, %v1724
        %vm1727 = vcmp.eq.f32.partialorder %v1691, 0.0
        %v1728 = vand.u32 %v1691, 2147483648
        %v1729 = vsel %vm1727, %v1728, %v1726
        %v1730 = vrsqrt.pop %v1692
        %v1731 = vmul.f32 %v1692, %v1730
        %vm1732 = vcmp.eq.f32.partialorder %v1692, inf
        %v1733 = vsel %vm1732, %v1692, %v1731
        %vm1734 = vcmp.eq.f32.partialorder %v1692, 0.0
        %v1735 = vand.u32 %v1692, 2147483648
        %v1736 = vsel %vm1734, %v1735, %v1733
        %v1737 = vrsqrt.pop %v1693
        %v1738 = vmul.f32 %v1693, %v1737
        %vm1739 = vcmp.eq.f32.partialorder %v1693, inf
        %v1740 = vsel %vm1739, %v1693, %v1738
        %vm1741 = vcmp.eq.f32.partialorder %v1693, 0.0
        %v1742 = vand.u32 %v1693, 2147483648
        %v1743 = vsel %vm1741, %v1742, %v1740
        %v1744 = vrsqrt.pop %v1694
        %v1745 = vmul.f32 %v1694, %v1744
        %vm1746 = vcmp.eq.f32.partialorder %v1694, inf
        %v1747 = vsel %vm1746, %v1694, %v1745
        %vm1748 = vcmp.eq.f32.partialorder %v1694, 0.0
        %v1749 = vand.u32 %v1694, 2147483648
        %v1750 = vsel %vm1748, %v1749, %v1747
        %v1751 = vmul.f32 %v1663, %v1701
        %v1752 = vmul.f32 %v1664, %v1708
        %v1753 = vmul.f32 %v1665, %v1715
        %v1754 = vmul.f32 %v1666, %v1722
        %v1755 = vmul.f32 %v1667, %v1729
        %v1756 = vmul.f32 %v1668, %v1736
        %v1757 = vmul.f32 %v1669, %v1743
        %v1758 = vmul.f32 %v1670, %v1750
        %v1759 = vadd.f32 %v1751, %v1755
        %v1760 = vrot.slane %v1759, 4
        %v1761 = vadd.f32 %v1759, %v1760
        %v1762 = vrot.slane %v1761, 2
        %v1763 = vadd.f32 %v1761, %v1762
        %v1764 = vrot.slane %v1763, 1
        %v1765 = vadd.f32 %v1763, %v1764
        %v1766 = vadd.f32 %v1752, %v1756
        %v1767 = vrot.slane %v1766, 4
        %v1768 = vadd.f32 %v1766, %v1767
        %v1769 = vrot.slane %v1768, 2
        %v1770 = vadd.f32 %v1768, %v1769
        %v1771 = vrot.slane %v1770, 1
        %v1772 = vadd.f32 %v1770, %v1771
        %v1773 = vadd.f32 %v1753, %v1757
        %v1774 = vrot.slane %v1773, 4
        %v1775 = vadd.f32 %v1773, %v1774
        %v1776 = vrot.slane %v1775, 2
        %v1777 = vadd.f32 %v1775, %v1776
        %v1778 = vrot.slane %v1777, 1
        %v1779 = vadd.f32 %v1777, %v1778
        %v1780 = vadd.f32 %v1754, %v1758
        %v1781 = vrot.slane %v1780, 4
        %v1782 = vadd.f32 %v1780, %v1781
        %v1783 = vrot.slane %v1782, 2
        %v1784 = vadd.f32 %v1782, %v1783
        %v1785 = vrot.slane %v1784, 1
        %v1786 = vadd.f32 %v1784, %v1785
        %v1787 = vrcp.pop %v1765
        %v1788 = vrcp.pop %v1772
        %v1789 = vrcp.pop %v1779
        %v1790 = vrcp.pop %v1786
        %v1791 = vmul.f32 %v1751, %v1787
        %v1792 = vmul.f32 %v1752, %v1788
        %v1793 = vmul.f32 %v1753, %v1789
        %v1794 = vmul.f32 %v1754, %v1790
        %v1795 = vmul.f32 %v1755, %v1787
        %v1796 = vmul.f32 %v1756, %v1788
        %v1797 = vmul.f32 %v1757, %v1789
        %v1798 = vmul.f32 %v1758, %v1790
        %v1799 = vadd.f32 %v1671, %v1791
        %v1800 = vadd.f32 %v1672, %v1792
        %v1801 = vadd.f32 %v1673, %v1793
        %v1802 = vadd.f32 %v1674, %v1794
        %v1803 = vadd.f32 %v1675, %v1795
        %v1804 = vadd.f32 %v1676, %v1796
        %v1805 = vadd.f32 %v1677, %v1797
        %v1806 = vadd.f32 %v1678, %v1798
        %v1807 = vsub.f32 1.0, %v1791
        %v1808 = vsub.f32 1.0, %v1792
        %v1809 = vsub.f32 1.0, %v1793
        %v1810 = vsub.f32 1.0, %v1794
        %v1811 = vsub.f32 1.0, %v1795
        %v1812 = vsub.f32 1.0, %v1796
        %v1813 = vsub.f32 1.0, %v1797
        %v1814 = vsub.f32 1.0, %v1798
        %v1815 = vmax.f32 %v1807, 1e-20
        %v1816 = vmax.f32 %v1808, 1e-20
        %v1817 = vmax.f32 %v1809, 1e-20
        %v1818 = vmax.f32 %v1810, 1e-20
        %v1819 = vmax.f32 %v1811, 1e-20
        %v1820 = vmax.f32 %v1812, 1e-20
        %v1821 = vmax.f32 %v1813, 1e-20
        %v1822 = vmax.f32 %v1814, 1e-20
        %v1823 = vrsqrt.pop %v1815
        %v1824 = vmul.f32 %v1815, %v1823
        %vm1825 = vcmp.eq.f32.partialorder %v1815, inf
        %v1826 = vsel %vm1825, %v1815, %v1824
        %vm1827 = vcmp.eq.f32.partialorder %v1815, 0.0
        %v1828 = vand.u32 %v1815, 2147483648
        %v1829 = vsel %vm1827, %v1828, %v1826
        %v1830 = vrsqrt.pop %v1816
        %v1831 = vmul.f32 %v1816, %v1830
        %vm1832 = vcmp.eq.f32.partialorder %v1816, inf
        %v1833 = vsel %vm1832, %v1816, %v1831
        %vm1834 = vcmp.eq.f32.partialorder %v1816, 0.0
        %v1835 = vand.u32 %v1816, 2147483648
        %v1836 = vsel %vm1834, %v1835, %v1833
        %v1837 = vrsqrt.pop %v1817
        %v1838 = vmul.f32 %v1817, %v1837
        %vm1839 = vcmp.eq.f32.partialorder %v1817, inf
        %v1840 = vsel %vm1839, %v1817, %v1838
        %vm1841 = vcmp.eq.f32.partialorder %v1817, 0.0
        %v1842 = vand.u32 %v1817, 2147483648
        %v1843 = vsel %vm1841, %v1842, %v1840
        %v1844 = vrsqrt.pop %v1818
        %v1845 = vmul.f32 %v1818, %v1844
        %vm1846 = vcmp.eq.f32.partialorder %v1818, inf
        %v1847 = vsel %vm1846, %v1818, %v1845
        %vm1848 = vcmp.eq.f32.partialorder %v1818, 0.0
        %v1849 = vand.u32 %v1818, 2147483648
        %v1850 = vsel %vm1848, %v1849, %v1847
        %v1851 = vrsqrt.pop %v1819
        %v1852 = vmul.f32 %v1819, %v1851
        %vm1853 = vcmp.eq.f32.partialorder %v1819, inf
        %v1854 = vsel %vm1853, %v1819, %v1852
        %vm1855 = vcmp.eq.f32.partialorder %v1819, 0.0
        %v1856 = vand.u32 %v1819, 2147483648
        %v1857 = vsel %vm1855, %v1856, %v1854
        %v1858 = vrsqrt.pop %v1820
        %v1859 = vmul.f32 %v1820, %v1858
        %vm1860 = vcmp.eq.f32.partialorder %v1820, inf
        %v1861 = vsel %vm1860, %v1820, %v1859
        %vm1862 = vcmp.eq.f32.partialorder %v1820, 0.0
        %v1863 = vand.u32 %v1820, 2147483648
        %v1864 = vsel %vm1862, %v1863, %v1861
        %v1865 = vrsqrt.pop %v1821
        %v1866 = vmul.f32 %v1821, %v1865
        %vm1867 = vcmp.eq.f32.partialorder %v1821, inf
        %v1868 = vsel %vm1867, %v1821, %v1866
        %vm1869 = vcmp.eq.f32.partialorder %v1821, 0.0
        %v1870 = vand.u32 %v1821, 2147483648
        %v1871 = vsel %vm1869, %v1870, %v1868
        %v1872 = vrsqrt.pop %v1822
        %v1873 = vmul.f32 %v1822, %v1872
        %vm1874 = vcmp.eq.f32.partialorder %v1822, inf
        %v1875 = vsel %vm1874, %v1822, %v1873
        %vm1876 = vcmp.eq.f32.partialorder %v1822, 0.0
        %v1877 = vand.u32 %v1822, 2147483648
        %v1878 = vsel %vm1876, %v1877, %v1875
        %v1879 = vmul.f32 %v1791, %v1829
        %v1880 = vmul.f32 %v1792, %v1836
        %v1881 = vmul.f32 %v1793, %v1843
        %v1882 = vmul.f32 %v1794, %v1850
        %v1883 = vmul.f32 %v1795, %v1857
        %v1884 = vmul.f32 %v1796, %v1864
        %v1885 = vmul.f32 %v1797, %v1871
        %v1886 = vmul.f32 %v1798, %v1878
        %v1887 = vadd.f32 %v1879, %v1883
        %v1888 = vrot.slane %v1887, 4
        %v1889 = vadd.f32 %v1887, %v1888
        %v1890 = vrot.slane %v1889, 2
        %v1891 = vadd.f32 %v1889, %v1890
        %v1892 = vrot.slane %v1891, 1
        %v1893 = vadd.f32 %v1891, %v1892
        %v1894 = vadd.f32 %v1880, %v1884
        %v1895 = vrot.slane %v1894, 4
        %v1896 = vadd.f32 %v1894, %v1895
        %v1897 = vrot.slane %v1896, 2
        %v1898 = vadd.f32 %v1896, %v1897
        %v1899 = vrot.slane %v1898, 1
        %v1900 = vadd.f32 %v1898, %v1899
        %v1901 = vadd.f32 %v1881, %v1885
        %v1902 = vrot.slane %v1901, 4
        %v1903 = vadd.f32 %v1901, %v1902
        %v1904 = vrot.slane %v1903, 2
        %v1905 = vadd.f32 %v1903, %v1904
        %v1906 = vrot.slane %v1905, 1
        %v1907 = vadd.f32 %v1905, %v1906
        %v1908 = vadd.f32 %v1882, %v1886
        %v1909 = vrot.slane %v1908, 4
        %v1910 = vadd.f32 %v1908, %v1909
        %v1911 = vrot.slane %v1910, 2
        %v1912 = vadd.f32 %v1910, %v1911
        %v1913 = vrot.slane %v1912, 1
        %v1914 = vadd.f32 %v1912, %v1913
        %v1915 = vrcp.pop %v1893
        %v1916 = vrcp.pop %v1900
        %v1917 = vrcp.pop %v1907
        %v1918 = vrcp.pop %v1914
        %v1919 = vmul.f32 %v1879, %v1915
        %v1920 = vmul.f32 %v1880, %v1916
        %v1921 = vmul.f32 %v1881, %v1917
        %v1922 = vmul.f32 %v1882, %v1918
        %v1923 = vmul.f32 %v1883, %v1915
        %v1924 = vmul.f32 %v1884, %v1916
        %v1925 = vmul.f32 %v1885, %v1917
        %v1926 = vmul.f32 %v1886, %v1918
        %v1927 = vadd.f32 %v1799, %v1919
        %v1928 = vadd.f32 %v1800, %v1920
        %v1929 = vadd.f32 %v1801, %v1921
        %v1930 = vadd.f32 %v1802, %v1922
        %v1931 = vadd.f32 %v1803, %v1923
        %v1932 = vadd.f32 %v1804, %v1924
        %v1933 = vadd.f32 %v1805, %v1925
        %v1934 = vadd.f32 %v1806, %v1926
        %v1935 = vsub.f32 1.0, %v1919
        %v1936 = vsub.f32 1.0, %v1920
        %v1937 = vsub.f32 1.0, %v1921
        %v1938 = vsub.f32 1.0, %v1922
        %v1939 = vsub.f32 1.0, %v1923
        %v1940 = vsub.f32 1.0, %v1924
        %v1941 = vsub.f32 1.0, %v1925
        %v1942 = vsub.f32 1.0, %v1926
        %v1943 = vmax.f32 %v1935, 1e-20
        %v1944 = vmax.f32 %v1936, 1e-20
        %v1945 = vmax.f32 %v1937, 1e-20
        %v1946 = vmax.f32 %v1938, 1e-20
        %v1947 = vmax.f32 %v1939, 1e-20
        %v1948 = vmax.f32 %v1940, 1e-20
        %v1949 = vmax.f32 %v1941, 1e-20
        %v1950 = vmax.f32 %v1942, 1e-20
        %v1951 = vrsqrt.pop %v1943
        %v1952 = vmul.f32 %v1943, %v1951
        %vm1953 = vcmp.eq.f32.partialorder %v1943, inf
        %v1954 = vsel %vm1953, %v1943, %v1952
        %vm1955 = vcmp.eq.f32.partialorder %v1943, 0.0
        %v1956 = vand.u32 %v1943, 2147483648
        %v1957 = vsel %vm1955, %v1956, %v1954
        %v1958 = vrsqrt.pop %v1944
        %v1959 = vmul.f32 %v1944, %v1958
        %vm1960 = vcmp.eq.f32.partialorder %v1944, inf
        %v1961 = vsel %vm1960, %v1944, %v1959
        %vm1962 = vcmp.eq.f32.partialorder %v1944, 0.0
        %v1963 = vand.u32 %v1944, 2147483648
        %v1964 = vsel %vm1962, %v1963, %v1961
        %v1965 = vrsqrt.pop %v1945
        %v1966 = vmul.f32 %v1945, %v1965
        %vm1967 = vcmp.eq.f32.partialorder %v1945, inf
        %v1968 = vsel %vm1967, %v1945, %v1966
        %vm1969 = vcmp.eq.f32.partialorder %v1945, 0.0
        %v1970 = vand.u32 %v1945, 2147483648
        %v1971 = vsel %vm1969, %v1970, %v1968
        %v1972 = vrsqrt.pop %v1946
        %v1973 = vmul.f32 %v1946, %v1972
        %vm1974 = vcmp.eq.f32.partialorder %v1946, inf
        %v1975 = vsel %vm1974, %v1946, %v1973
        %vm1976 = vcmp.eq.f32.partialorder %v1946, 0.0
        %v1977 = vand.u32 %v1946, 2147483648
        %v1978 = vsel %vm1976, %v1977, %v1975
        %v1979 = vrsqrt.pop %v1947
        %v1980 = vmul.f32 %v1947, %v1979
        %vm1981 = vcmp.eq.f32.partialorder %v1947, inf
        %v1982 = vsel %vm1981, %v1947, %v1980
        %vm1983 = vcmp.eq.f32.partialorder %v1947, 0.0
        %v1984 = vand.u32 %v1947, 2147483648
        %v1985 = vsel %vm1983, %v1984, %v1982
        %v1986 = vrsqrt.pop %v1948
        %v1987 = vmul.f32 %v1948, %v1986
        %vm1988 = vcmp.eq.f32.partialorder %v1948, inf
        %v1989 = vsel %vm1988, %v1948, %v1987
        %vm1990 = vcmp.eq.f32.partialorder %v1948, 0.0
        %v1991 = vand.u32 %v1948, 2147483648
        %v1992 = vsel %vm1990, %v1991, %v1989
        %v1993 = vrsqrt.pop %v1949
        %v1994 = vmul.f32 %v1949, %v1993
        %vm1995 = vcmp.eq.f32.partialorder %v1949, inf
        %v1996 = vsel %vm1995, %v1949, %v1994
        %vm1997 = vcmp.eq.f32.partialorder %v1949, 0.0
        %v1998 = vand.u32 %v1949, 2147483648
        %v1999 = vsel %vm1997, %v1998, %v1996
        %v2000 = vrsqrt.pop %v1950
        %v2001 = vmul.f32 %v1950, %v2000
        %vm2002 = vcmp.eq.f32.partialorder %v1950, inf
        %v2003 = vsel %vm2002, %v1950, %v2001
        %vm2004 = vcmp.eq.f32.partialorder %v1950, 0.0
        %v2005 = vand.u32 %v1950, 2147483648
        %v2006 = vsel %vm2004, %v2005, %v2003
        %v2007 = vmul.f32 %v1919, %v1957
        %v2008 = vmul.f32 %v1920, %v1964
        %v2009 = vmul.f32 %v1921, %v1971
        %v2010 = vmul.f32 %v1922, %v1978
        %v2011 = vmul.f32 %v1923, %v1985
        %v2012 = vmul.f32 %v1924, %v1992
        %v2013 = vmul.f32 %v1925, %v1999
        %v2014 = vmul.f32 %v1926, %v2006
        %v2015 = vadd.f32 %v2007, %v2011
        %v2016 = vrot.slane %v2015, 4
        %v2017 = vadd.f32 %v2015, %v2016
        %v2018 = vrot.slane %v2017, 2
        %v2019 = vadd.f32 %v2017, %v2018
        %v2020 = vrot.slane %v2019, 1
        %v2021 = vadd.f32 %v2019, %v2020
        %v2022 = vadd.f32 %v2008, %v2012
        %v2023 = vrot.slane %v2022, 4
        %v2024 = vadd.f32 %v2022, %v2023
        %v2025 = vrot.slane %v2024, 2
        %v2026 = vadd.f32 %v2024, %v2025
        %v2027 = vrot.slane %v2026, 1
        %v2028 = vadd.f32 %v2026, %v2027
        %v2029 = vadd.f32 %v2009, %v2013
        %v2030 = vrot.slane %v2029, 4
        %v2031 = vadd.f32 %v2029, %v2030
        %v2032 = vrot.slane %v2031, 2
        %v2033 = vadd.f32 %v2031, %v2032
        %v2034 = vrot.slane %v2033, 1
        %v2035 = vadd.f32 %v2033, %v2034
        %v2036 = vadd.f32 %v2010, %v2014
        %v2037 = vrot.slane %v2036, 4
        %v2038 = vadd.f32 %v2036, %v2037
        %v2039 = vrot.slane %v2038, 2
        %v2040 = vadd.f32 %v2038, %v2039
        %v2041 = vrot.slane %v2040, 1
        %v2042 = vadd.f32 %v2040, %v2041
        %v2043 = vrcp.pop %v2021
        %v2044 = vrcp.pop %v2028
        %v2045 = vrcp.pop %v2035
        %v2046 = vrcp.pop %v2042
        %v2047 = vmul.f32 %v2007, %v2043
        %v2048 = vmul.f32 %v2008, %v2044
        %v2049 = vmul.f32 %v2009, %v2045
        %v2050 = vmul.f32 %v2010, %v2046
        %v2051 = vmul.f32 %v2011, %v2043
        %v2052 = vmul.f32 %v2012, %v2044
        %v2053 = vmul.f32 %v2013, %v2045
        %v2054 = vmul.f32 %v2014, %v2046
        %v2055 = vadd.f32 %v1927, %v2047
        %v2056 = vadd.f32 %v1928, %v2048
        %v2057 = vadd.f32 %v1929, %v2049
        %v2058 = vadd.f32 %v1930, %v2050
        %v2059 = vadd.f32 %v1931, %v2051
        %v2060 = vadd.f32 %v1932, %v2052
        %v2061 = vadd.f32 %v1933, %v2053
        %v2062 = vadd.f32 %v1934, %v2054
        %v2063 = vsub.f32 1.0, %v2047
        %v2064 = vsub.f32 1.0, %v2048
        %v2065 = vsub.f32 1.0, %v2049
        %v2066 = vsub.f32 1.0, %v2050
        %v2067 = vsub.f32 1.0, %v2051
        %v2068 = vsub.f32 1.0, %v2052
        %v2069 = vsub.f32 1.0, %v2053
        %v2070 = vsub.f32 1.0, %v2054
        %v2071 = vmax.f32 %v2063, 1e-20
        %v2072 = vmax.f32 %v2064, 1e-20
        %v2073 = vmax.f32 %v2065, 1e-20
        %v2074 = vmax.f32 %v2066, 1e-20
        %v2075 = vmax.f32 %v2067, 1e-20
        %v2076 = vmax.f32 %v2068, 1e-20
        %v2077 = vmax.f32 %v2069, 1e-20
        %v2078 = vmax.f32 %v2070, 1e-20
        %v2079 = vrsqrt.pop %v2071
        %v2080 = vmul.f32 %v2071, %v2079
        %vm2081 = vcmp.eq.f32.partialorder %v2071, inf
        %v2082 = vsel %vm2081, %v2071, %v2080
        %vm2083 = vcmp.eq.f32.partialorder %v2071, 0.0
        %v2084 = vand.u32 %v2071, 2147483648
        %v2085 = vsel %vm2083, %v2084, %v2082
        %v2086 = vrsqrt.pop %v2072
        %v2087 = vmul.f32 %v2072, %v2086
        %vm2088 = vcmp.eq.f32.partialorder %v2072, inf
        %v2089 = vsel %vm2088, %v2072, %v2087
        %vm2090 = vcmp.eq.f32.partialorder %v2072, 0.0
        %v2091 = vand.u32 %v2072, 2147483648
        %v2092 = vsel %vm2090, %v2091, %v2089
        %v2093 = vrsqrt.pop %v2073
        %v2094 = vmul.f32 %v2073, %v2093
        %vm2095 = vcmp.eq.f32.partialorder %v2073, inf
        %v2096 = vsel %vm2095, %v2073, %v2094
        %vm2097 = vcmp.eq.f32.partialorder %v2073, 0.0
        %v2098 = vand.u32 %v2073, 2147483648
        %v2099 = vsel %vm2097, %v2098, %v2096
        %v2100 = vrsqrt.pop %v2074
        %v2101 = vmul.f32 %v2074, %v2100
        %vm2102 = vcmp.eq.f32.partialorder %v2074, inf
        %v2103 = vsel %vm2102, %v2074, %v2101
        %vm2104 = vcmp.eq.f32.partialorder %v2074, 0.0
        %v2105 = vand.u32 %v2074, 2147483648
        %v2106 = vsel %vm2104, %v2105, %v2103
        %v2107 = vrsqrt.pop %v2075
        %v2108 = vmul.f32 %v2075, %v2107
        %vm2109 = vcmp.eq.f32.partialorder %v2075, inf
        %v2110 = vsel %vm2109, %v2075, %v2108
        %vm2111 = vcmp.eq.f32.partialorder %v2075, 0.0
        %v2112 = vand.u32 %v2075, 2147483648
        %v2113 = vsel %vm2111, %v2112, %v2110
        %v2114 = vrsqrt.pop %v2076
        %v2115 = vmul.f32 %v2076, %v2114
        %vm2116 = vcmp.eq.f32.partialorder %v2076, inf
        %v2117 = vsel %vm2116, %v2076, %v2115
        %vm2118 = vcmp.eq.f32.partialorder %v2076, 0.0
        %v2119 = vand.u32 %v2076, 2147483648
        %v2120 = vsel %vm2118, %v2119, %v2117
        %v2121 = vrsqrt.pop %v2077
        %v2122 = vmul.f32 %v2077, %v2121
        %vm2123 = vcmp.eq.f32.partialorder %v2077, inf
        %v2124 = vsel %vm2123, %v2077, %v2122
        %vm2125 = vcmp.eq.f32.partialorder %v2077, 0.0
        %v2126 = vand.u32 %v2077, 2147483648
        %v2127 = vsel %vm2125, %v2126, %v2124
        %v2128 = vrsqrt.pop %v2078
        %v2129 = vmul.f32 %v2078, %v2128
        %vm2130 = vcmp.eq.f32.partialorder %v2078, inf
        %v2131 = vsel %vm2130, %v2078, %v2129
        %vm2132 = vcmp.eq.f32.partialorder %v2078, 0.0
        %v2133 = vand.u32 %v2078, 2147483648
        %v2134 = vsel %vm2132, %v2133, %v2131
        %v2135 = vmul.f32 %v2047, %v2085
        %v2136 = vmul.f32 %v2048, %v2092
        %v2137 = vmul.f32 %v2049, %v2099
        %v2138 = vmul.f32 %v2050, %v2106
        %v2139 = vmul.f32 %v2051, %v2113
        %v2140 = vmul.f32 %v2052, %v2120
        %v2141 = vmul.f32 %v2053, %v2127
        %v2142 = vmul.f32 %v2054, %v2134
        %v2143 = vadd.f32 %v2135, %v2139
        %v2144 = vrot.slane %v2143, 4
        %v2145 = vadd.f32 %v2143, %v2144
        %v2146 = vrot.slane %v2145, 2
        %v2147 = vadd.f32 %v2145, %v2146
        %v2148 = vrot.slane %v2147, 1
        %v2149 = vadd.f32 %v2147, %v2148
        %v2150 = vadd.f32 %v2136, %v2140
        %v2151 = vrot.slane %v2150, 4
        %v2152 = vadd.f32 %v2150, %v2151
        %v2153 = vrot.slane %v2152, 2
        %v2154 = vadd.f32 %v2152, %v2153
        %v2155 = vrot.slane %v2154, 1
        %v2156 = vadd.f32 %v2154, %v2155
        %v2157 = vadd.f32 %v2137, %v2141
        %v2158 = vrot.slane %v2157, 4
        %v2159 = vadd.f32 %v2157, %v2158
        %v2160 = vrot.slane %v2159, 2
        %v2161 = vadd.f32 %v2159, %v2160
        %v2162 = vrot.slane %v2161, 1
        %v2163 = vadd.f32 %v2161, %v2162
        %v2164 = vadd.f32 %v2138, %v2142
        %v2165 = vrot.slane %v2164, 4
        %v2166 = vadd.f32 %v2164, %v2165
        %v2167 = vrot.slane %v2166, 2
        %v2168 = vadd.f32 %v2166, %v2167
        %v2169 = vrot.slane %v2168, 1
        %v2170 = vadd.f32 %v2168, %v2169
        %v2171 = vrcp.pop %v2149
        %v2172 = vrcp.pop %v2156
        %v2173 = vrcp.pop %v2163
        %v2174 = vrcp.pop %v2170
        %v2175 = vmul.f32 %v2135, %v2171
        %v2176 = vmul.f32 %v2136, %v2172
        %v2177 = vmul.f32 %v2137, %v2173
        %v2178 = vmul.f32 %v2138, %v2174
        %v2179 = vmul.f32 %v2139, %v2171
        %v2180 = vmul.f32 %v2140, %v2172
        %v2181 = vmul.f32 %v2141, %v2173
        %v2182 = vmul.f32 %v2142, %v2174
        %v2183 = vadd.f32 %v2055, %v2175
        %v2184 = vadd.f32 %v2056, %v2176
        %v2185 = vadd.f32 %v2057, %v2177
        %v2186 = vadd.f32 %v2058, %v2178
        %v2187 = vadd.f32 %v2059, %v2179
        %v2188 = vadd.f32 %v2060, %v2180
        %v2189 = vadd.f32 %v2061, %v2181
        %v2190 = vadd.f32 %v2062, %v2182
        %v2191 = vsub.f32 1.0, %v2175
        %v2192 = vsub.f32 1.0, %v2176
        %v2193 = vsub.f32 1.0, %v2177
        %v2194 = vsub.f32 1.0, %v2178
        %v2195 = vsub.f32 1.0, %v2179
        %v2196 = vsub.f32 1.0, %v2180
        %v2197 = vsub.f32 1.0, %v2181
        %v2198 = vsub.f32 1.0, %v2182
        %v2199 = vmax.f32 %v2191, 1e-20
        %v2200 = vmax.f32 %v2192, 1e-20
        %v2201 = vmax.f32 %v2193, 1e-20
        %v2202 = vmax.f32 %v2194, 1e-20
        %v2203 = vmax.f32 %v2195, 1e-20
        %v2204 = vmax.f32 %v2196, 1e-20
        %v2205 = vmax.f32 %v2197, 1e-20
        %v2206 = vmax.f32 %v2198, 1e-20
        %v2207 = vrsqrt.pop %v2199
        %v2208 = vmul.f32 %v2199, %v2207
        %vm2209 = vcmp.eq.f32.partialorder %v2199, inf
        %v2210 = vsel %vm2209, %v2199, %v2208
        %vm2211 = vcmp.eq.f32.partialorder %v2199, 0.0
        %v2212 = vand.u32 %v2199, 2147483648
        %v2213 = vsel %vm2211, %v2212, %v2210
        %v2214 = vrsqrt.pop %v2200
        %v2215 = vmul.f32 %v2200, %v2214
        %vm2216 = vcmp.eq.f32.partialorder %v2200, inf
        %v2217 = vsel %vm2216, %v2200, %v2215
        %vm2218 = vcmp.eq.f32.partialorder %v2200, 0.0
        %v2219 = vand.u32 %v2200, 2147483648
        %v2220 = vsel %vm2218, %v2219, %v2217
        %v2221 = vrsqrt.pop %v2201
        %v2222 = vmul.f32 %v2201, %v2221
        %vm2223 = vcmp.eq.f32.partialorder %v2201, inf
        %v2224 = vsel %vm2223, %v2201, %v2222
        %vm2225 = vcmp.eq.f32.partialorder %v2201, 0.0
        %v2226 = vand.u32 %v2201, 2147483648
        %v2227 = vsel %vm2225, %v2226, %v2224
        %v2228 = vrsqrt.pop %v2202
        %v2229 = vmul.f32 %v2202, %v2228
        %vm2230 = vcmp.eq.f32.partialorder %v2202, inf
        %v2231 = vsel %vm2230, %v2202, %v2229
        %vm2232 = vcmp.eq.f32.partialorder %v2202, 0.0
        %v2233 = vand.u32 %v2202, 2147483648
        %v2234 = vsel %vm2232, %v2233, %v2231
        %v2235 = vrsqrt.pop %v2203
        %v2236 = vmul.f32 %v2203, %v2235
        %vm2237 = vcmp.eq.f32.partialorder %v2203, inf
        %v2238 = vsel %vm2237, %v2203, %v2236
        %vm2239 = vcmp.eq.f32.partialorder %v2203, 0.0
        %v2240 = vand.u32 %v2203, 2147483648
        %v2241 = vsel %vm2239, %v2240, %v2238
        %v2242 = vrsqrt.pop %v2204
        %v2243 = vmul.f32 %v2204, %v2242
        %vm2244 = vcmp.eq.f32.partialorder %v2204, inf
        %v2245 = vsel %vm2244, %v2204, %v2243
        %vm2246 = vcmp.eq.f32.partialorder %v2204, 0.0
        %v2247 = vand.u32 %v2204, 2147483648
        %v2248 = vsel %vm2246, %v2247, %v2245
        %v2249 = vrsqrt.pop %v2205
        %v2250 = vmul.f32 %v2205, %v2249
        %vm2251 = vcmp.eq.f32.partialorder %v2205, inf
        %v2252 = vsel %vm2251, %v2205, %v2250
        %vm2253 = vcmp.eq.f32.partialorder %v2205, 0.0
        %v2254 = vand.u32 %v2205, 2147483648
        %v2255 = vsel %vm2253, %v2254, %v2252
        %v2256 = vrsqrt.pop %v2206
        %v2257 = vmul.f32 %v2206, %v2256
        %vm2258 = vcmp.eq.f32.partialorder %v2206, inf
        %v2259 = vsel %vm2258, %v2206, %v2257
        %vm2260 = vcmp.eq.f32.partialorder %v2206, 0.0
        %v2261 = vand.u32 %v2206, 2147483648
        %v2262 = vsel %vm2260, %v2261, %v2259
        %v2263 = vmul.f32 %v2175, %v2213
        %v2264 = vmul.f32 %v2176, %v2220
        %v2265 = vmul.f32 %v2177, %v2227
        %v2266 = vmul.f32 %v2178, %v2234
        %v2267 = vmul.f32 %v2179, %v2241
        %v2268 = vmul.f32 %v2180, %v2248
        %v2269 = vmul.f32 %v2181, %v2255
        %v2270 = vmul.f32 %v2182, %v2262
        %v2271 = vadd.f32 %v2263, %v2267
        %v2272 = vrot.slane %v2271, 4
        %v2273 = vadd.f32 %v2271, %v2272
        %v2274 = vrot.slane %v2273, 2
        %v2275 = vadd.f32 %v2273, %v2274
        %v2276 = vrot.slane %v2275, 1
        %v2277 = vadd.f32 %v2275, %v2276
        %v2278 = vadd.f32 %v2264, %v2268
        %v2279 = vrot.slane %v2278, 4
        %v2280 = vadd.f32 %v2278, %v2279
        %v2281 = vrot.slane %v2280, 2
        %v2282 = vadd.f32 %v2280, %v2281
        %v2283 = vrot.slane %v2282, 1
        %v2284 = vadd.f32 %v2282, %v2283
        %v2285 = vadd.f32 %v2265, %v2269
        %v2286 = vrot.slane %v2285, 4
        %v2287 = vadd.f32 %v2285, %v2286
        %v2288 = vrot.slane %v2287, 2
        %v2289 = vadd.f32 %v2287, %v2288
        %v2290 = vrot.slane %v2289, 1
        %v2291 = vadd.f32 %v2289, %v2290
        %v2292 = vadd.f32 %v2266, %v2270
        %v2293 = vrot.slane %v2292, 4
        %v2294 = vadd.f32 %v2292, %v2293
        %v2295 = vrot.slane %v2294, 2
        %v2296 = vadd.f32 %v2294, %v2295
        %v2297 = vrot.slane %v2296, 1
        %v2298 = vadd.f32 %v2296, %v2297
        %v2299 = vrcp.pop %v2277
        %v2300 = vrcp.pop %v2284
        %v2301 = vrcp.pop %v2291
        %v2302 = vrcp.pop %v2298
        %v2303 = vmul.f32 %v2263, %v2299
        %v2304 = vmul.f32 %v2264, %v2300
        %v2305 = vmul.f32 %v2265, %v2301
        %v2306 = vmul.f32 %v2266, %v2302
        %v2307 = vmul.f32 %v2267, %v2299
        %v2308 = vmul.f32 %v2268, %v2300
        %v2309 = vmul.f32 %v2269, %v2301
        %v2310 = vmul.f32 %v2270, %v2302
        %v2311 = vadd.f32 %v2183, %v2303
        %v2312 = vadd.f32 %v2184, %v2304
        %v2313 = vadd.f32 %v2185, %v2305
        %v2314 = vadd.f32 %v2186, %v2306
        %v2315 = vadd.f32 %v2187, %v2307
        %v2316 = vadd.f32 %v2188, %v2308
        %v2317 = vadd.f32 %v2189, %v2309
        %v2318 = vadd.f32 %v2190, %v2310
        %v2319 = vsub.f32 1.0, %v2303
        %v2320 = vsub.f32 1.0, %v2304
        %v2321 = vsub.f32 1.0, %v2305
        %v2322 = vsub.f32 1.0, %v2306
        %v2323 = vsub.f32 1.0, %v2307
        %v2324 = vsub.f32 1.0, %v2308
        %v2325 = vsub.f32 1.0, %v2309
        %v2326 = vsub.f32 1.0, %v2310
        %v2327 = vmax.f32 %v2319, 1e-20
        %v2328 = vmax.f32 %v2320, 1e-20
        %v2329 = vmax.f32 %v2321, 1e-20
        %v2330 = vmax.f32 %v2322, 1e-20
        %v2331 = vmax.f32 %v2323, 1e-20
        %v2332 = vmax.f32 %v2324, 1e-20
        %v2333 = vmax.f32 %v2325, 1e-20
        %v2334 = vmax.f32 %v2326, 1e-20
        %v2335 = vrsqrt.pop %v2327
        %v2336 = vmul.f32 %v2327, %v2335
        %vm2337 = vcmp.eq.f32.partialorder %v2327, inf
        %v2338 = vsel %vm2337, %v2327, %v2336
        %vm2339 = vcmp.eq.f32.partialorder %v2327, 0.0
        %v2340 = vand.u32 %v2327, 2147483648
        %v2341 = vsel %vm2339, %v2340, %v2338
        %v2342 = vrsqrt.pop %v2328
        %v2343 = vmul.f32 %v2328, %v2342
        %vm2344 = vcmp.eq.f32.partialorder %v2328, inf
        %v2345 = vsel %vm2344, %v2328, %v2343
        %vm2346 = vcmp.eq.f32.partialorder %v2328, 0.0
        %v2347 = vand.u32 %v2328, 2147483648
        %v2348 = vsel %vm2346, %v2347, %v2345
        %v2349 = vrsqrt.pop %v2329
        %v2350 = vmul.f32 %v2329, %v2349
        %vm2351 = vcmp.eq.f32.partialorder %v2329, inf
        %v2352 = vsel %vm2351, %v2329, %v2350
        %vm2353 = vcmp.eq.f32.partialorder %v2329, 0.0
        %v2354 = vand.u32 %v2329, 2147483648
        %v2355 = vsel %vm2353, %v2354, %v2352
        %v2356 = vrsqrt.pop %v2330
        %v2357 = vmul.f32 %v2330, %v2356
        %vm2358 = vcmp.eq.f32.partialorder %v2330, inf
        %v2359 = vsel %vm2358, %v2330, %v2357
        %vm2360 = vcmp.eq.f32.partialorder %v2330, 0.0
        %v2361 = vand.u32 %v2330, 2147483648
        %v2362 = vsel %vm2360, %v2361, %v2359
        %v2363 = vrsqrt.pop %v2331
        %v2364 = vmul.f32 %v2331, %v2363
        %vm2365 = vcmp.eq.f32.partialorder %v2331, inf
        %v2366 = vsel %vm2365, %v2331, %v2364
        %vm2367 = vcmp.eq.f32.partialorder %v2331, 0.0
        %v2368 = vand.u32 %v2331, 2147483648
        %v2369 = vsel %vm2367, %v2368, %v2366
        %v2370 = vrsqrt.pop %v2332
        %v2371 = vmul.f32 %v2332, %v2370
        %vm2372 = vcmp.eq.f32.partialorder %v2332, inf
        %v2373 = vsel %vm2372, %v2332, %v2371
        %vm2374 = vcmp.eq.f32.partialorder %v2332, 0.0
        %v2375 = vand.u32 %v2332, 2147483648
        %v2376 = vsel %vm2374, %v2375, %v2373
        %v2377 = vrsqrt.pop %v2333
        %v2378 = vmul.f32 %v2333, %v2377
        %vm2379 = vcmp.eq.f32.partialorder %v2333, inf
        %v2380 = vsel %vm2379, %v2333, %v2378
        %vm2381 = vcmp.eq.f32.partialorder %v2333, 0.0
        %v2382 = vand.u32 %v2333, 2147483648
        %v2383 = vsel %vm2381, %v2382, %v2380
        %v2384 = vrsqrt.pop %v2334
        %v2385 = vmul.f32 %v2334, %v2384
        %vm2386 = vcmp.eq.f32.partialorder %v2334, inf
        %v2387 = vsel %vm2386, %v2334, %v2385
        %vm2388 = vcmp.eq.f32.partialorder %v2334, 0.0
        %v2389 = vand.u32 %v2334, 2147483648
        %v2390 = vsel %vm2388, %v2389, %v2387
        %v2391 = vmul.f32 %v2303, %v2341
        %v2392 = vmul.f32 %v2304, %v2348
        %v2393 = vmul.f32 %v2305, %v2355
        %v2394 = vmul.f32 %v2306, %v2362
        %v2395 = vmul.f32 %v2307, %v2369
        %v2396 = vmul.f32 %v2308, %v2376
        %v2397 = vmul.f32 %v2309, %v2383
        %v2398 = vmul.f32 %v2310, %v2390
        %v2399 = vadd.f32 %v2391, %v2395
        %v2400 = vrot.slane %v2399, 4
        %v2401 = vadd.f32 %v2399, %v2400
        %v2402 = vrot.slane %v2401, 2
        %v2403 = vadd.f32 %v2401, %v2402
        %v2404 = vrot.slane %v2403, 1
        %v2405 = vadd.f32 %v2403, %v2404
        %v2406 = vadd.f32 %v2392, %v2396
        %v2407 = vrot.slane %v2406, 4
        %v2408 = vadd.f32 %v2406, %v2407
        %v2409 = vrot.slane %v2408, 2
        %v2410 = vadd.f32 %v2408, %v2409
        %v2411 = vrot.slane %v2410, 1
        %v2412 = vadd.f32 %v2410, %v2411
        %v2413 = vadd.f32 %v2393, %v2397
        %v2414 = vrot.slane %v2413, 4
        %v2415 = vadd.f32 %v2413, %v2414
        %v2416 = vrot.slane %v2415, 2
        %v2417 = vadd.f32 %v2415, %v2416
        %v2418 = vrot.slane %v2417, 1
        %v2419 = vadd.f32 %v2417, %v2418
        %v2420 = vadd.f32 %v2394, %v2398
        %v2421 = vrot.slane %v2420, 4
        %v2422 = vadd.f32 %v2420, %v2421
        %v2423 = vrot.slane %v2422, 2
        %v2424 = vadd.f32 %v2422, %v2423
        %v2425 = vrot.slane %v2424, 1
        %v2426 = vadd.f32 %v2424, %v2425
        %v2427 = vrcp.pop %v2405
        %v2428 = vrcp.pop %v2412
        %v2429 = vrcp.pop %v2419
        %v2430 = vrcp.pop %v2426
        %v2431 = vmul.f32 %v2391, %v2427
        %v2432 = vmul.f32 %v2392, %v2428
        %v2433 = vmul.f32 %v2393, %v2429
        %v2434 = vmul.f32 %v2394, %v2430
        %v2435 = vmul.f32 %v2395, %v2427
        %v2436 = vmul.f32 %v2396, %v2428
        %v2437 = vmul.f32 %v2397, %v2429
        %v2438 = vmul.f32 %v2398, %v2430
        %v2439 = vadd.f32 %v2311, %v2431
        %v2440 = vadd.f32 %v2312, %v2432
        %v2441 = vadd.f32 %v2313, %v2433
        %v2442 = vadd.f32 %v2314, %v2434
        %v2443 = vadd.f32 %v2315, %v2435
        %v2444 = vadd.f32 %v2316, %v2436
        %v2445 = vadd.f32 %v2317, %v2437
        %v2446 = vadd.f32 %v2318, %v2438
        %v2447 = vsub.f32 1.0, %v2431
        %v2448 = vsub.f32 1.0, %v2432
        %v2449 = vsub.f32 1.0, %v2433
        %v2450 = vsub.f32 1.0, %v2434
        %v2451 = vsub.f32 1.0, %v2435
        %v2452 = vsub.f32 1.0, %v2436
        %v2453 = vsub.f32 1.0, %v2437
        %v2454 = vsub.f32 1.0, %v2438
        %v2455 = vmax.f32 %v2447, 1e-20
        %v2456 = vmax.f32 %v2448, 1e-20
        %v2457 = vmax.f32 %v2449, 1e-20
        %v2458 = vmax.f32 %v2450, 1e-20
        %v2459 = vmax.f32 %v2451, 1e-20
        %v2460 = vmax.f32 %v2452, 1e-20
        %v2461 = vmax.f32 %v2453, 1e-20
        %v2462 = vmax.f32 %v2454, 1e-20
        %v2463 = vrsqrt.pop %v2455
        %v2464 = vmul.f32 %v2455, %v2463
        %vm2465 = vcmp.eq.f32.partialorder %v2455, inf
        %v2466 = vsel %vm2465, %v2455, %v2464
        %vm2467 = vcmp.eq.f32.partialorder %v2455, 0.0
        %v2468 = vand.u32 %v2455, 2147483648
        %v2469 = vsel %vm2467, %v2468, %v2466
        %v2470 = vrsqrt.pop %v2456
        %v2471 = vmul.f32 %v2456, %v2470
        %vm2472 = vcmp.eq.f32.partialorder %v2456, inf
        %v2473 = vsel %vm2472, %v2456, %v2471
        %vm2474 = vcmp.eq.f32.partialorder %v2456, 0.0
        %v2475 = vand.u32 %v2456, 2147483648
        %v2476 = vsel %vm2474, %v2475, %v2473
        %v2477 = vrsqrt.pop %v2457
        %v2478 = vmul.f32 %v2457, %v2477
        %vm2479 = vcmp.eq.f32.partialorder %v2457, inf
        %v2480 = vsel %vm2479, %v2457, %v2478
        %vm2481 = vcmp.eq.f32.partialorder %v2457, 0.0
        %v2482 = vand.u32 %v2457, 2147483648
        %v2483 = vsel %vm2481, %v2482, %v2480
        %v2484 = vrsqrt.pop %v2458
        %v2485 = vmul.f32 %v2458, %v2484
        %vm2486 = vcmp.eq.f32.partialorder %v2458, inf
        %v2487 = vsel %vm2486, %v2458, %v2485
        %vm2488 = vcmp.eq.f32.partialorder %v2458, 0.0
        %v2489 = vand.u32 %v2458, 2147483648
        %v2490 = vsel %vm2488, %v2489, %v2487
        %v2491 = vrsqrt.pop %v2459
        %v2492 = vmul.f32 %v2459, %v2491
        %vm2493 = vcmp.eq.f32.partialorder %v2459, inf
        %v2494 = vsel %vm2493, %v2459, %v2492
        %vm2495 = vcmp.eq.f32.partialorder %v2459, 0.0
        %v2496 = vand.u32 %v2459, 2147483648
        %v2497 = vsel %vm2495, %v2496, %v2494
        %v2498 = vrsqrt.pop %v2460
        %v2499 = vmul.f32 %v2460, %v2498
        %vm2500 = vcmp.eq.f32.partialorder %v2460, inf
        %v2501 = vsel %vm2500, %v2460, %v2499
        %vm2502 = vcmp.eq.f32.partialorder %v2460, 0.0
        %v2503 = vand.u32 %v2460, 2147483648
        %v2504 = vsel %vm2502, %v2503, %v2501
        %v2505 = vrsqrt.pop %v2461
        %v2506 = vmul.f32 %v2461, %v2505
        %vm2507 = vcmp.eq.f32.partialorder %v2461, inf
        %v2508 = vsel %vm2507, %v2461, %v2506
        %vm2509 = vcmp.eq.f32.partialorder %v2461, 0.0
        %v2510 = vand.u32 %v2461, 2147483648
        %v2511 = vsel %vm2509, %v2510, %v2508
        %v2512 = vrsqrt.pop %v2462
        %v2513 = vmul.f32 %v2462, %v2512
        %vm2514 = vcmp.eq.f32.partialorder %v2462, inf
        %v2515 = vsel %vm2514, %v2462, %v2513
        %vm2516 = vcmp.eq.f32.partialorder %v2462, 0.0
        %v2517 = vand.u32 %v2462, 2147483648
        %v2518 = vsel %vm2516, %v2517, %v2515
        %v2519 = vmul.f32 %v2431, %v2469
        %v2520 = vmul.f32 %v2432, %v2476
        %v2521 = vmul.f32 %v2433, %v2483
        %v2522 = vmul.f32 %v2434, %v2490
        %v2523 = vmul.f32 %v2435, %v2497
        %v2524 = vmul.f32 %v2436, %v2504
        %v2525 = vmul.f32 %v2437, %v2511
        %v2526 = vmul.f32 %v2438, %v2518
        %v2527 = vadd.f32 %v2519, %v2523
        %v2528 = vrot.slane %v2527, 4
        %v2529 = vadd.f32 %v2527, %v2528
        %v2530 = vrot.slane %v2529, 2
        %v2531 = vadd.f32 %v2529, %v2530
        %v2532 = vrot.slane %v2531, 1
        %v2533 = vadd.f32 %v2531, %v2532
        %v2534 = vadd.f32 %v2520, %v2524
        %v2535 = vrot.slane %v2534, 4
        %v2536 = vadd.f32 %v2534, %v2535
        %v2537 = vrot.slane %v2536, 2
        %v2538 = vadd.f32 %v2536, %v2537
        %v2539 = vrot.slane %v2538, 1
        %v2540 = vadd.f32 %v2538, %v2539
        %v2541 = vadd.f32 %v2521, %v2525
        %v2542 = vrot.slane %v2541, 4
        %v2543 = vadd.f32 %v2541, %v2542
        %v2544 = vrot.slane %v2543, 2
        %v2545 = vadd.f32 %v2543, %v2544
        %v2546 = vrot.slane %v2545, 1
        %v2547 = vadd.f32 %v2545, %v2546
        %v2548 = vadd.f32 %v2522, %v2526
        %v2549 = vrot.slane %v2548, 4
        %v2550 = vadd.f32 %v2548, %v2549
        %v2551 = vrot.slane %v2550, 2
        %v2552 = vadd.f32 %v2550, %v2551
        %v2553 = vrot.slane %v2552, 1
        %v2554 = vadd.f32 %v2552, %v2553
        %v2555 = vrcp.pop %v2533
        %v2556 = vrcp.pop %v2540
        %v2557 = vrcp.pop %v2547
        %v2558 = vrcp.pop %v2554
        %v2559 = vmul.f32 %v2519, %v2555
        %v2560 = vmul.f32 %v2520, %v2556
        %v2561 = vmul.f32 %v2521, %v2557
        %v2562 = vmul.f32 %v2522, %v2558
        %v2563 = vmul.f32 %v2523, %v2555
        %v2564 = vmul.f32 %v2524, %v2556
        %v2565 = vmul.f32 %v2525, %v2557
        %v2566 = vmul.f32 %v2526, %v2558
        %v2567 = vadd.f32 %v2439, %v2559
        %v2568 = vadd.f32 %v2440, %v2560
        %v2569 = vadd.f32 %v2441, %v2561
        %v2570 = vadd.f32 %v2442, %v2562
        %v2571 = vadd.f32 %v2443, %v2563
        %v2572 = vadd.f32 %v2444, %v2564
        %v2573 = vadd.f32 %v2445, %v2565
        %v2574 = vadd.f32 %v2446, %v2566
        %v2575 = vsub.f32 1.0, %v2559
        %v2576 = vsub.f32 1.0, %v2560
        %v2577 = vsub.f32 1.0, %v2561
        %v2578 = vsub.f32 1.0, %v2562
        %v2579 = vsub.f32 1.0, %v2563
        %v2580 = vsub.f32 1.0, %v2564
        %v2581 = vsub.f32 1.0, %v2565
        %v2582 = vsub.f32 1.0, %v2566
        %v2583 = vmax.f32 %v2575, 1e-20
        %v2584 = vmax.f32 %v2576, 1e-20
        %v2585 = vmax.f32 %v2577, 1e-20
        %v2586 = vmax.f32 %v2578, 1e-20
        %v2587 = vmax.f32 %v2579, 1e-20
        %v2588 = vmax.f32 %v2580, 1e-20
        %v2589 = vmax.f32 %v2581, 1e-20
        %v2590 = vmax.f32 %v2582, 1e-20
        %v2591 = vrsqrt.pop %v2583
        %v2592 = vmul.f32 %v2583, %v2591
        %vm2593 = vcmp.eq.f32.partialorder %v2583, inf
        %v2594 = vsel %vm2593, %v2583, %v2592
        %vm2595 = vcmp.eq.f32.partialorder %v2583, 0.0
        %v2596 = vand.u32 %v2583, 2147483648
        %v2597 = vsel %vm2595, %v2596, %v2594
        %v2598 = vrsqrt.pop %v2584
        %v2599 = vmul.f32 %v2584, %v2598
        %vm2600 = vcmp.eq.f32.partialorder %v2584, inf
        %v2601 = vsel %vm2600, %v2584, %v2599
        %vm2602 = vcmp.eq.f32.partialorder %v2584, 0.0
        %v2603 = vand.u32 %v2584, 2147483648
        %v2604 = vsel %vm2602, %v2603, %v2601
        %v2605 = vrsqrt.pop %v2585
        %v2606 = vmul.f32 %v2585, %v2605
        %vm2607 = vcmp.eq.f32.partialorder %v2585, inf
        %v2608 = vsel %vm2607, %v2585, %v2606
        %vm2609 = vcmp.eq.f32.partialorder %v2585, 0.0
        %v2610 = vand.u32 %v2585, 2147483648
        %v2611 = vsel %vm2609, %v2610, %v2608
        %v2612 = vrsqrt.pop %v2586
        %v2613 = vmul.f32 %v2586, %v2612
        %vm2614 = vcmp.eq.f32.partialorder %v2586, inf
        %v2615 = vsel %vm2614, %v2586, %v2613
        %vm2616 = vcmp.eq.f32.partialorder %v2586, 0.0
        %v2617 = vand.u32 %v2586, 2147483648
        %v2618 = vsel %vm2616, %v2617, %v2615
        %v2619 = vrsqrt.pop %v2587
        %v2620 = vmul.f32 %v2587, %v2619
        %vm2621 = vcmp.eq.f32.partialorder %v2587, inf
        %v2622 = vsel %vm2621, %v2587, %v2620
        %vm2623 = vcmp.eq.f32.partialorder %v2587, 0.0
        %v2624 = vand.u32 %v2587, 2147483648
        %v2625 = vsel %vm2623, %v2624, %v2622
        %v2626 = vrsqrt.pop %v2588
        %v2627 = vmul.f32 %v2588, %v2626
        %vm2628 = vcmp.eq.f32.partialorder %v2588, inf
        %v2629 = vsel %vm2628, %v2588, %v2627
        %vm2630 = vcmp.eq.f32.partialorder %v2588, 0.0
        %v2631 = vand.u32 %v2588, 2147483648
        %v2632 = vsel %vm2630, %v2631, %v2629
        %v2633 = vrsqrt.pop %v2589
        %v2634 = vmul.f32 %v2589, %v2633
        %vm2635 = vcmp.eq.f32.partialorder %v2589, inf
        %v2636 = vsel %vm2635, %v2589, %v2634
        %vm2637 = vcmp.eq.f32.partialorder %v2589, 0.0
        %v2638 = vand.u32 %v2589, 2147483648
        %v2639 = vsel %vm2637, %v2638, %v2636
        %v2640 = vrsqrt.pop %v2590
        %v2641 = vmul.f32 %v2590, %v2640
        %vm2642 = vcmp.eq.f32.partialorder %v2590, inf
        %v2643 = vsel %vm2642, %v2590, %v2641
        %vm2644 = vcmp.eq.f32.partialorder %v2590, 0.0
        %v2645 = vand.u32 %v2590, 2147483648
        %v2646 = vsel %vm2644, %v2645, %v2643
        %v2647 = vmul.f32 %v2559, %v2597
        %v2648 = vmul.f32 %v2560, %v2604
        %v2649 = vmul.f32 %v2561, %v2611
        %v2650 = vmul.f32 %v2562, %v2618
        %v2651 = vmul.f32 %v2563, %v2625
        %v2652 = vmul.f32 %v2564, %v2632
        %v2653 = vmul.f32 %v2565, %v2639
        %v2654 = vmul.f32 %v2566, %v2646
        %v2655 = vadd.f32 %v2647, %v2651
        %v2656 = vrot.slane %v2655, 4
        %v2657 = vadd.f32 %v2655, %v2656
        %v2658 = vrot.slane %v2657, 2
        %v2659 = vadd.f32 %v2657, %v2658
        %v2660 = vrot.slane %v2659, 1
        %v2661 = vadd.f32 %v2659, %v2660
        %v2662 = vadd.f32 %v2648, %v2652
        %v2663 = vrot.slane %v2662, 4
        %v2664 = vadd.f32 %v2662, %v2663
        %v2665 = vrot.slane %v2664, 2
        %v2666 = vadd.f32 %v2664, %v2665
        %v2667 = vrot.slane %v2666, 1
        %v2668 = vadd.f32 %v2666, %v2667
        %v2669 = vadd.f32 %v2649, %v2653
        %v2670 = vrot.slane %v2669, 4
        %v2671 = vadd.f32 %v2669, %v2670
        %v2672 = vrot.slane %v2671, 2
        %v2673 = vadd.f32 %v2671, %v2672
        %v2674 = vrot.slane %v2673, 1
        %v2675 = vadd.f32 %v2673, %v2674
        %v2676 = vadd.f32 %v2650, %v2654
        %v2677 = vrot.slane %v2676, 4
        %v2678 = vadd.f32 %v2676, %v2677
        %v2679 = vrot.slane %v2678, 2
        %v2680 = vadd.f32 %v2678, %v2679
        %v2681 = vrot.slane %v2680, 1
        %v2682 = vadd.f32 %v2680, %v2681
        %v2683 = vrcp.pop %v2661
        %v2684 = vrcp.pop %v2668
        %v2685 = vrcp.pop %v2675
        %v2686 = vrcp.pop %v2682
        %v2687 = vmul.f32 %v2647, %v2683
        %v2688 = vmul.f32 %v2648, %v2684
        %v2689 = vmul.f32 %v2649, %v2685
        %v2690 = vmul.f32 %v2650, %v2686
        %v2691 = vmul.f32 %v2651, %v2683
        %v2692 = vmul.f32 %v2652, %v2684
        %v2693 = vmul.f32 %v2653, %v2685
        %v2694 = vmul.f32 %v2654, %v2686
        %v2695 = vadd.f32 %v2567, %v2687
        %v2696 = vadd.f32 %v2568, %v2688
        %v2697 = vadd.f32 %v2569, %v2689
        %v2698 = vadd.f32 %v2570, %v2690
        %v2699 = vadd.f32 %v2571, %v2691
        %v2700 = vadd.f32 %v2572, %v2692
        %v2701 = vadd.f32 %v2573, %v2693
        %v2702 = vadd.f32 %v2574, %v2694
        %v2703 = vsub.f32 1.0, %v2687
        %v2704 = vsub.f32 1.0, %v2688
        %v2705 = vsub.f32 1.0, %v2689
        %v2706 = vsub.f32 1.0, %v2690
        %v2707 = vsub.f32 1.0, %v2691
        %v2708 = vsub.f32 1.0, %v2692
        %v2709 = vsub.f32 1.0, %v2693
        %v2710 = vsub.f32 1.0, %v2694
        %v2711 = vmax.f32 %v2703, 1e-20
        %v2712 = vmax.f32 %v2704, 1e-20
        %v2713 = vmax.f32 %v2705, 1e-20
        %v2714 = vmax.f32 %v2706, 1e-20
        %v2715 = vmax.f32 %v2707, 1e-20
        %v2716 = vmax.f32 %v2708, 1e-20
        %v2717 = vmax.f32 %v2709, 1e-20
        %v2718 = vmax.f32 %v2710, 1e-20
        %v2719 = vrsqrt.pop %v2711
        %v2720 = vmul.f32 %v2711, %v2719
        %vm2721 = vcmp.eq.f32.partialorder %v2711, inf
        %v2722 = vsel %vm2721, %v2711, %v2720
        %vm2723 = vcmp.eq.f32.partialorder %v2711, 0.0
        %v2724 = vand.u32 %v2711, 2147483648
        %v2725 = vsel %vm2723, %v2724, %v2722
        %v2726 = vrsqrt.pop %v2712
        %v2727 = vmul.f32 %v2712, %v2726
        %vm2728 = vcmp.eq.f32.partialorder %v2712, inf
        %v2729 = vsel %vm2728, %v2712, %v2727
        %vm2730 = vcmp.eq.f32.partialorder %v2712, 0.0
        %v2731 = vand.u32 %v2712, 2147483648
        %v2732 = vsel %vm2730, %v2731, %v2729
        %v2733 = vrsqrt.pop %v2713
        %v2734 = vmul.f32 %v2713, %v2733
        %vm2735 = vcmp.eq.f32.partialorder %v2713, inf
        %v2736 = vsel %vm2735, %v2713, %v2734
        %vm2737 = vcmp.eq.f32.partialorder %v2713, 0.0
        %v2738 = vand.u32 %v2713, 2147483648
        %v2739 = vsel %vm2737, %v2738, %v2736
        %v2740 = vrsqrt.pop %v2714
        %v2741 = vmul.f32 %v2714, %v2740
        %vm2742 = vcmp.eq.f32.partialorder %v2714, inf
        %v2743 = vsel %vm2742, %v2714, %v2741
        %vm2744 = vcmp.eq.f32.partialorder %v2714, 0.0
        %v2745 = vand.u32 %v2714, 2147483648
        %v2746 = vsel %vm2744, %v2745, %v2743
        %v2747 = vrsqrt.pop %v2715
        %v2748 = vmul.f32 %v2715, %v2747
        %vm2749 = vcmp.eq.f32.partialorder %v2715, inf
        %v2750 = vsel %vm2749, %v2715, %v2748
        %vm2751 = vcmp.eq.f32.partialorder %v2715, 0.0
        %v2752 = vand.u32 %v2715, 2147483648
        %v2753 = vsel %vm2751, %v2752, %v2750
        %v2754 = vrsqrt.pop %v2716
        %v2755 = vmul.f32 %v2716, %v2754
        %vm2756 = vcmp.eq.f32.partialorder %v2716, inf
        %v2757 = vsel %vm2756, %v2716, %v2755
        %vm2758 = vcmp.eq.f32.partialorder %v2716, 0.0
        %v2759 = vand.u32 %v2716, 2147483648
        %v2760 = vsel %vm2758, %v2759, %v2757
        %v2761 = vrsqrt.pop %v2717
        %v2762 = vmul.f32 %v2717, %v2761
        %vm2763 = vcmp.eq.f32.partialorder %v2717, inf
        %v2764 = vsel %vm2763, %v2717, %v2762
        %vm2765 = vcmp.eq.f32.partialorder %v2717, 0.0
        %v2766 = vand.u32 %v2717, 2147483648
        %v2767 = vsel %vm2765, %v2766, %v2764
        %v2768 = vrsqrt.pop %v2718
        %v2769 = vmul.f32 %v2718, %v2768
        %vm2770 = vcmp.eq.f32.partialorder %v2718, inf
        %v2771 = vsel %vm2770, %v2718, %v2769
        %vm2772 = vcmp.eq.f32.partialorder %v2718, 0.0
        %v2773 = vand.u32 %v2718, 2147483648
        %v2774 = vsel %vm2772, %v2773, %v2771
        %v2775 = vmul.f32 %v2687, %v2725
        %v2776 = vmul.f32 %v2688, %v2732
        %v2777 = vmul.f32 %v2689, %v2739
        %v2778 = vmul.f32 %v2690, %v2746
        %v2779 = vmul.f32 %v2691, %v2753
        %v2780 = vmul.f32 %v2692, %v2760
        %v2781 = vmul.f32 %v2693, %v2767
        %v2782 = vmul.f32 %v2694, %v2774
        %v2783 = vadd.f32 %v2775, %v2779
        %v2784 = vrot.slane %v2783, 4
        %v2785 = vadd.f32 %v2783, %v2784
        %v2786 = vrot.slane %v2785, 2
        %v2787 = vadd.f32 %v2785, %v2786
        %v2788 = vrot.slane %v2787, 1
        %v2789 = vadd.f32 %v2787, %v2788
        %v2790 = vadd.f32 %v2776, %v2780
        %v2791 = vrot.slane %v2790, 4
        %v2792 = vadd.f32 %v2790, %v2791
        %v2793 = vrot.slane %v2792, 2
        %v2794 = vadd.f32 %v2792, %v2793
        %v2795 = vrot.slane %v2794, 1
        %v2796 = vadd.f32 %v2794, %v2795
        %v2797 = vadd.f32 %v2777, %v2781
        %v2798 = vrot.slane %v2797, 4
        %v2799 = vadd.f32 %v2797, %v2798
        %v2800 = vrot.slane %v2799, 2
        %v2801 = vadd.f32 %v2799, %v2800
        %v2802 = vrot.slane %v2801, 1
        %v2803 = vadd.f32 %v2801, %v2802
        %v2804 = vadd.f32 %v2778, %v2782
        %v2805 = vrot.slane %v2804, 4
        %v2806 = vadd.f32 %v2804, %v2805
        %v2807 = vrot.slane %v2806, 2
        %v2808 = vadd.f32 %v2806, %v2807
        %v2809 = vrot.slane %v2808, 1
        %v2810 = vadd.f32 %v2808, %v2809
        %v2811 = vrcp.pop %v2789
        %v2812 = vrcp.pop %v2796
        %v2813 = vrcp.pop %v2803
        %v2814 = vrcp.pop %v2810
        %v2815 = vmul.f32 %v2775, %v2811
        %v2816 = vmul.f32 %v2776, %v2812
        %v2817 = vmul.f32 %v2777, %v2813
        %v2818 = vmul.f32 %v2778, %v2814
        %v2819 = vmul.f32 %v2779, %v2811
        %v2820 = vmul.f32 %v2780, %v2812
        %v2821 = vmul.f32 %v2781, %v2813
        %v2822 = vmul.f32 %v2782, %v2814
        %v2823 = vadd.f32 %v2695, %v2815
        %v2824 = vadd.f32 %v2696, %v2816
        %v2825 = vadd.f32 %v2697, %v2817
        %v2826 = vadd.f32 %v2698, %v2818
        %v2827 = vadd.f32 %v2699, %v2819
        %v2828 = vadd.f32 %v2700, %v2820
        %v2829 = vadd.f32 %v2701, %v2821
        %v2830 = vadd.f32 %v2702, %v2822
        %2831 = vst [vmem:[%s329] sm:$0xff] %v2823
        %2832 = vst [vmem:[%s329 + $0x8] sm:$0xff] %v2824
        %2833 = vst [vmem:[%s329 + $0x10] sm:$0xff] %v2825
        %2834 = vst [vmem:[%s329 + $0x18] sm:$0xff] %v2826
        %2835 = vst [vmem:[%s329 + $0x20] sm:$0xff] %v2827
        %2836 = vst [vmem:[%s329 + $0x28] sm:$0xff] %v2828
        %2837 = vst [vmem:[%s329 + $0x30] sm:$0xff] %v2829
        %2838 = vst [vmem:[%s329 + $0x38] sm:$0xff] %v2830
        %s2839 = sand.u32 %s164, 1
        %s2840 = scalar_lea.sflag [#allocation5], %s2839
        %s2841 = sand.u32 %s164, 1
        %s2842 = smul.addr %s2841, 64
        %s2843 = scalar_lea.vmem [#allocation4], %s2842
        // Predicated region
        $region91: #{sdm_forward.1} parent=81 // pred_check
          %p2844 = pneg %p174
        $region92: #{sdm_forward.1} parent=81 // pred_check_branch
          %2846 = sbr.rel (%p2844) target = $region94
        $region93: #{sdm_forward.1} parent=81 // pred_region
          %s2847 = smul.u32 4, %s20
          %s2849 = ssub.s32 1024, 1024
          %2850 = vsyncadd %s2840, %s2849
          %s2851 = smul.addr %s2847, 128
          %s2852 = scalar_lea.hbm %s6, %s2851
          %s2853 = sshll.u32 %s2843, 4
          %s2854 = int_to_ptr.vmem [resolvable:$true] %s2853
          %2859 = dma.vmem_to_hbm [thread:$0]  %s2854, 1024, %s2852, %s2840, 512, 1024, 32
        $region94: #{sdm_forward.1} parent=81 // pred_fallthru
          _
      $region82: #{sdm_forward.1} parent=5 // pred_fallthru
        _
      %p2860 = scmp.le.s32.totalorder 2, %s15
      // Predicated region
      $region95: #{sdm_forward.1} parent=5 // pred_check
        %p2861 = pneg %p2860
      $region96: #{sdm_forward.1} parent=5 // pred_check_branch
        %2863 = sbr.rel (%p2861) target = $region98
      $region97: #{sdm_forward.1} parent=5 // pred_region
        %s2864 = ssub.s32 %s15, 2
        // Predicated region
        $region99: #{sdm_forward.1} parent=97 // pred_check
          %p2865 = pneg %p180
        $region100: #{sdm_forward.1} parent=97 // pred_check_branch
          %2867 = sbr.rel (%p2865) target = $region102
        $region101: #{sdm_forward.1} parent=97 // pred_region
          %s2868 = sand.u32 %s165, 1
          %s2869 = scalar_lea.sflag [#allocation5], %s2868
          %s2870 = sand.u32 %s165, 1
          %s2871 = smul.addr %s2870, 64
          %s2872 = scalar_lea.vmem [#allocation4], %s2871
          %2873 = dma.done %s2869, 1024
        $region102: #{sdm_forward.1} parent=97 // pred_fallthru
          _
      $region98: #{sdm_forward.1} parent=5 // pred_fallthru
        _
    $region6: #{sdm_forward.1} parent=1 // loop_footer
      %s19 = sadd.s32 1, %s15
    $region7: #{sdm_forward.1} parent=1 // loop_footer_branch
      %14 = sbr.rel target = $region3
    $region8: #{sdm_forward.1} parent=1 // loop_exit
      _
    %2874 = vsyncpa [#allocation5], 1
    %s2875 = scalar_lea.sflag [#allocation5], 1
    %2876 = vsyncpa %s2875, 1

</llo_original>
